<compile_context>
chip_gen: v7x
topology: tpu7x:2x2x1
jax: 0.10.0
libtpu: 0.0.40
codegen_flags: <defaults>
</compile_context>

<pallas_src>
import functools

import jax
import jax.numpy as jnp
from jax.experimental import pallas as pl
from jax.experimental.pallas import tpu as pltpu


def _round_up(x, m):
    return ((x + m - 1) // m) * m


def _pick_tile_v(vp):
    for t in (512, 256, 128):
        if vp % t == 0:
            return t
    return vp


def _vmem_limit_bytes():
    # Per-generation scoped-VMEM budget instead of a hard-coded 32 MiB:
    # ~100 MiB is fine on v5e/v6e (128 MiB physical); leave headroom on v7x (64 MiB).
    try:
        cap = int(pltpu.get_tpu_info().vmem_capacity_bytes)
    except Exception:
        cap = 64 * 1024 * 1024
    return int(min(cap * 4 // 5, 100 * 1024 * 1024))


# ----------------------------------------------------------------------------
# Fused kernel: embedding gather -> GRU stack -> MLP head (vocab-tiled) -> LSE
# ----------------------------------------------------------------------------
def fused_decoder_kernel(num_layer, v_actual, tile_v, *refs):
    """Padded shapes: Bp mult of 16 (sublanes), Ep/Hp/Vp mult of 128 (lanes)."""
    f32 = jnp.float32
    tok_ref = refs[0]                       # (Bp,) int32, SMEM (scalar prefetch)
    embed_hbm = refs[1]                     # (Vp, Ep) f32, HBM (gathered per row)
    hidden_ref = refs[2]                    # (L, Bp, Hp) f32, VMEM resident
    n_gru = 4 * num_layer
    gru_refs = refs[3:3 + n_gru]            # per layer: w_ih, w_hh, b_ih, b_hh
    w1_ref, b1_ref, w2_ref, b2_ref = refs[3 + n_gru:7 + n_gru]
    hidden_out_ref, logits_ref, logprob_ref = refs[7 + n_gru:10 + n_gru]
    x_buf, t_scr, m_scr, l_scr, sems = refs[10 + n_gru:]

    j = pl.program_id(0)
    n_tiles = pl.num_programs(0)
    bp = x_buf.shape[0]
    hp = t_scr.shape[1]

    # ---- Phase 0 (first vocab tile only): gather + GRU stack + decode_to_out ----
    @pl.when(j == 0)
    def _():
        # Row gather: Bp tiny HBM->VMEM DMAs (Ep*4 bytes each) driven by the
        # scalar-prefetched token ids.  Padded batch rows use token 0.
        copies = []
        for b in range(bp):
            cp = pltpu.make_async_copy(
                embed_hbm.at[pl.ds(tok_ref[b], 1), :],
                x_buf.at[pl.ds(b, 1), :],
                sems.at[b])
            cp.start()
            copies.append(cp)
        for cp in copies:
            cp.wait()

        layer_in = x_buf[...]                               # (Bp, Ep) f32
        for layer in range(num_layer):
            w_ih = gru_refs[4 * layer]                      # (in_p, 3*Hp) bf16
            w_hh = gru_refs[4 * layer + 1]                  # (Hp,  3*Hp) bf16
            b_ih = gru_refs[4 * layer + 2]                  # (1, 3*Hp) f32
            b_hh = gru_refs[4 * layer + 3]                  # (1, 3*Hp) f32

            h = hidden_ref[layer]                           # (Bp, Hp) f32
            # Fused 3-gate matmuls (one dot per direction, f32 accumulation).
            gi = jnp.dot(layer_in.astype(w_ih.dtype), w_ih[...],
                         preferred_element_type=f32) + b_ih[...]
            gh = jnp.dot(h.astype(w_hh.dtype), w_hh[...],
                         preferred_element_type=f32) + b_hh[...]
            # Hp is a multiple of 128 -> gate slices are lane-tile aligned.
            i_r, i_z, i_n = gi[:, :hp], gi[:, hp:2 * hp], gi[:, 2 * hp:]
            h_r, h_z, h_n = gh[:, :hp], gh[:, hp:2 * hp], gh[:, 2 * hp:]

            r = jax.nn.sigmoid(i_r + h_r)                   # f32 gate math (v5e safe)
            z = jax.nn.sigmoid(i_z + h_z)
            n = jnp.tanh(i_n + r * h_n)
            h_new = (1.0 - z) * n + z * h

            hidden_out_ref[layer] = h_new
            layer_in = h_new

        t = jnp.dot(layer_in.astype(w1_ref.dtype), w1_ref[...],
                    preferred_element_type=f32) + b1_ref[...]
        t_scr[...] = jnp.maximum(t, 0.0).astype(t_scr.dtype)

        m_scr[...] = jnp.full_like(m_scr, -1e30)
        l_scr[...] = jnp.zeros_like(l_scr)

    # ---- Streamed head: one (Hp, tile_v) slice of w2 per grid step ----
    logits_tile = jnp.dot(t_scr[...], w2_ref[...],
                          preferred_element_type=f32) + b2_ref[...]
    off = pl.multiple_of(j * tile_v, tile_v)
    logits_ref[:, pl.ds(off, tile_v)] = logits_tile

    # Online max / sum-exp over real vocab lanes only (padded lanes masked).
    lane = j * tile_v + jax.lax.broadcasted_iota(jnp.int32, logits_tile.shape, 1)
    masked = jnp.where(lane < v_actual, logits_tile,
                       jnp.full_like(logits_tile, -1e30))
    tile_max = jnp.max(masked, axis=-1, keepdims=True)
    m_new = jnp.maximum(m_scr[...], tile_max)
    l_scr[...] = (l_scr[...] * jnp.exp(m_scr[...] - m_new)
                  + jnp.sum(jnp.exp(masked - m_new), axis=-1, keepdims=True))
    m_scr[...] = m_new

    # ---- Finalize log-softmax once the last vocab tile has been accumulated ----
    @pl.when(j == n_tiles - 1)
    def _():
        lse = m_scr[...] + jnp.log(l_scr[...])              # (Bp, 1)
        logprob_ref[...] = logits_ref[...] - lse


# ----------------------------------------------------------------------------
# pallas_call wrapper (1-D grid over vocab tiles, w2 streamed via BlockSpec)
# ----------------------------------------------------------------------------
def _fused_decoder_call(params, tok_pad, hidden_pad, v_actual):
    num_layer = len(params["gru"])
    L, Bp, Hp = hidden_pad.shape
    Vp, Ep = params["embed"].shape
    tile_v = _pick_tile_v(Vp)
    n_tiles = Vp // tile_v

    args = [tok_pad, params["embed"], hidden_pad]
    for p in params["gru"]:
        args.extend([p["w_ih"], p["w_hh"], p["b_ih"], p["b_hh"]])
    args.extend([params["w1"], params["b1"], params["w2"], params["b2"]])

    vmem_full = pl.BlockSpec(memory_space=pltpu.MemorySpace.VMEM)
    in_specs = [
        pl.BlockSpec(memory_space=pl.ANY),                  # embedding table (HBM)
        vmem_full,                                          # hidden stack
    ]
    in_specs += [vmem_full] * (4 * num_layer)               # GRU weights (resident)
    in_specs += [
        vmem_full,                                          # w1
        vmem_full,                                          # b1
        pl.BlockSpec((Hp, tile_v), lambda j, tok: (0, j)),  # w2 streamed over vocab
        pl.BlockSpec((1, tile_v), lambda j, tok: (0, j)),   # b2 streamed over vocab
    ]
    out_specs = (
        pl.BlockSpec((L, Bp, Hp), lambda j, tok: (0, 0, 0)),
        pl.BlockSpec((Bp, Vp), lambda j, tok: (0, 0)),      # logits, VMEM resident
        pl.BlockSpec((Bp, Vp), lambda j, tok: (0, 0)),      # log-probs, VMEM resident
    )

    grid_spec = pltpu.PrefetchScalarGridSpec(
        num_scalar_prefetch=1,
        grid=(n_tiles,),
        in_specs=in_specs,
        out_specs=out_specs,
        scratch_shapes=[
            pltpu.VMEM((Bp, Ep), jnp.float32),              # gathered embeddings
            pltpu.VMEM((Bp, Hp), jnp.bfloat16),             # relu(decode_to_out(top))
            pltpu.VMEM((Bp, 1), jnp.float32),               # running max
            pltpu.VMEM((Bp, 1), jnp.float32),               # running sum-exp
            pltpu.SemaphoreType.DMA((Bp,)),                 # gather DMA semaphores
        ])

    # Advisory cost estimate so XLA can schedule around the kernel.
    gru_in_dims = [Ep] + [Hp] * (num_layer - 1)
    flops = 0
    weight_bytes = 0
    for d in gru_in_dims:
        flops += 2 * Bp * (d + Hp) * 3 * Hp
        weight_bytes += (d + Hp) * 3 * Hp * 2 + 2 * 3 * Hp * 4
    flops += 2 * Bp * (Hp * Hp + Hp * Vp)
    weight_bytes += Hp * Hp * 2 + Hp * 4 + Hp * Vp * 2 + Vp * 4
    transcendentals = Bp * (3 * Hp * num_layer + Vp)
    bytes_accessed = (weight_bytes + Bp * Ep * 4
                      + 2 * L * Bp * Hp * 4 + 2 * Bp * Vp * 4)

    # TODO(synk): on v7x a per-core partial-softmax variant could mark the vocab
    # axis "parallel" to shard across the two TensorCores; the online LSE here
    # requires sequential ("arbitrary") accumulation.
    return pl.pallas_call(
        functools.partial(fused_decoder_kernel, num_layer, v_actual, tile_v),
        grid_spec=grid_spec,
        out_shape=(
            jax.ShapeDtypeStruct((L, Bp, Hp), jnp.float32),
            jax.ShapeDtypeStruct((Bp, Vp), jnp.float32),
            jax.ShapeDtypeStruct((Bp, Vp), jnp.float32),
        ),
        compiler_params=pltpu.CompilerParams(
            dimension_semantics=("arbitrary",),
            vmem_limit_bytes=_vmem_limit_bytes()),
        cost_estimate=pl.CostEstimate(
            flops=flops, transcendentals=transcendentals,
            bytes_accessed=bytes_accessed),
    )(*args)


# ----------------------------------------------------------------------------
# Parameter construction (PyTorch-like uniform init, padded + gate-fused)
# ----------------------------------------------------------------------------
def init_params(key, input_size, hidden_size, num_layer, tar_vocab_size):
    E, H, V = input_size, hidden_size, tar_vocab_size
    Ep, Hp, Vp = _round_up(E, 128), _round_up(H, 128), _round_up(V, 128)
    k = 1.0 / float(H) ** 0.5
    keys = iter(jax.random.split(key, 5 + 4 * num_layer))

    def u(kk, shape, bound):
        return jax.random.uniform(kk, shape, jnp.float32, -bound, bound)

    params = {}
    # Embedding (V, E) ~ N(0, 1) as in PyTorch; kept f32 (only B rows are read).
    embed = jax.random.normal(next(keys), (V, E), jnp.float32)
    params["embed"] = jnp.pad(embed, ((0, Vp - V), (0, Ep - E)))

    gru = []
    for layer in range(num_layer):
        in_dim = E if layer == 0 else H
        in_pad = Ep if layer == 0 else Hp
        # PyTorch gate order (r, z, n), stored transposed and gate-concatenated
        # along the lane axis so each gate block starts at a 128-lane boundary.
        w_ih = u(next(keys), (3, in_dim, H), k)
        w_hh = u(next(keys), (3, H, H), k)
        b_ih = u(next(keys), (3, H), k)
        b_hh = u(next(keys), (3, H), k)

        def pack_w(w, rows, rows_pad):
            w = jnp.pad(w, ((0, 0), (0, rows_pad - rows), (0, Hp - H)))
            return jnp.concatenate([w[0], w[1], w[2]], axis=1)   # (rows_pad, 3*Hp)

        def pack_b(b):
            return jnp.pad(b, ((0, 0), (0, Hp - H))).reshape(1, 3 * Hp)

        gru.append({
            "w_ih": pack_w(w_ih, in_dim, in_pad).astype(jnp.bfloat16),
            "w_hh": pack_w(w_hh, H, Hp).astype(jnp.bfloat16),
            "b_ih": pack_b(b_ih),
            "b_hh": pack_b(b_hh),
        })
    params["gru"] = gru

    # decode_to_out: Linear(H, H);  out: Linear(H, V)  (stored transposed).
    # NOTE: matmul weights are intentionally bf16 (inference precision choice).
    params["w1"] = jnp.pad(u(next(keys), (H, H), k),
                           ((0, Hp - H), (0, Hp - H))).astype(jnp.bfloat16)
    params["b1"] = jnp.pad(u(next(keys), (1, H), k), ((0, 0), (0, Hp - H)))
    params["w2"] = jnp.pad(u(next(keys), (H, V), k),
                           ((0, Hp - H), (0, Vp - V))).astype(jnp.bfloat16)
    params["b2"] = jnp.pad(u(next(keys), (1, V), k), ((0, 0), (0, Vp - V)))
    return params


# ----------------------------------------------------------------------------
# Full forward pass (matches BaselineGRUDecoder.forward)
# ----------------------------------------------------------------------------
@functools.partial(jax.jit, static_argnames=("batch_size", "tar_vocab_size"))
def baseline_gru_decoder_forward(params, inputs, hidden, batch_size,
                                 last_context, encoder_output, tar_vocab_size):
    L, B, H = hidden.shape
    Hp = params["w1"].shape[0]
    Bp = _round_up(max(B, 1), 16)      # 16 rows -> full packed bf16 vregs on MXU feeds
    V = tar_vocab_size

    # inputs.view((1, batch_size)); the embedding gather happens in-kernel.
    tok = inputs.reshape((1, batch_size))[0].astype(jnp.int32)
    tok_pad = jnp.zeros((Bp,), jnp.int32).at[:B].set(tok)
    hidden_pad = jnp.zeros((L, Bp, Hp), jnp.float32).at[:, :B, :H].set(
        hidden.astype(jnp.float32))

    hidden_out_p, logits_p, logprobs_p = _fused_decoder_call(
        params, tok_pad, hidden_pad, V)

    # TODO(synk): for an autoregressive decode loop, keep hidden in its padded
    # (L, Bp, Hp) form across steps (or move the time loop into the kernel) to
    # amortize weight streaming; this single-step API mirrors the PyTorch module.
    hidden_out = hidden_out_p[:, :B, :H]
    logits = logits_p[:B, :V]
    logprobs = logprobs_p[:B, :V]

    # encoder_output only contributes its sizes in the reference forward; the
    # Attention module is constructed but never invoked there.
    # TODO(synk): nn.GRU inter-layer dropout is training-only; eval semantics here.
    del encoder_output
    return logprobs, logits, hidden_out, last_context


# ----------------------------------------------------------------------------
# Pure-JAX reference (same padded bf16 params / f32 accumulation as the kernel)
# ----------------------------------------------------------------------------
def _reference_forward_padded(params, tok_pad, hidden_pad, v_actual):
    f32, bf16 = jnp.float32, jnp.bfloat16
    Hp = params["w1"].shape[0]
    x = params["embed"][tok_pad]                                # (Bp, Ep) gather
    layer_in = x
    new_h = []
    for l, p in enumerate(params["gru"]):
        h = hidden_pad[l]
        gi = jnp.dot(layer_in.astype(bf16), p["w_ih"],
                     preferred_element_type=f32) + p["b_ih"]
        gh = jnp.dot(h.astype(bf16), p["w_hh"],
                     preferred_element_type=f32) + p["b_hh"]
        r = jax.nn.sigmoid(gi[:, :Hp] + gh[:, :Hp])
        z = jax.nn.sigmoid(gi[:, Hp:2 * Hp] + gh[:, Hp:2 * Hp])
        n = jnp.tanh(gi[:, 2 * Hp:] + r * gh[:, 2 * Hp:])
        h_new = (1.0 - z) * n + z * h
        new_h.append(h_new)
        layer_in = h_new
    t = jnp.maximum(jnp.dot(layer_in.astype(bf16), params["w1"],
                            preferred_element_type=f32) + params["b1"], 0.0)
    logits = jnp.dot(t.astype(bf16), params["w2"],
                     preferred_element_type=f32) + params["b2"]
    lane = jnp.arange(logits.shape[-1])[None, :]
    masked = jnp.where(lane < v_actual, logits, -1e30)
    logprobs = jax.nn.log_softmax(masked, axis=-1)
    return jnp.stack(new_h, 0), logits, logprobs


# ----------------------------------------------------------------------------
# Demo
# ----------------------------------------------------------------------------
if __name__ == "__main__":
    input_size = 16
    hidden_size = 32
    num_layer = 2
    tar_vocab_size = 40
    batch_size = 2
    seq_len = 8

    key = jax.random.PRNGKey(0)
    kp, ki_, kh, ke = jax.random.split(key, 4)

    params = init_params(kp, input_size, hidden_size, num_layer, tar_vocab_size)

    inputs = jax.random.randint(ki_, (batch_size,), 0, tar_vocab_size, jnp.int32)
    hidden = jax.random.normal(kh, (num_layer, batch_size, hidden_size), jnp.float32)
    last_context = jnp.zeros((1, batch_size, hidden_size), jnp.float32)
    encoder_output = jax.random.normal(ke, (seq_len, batch_size, hidden_size),
                                       jnp.float32)

    logprobs, logits, hidden_out, ctx = baseline_gru_decoder_forward(
        params, inputs, hidden, batch_size, last_context, encoder_output,
        tar_vocab_size=tar_vocab_size)
    jax.block_until_ready((logprobs, logits, hidden_out, ctx))

    # Shape checks
    assert logprobs.shape == (batch_size, tar_vocab_size)
    assert logits.shape == (batch_size, tar_vocab_size)
    assert hidden_out.shape == (num_layer, batch_size, hidden_size)
    assert ctx.shape == (1, batch_size, hidden_size)
    # log_softmax rows must sum to ~1 in prob space
    assert jnp.allclose(jnp.exp(logprobs).sum(axis=1), 1.0, atol=1e-3)

    # Numerical check against a pure-JAX reference with identical math
    Bp = _round_up(batch_size, 16)
    Hp = params["w1"].shape[0]
    tok_pad = jnp.zeros((Bp,), jnp.int32).at[:batch_size].set(inputs)
    hidden_pad = jnp.zeros((num_layer, Bp, Hp), jnp.float32).at[
        :, :batch_size, :hidden_size].set(hidden)
    ref_h, ref_logits, ref_lp = _reference_forward_padded(
        params, tok_pad, hidden_pad, tar_vocab_size)
    assert jnp.allclose(hidden_out,
                        ref_h[:, :batch_size, :hidden_size], atol=2e-2)
    assert jnp.allclose(logits,
                        ref_logits[:batch_size, :tar_vocab_size], atol=2e-2)
    assert jnp.allclose(logprobs,
                        ref_lp[:batch_size, :tar_vocab_size], atol=2e-2)

    print("KERNEL_OK")
</pallas_src>

<mosaic_0001>
module attributes {stable_mosaic.version = 11 : i64} {
  func.func @fused_decoder_kernel(%arg0: i32, %arg1: memref<16xi32, #tpu.memory_space<smem>>, %arg2: memref<128x128xf32, #tpu.memory_space<any>>, %arg3: memref<2x16x128xf32, #tpu.memory_space<vmem>>, %arg4: memref<128x384xbf16, #tpu.memory_space<vmem>>, %arg5: memref<128x384xbf16, #tpu.memory_space<vmem>>, %arg6: memref<1x384xf32, #tpu.memory_space<vmem>>, %arg7: memref<1x384xf32, #tpu.memory_space<vmem>>, %arg8: memref<128x384xbf16, #tpu.memory_space<vmem>>, %arg9: memref<128x384xbf16, #tpu.memory_space<vmem>>, %arg10: memref<1x384xf32, #tpu.memory_space<vmem>>, %arg11: memref<1x384xf32, #tpu.memory_space<vmem>>, %arg12: memref<128x128xbf16, #tpu.memory_space<vmem>>, %arg13: memref<1x128xf32, #tpu.memory_space<vmem>>, %arg14: memref<128x128xbf16, #tpu.memory_space<vmem>>, %arg15: memref<1x128xf32, #tpu.memory_space<vmem>>, %arg16: memref<2x16x128xf32, #tpu.memory_space<vmem>>, %arg17: memref<16x128xf32, #tpu.memory_space<vmem>>, %arg18: memref<16x128xf32, #tpu.memory_space<vmem>>, %arg19: memref<16x128xf32, #tpu.memory_space<vmem>>, %arg20: memref<16x128xbf16, #tpu.memory_space<vmem>>, %arg21: memref<16x1xf32, #tpu.memory_space<vmem>>, %arg22: memref<16x1xf32, #tpu.memory_space<vmem>>, %arg23: memref<16x!tpu.dma_semaphore, #tpu.memory_space<semaphore_mem>>) attributes {dimension_semantics = [#tpu.dimension_semantics<arbitrary>], iteration_bounds = array<i64: 1>, scalar_prefetch = 1 : i64, scratch_operands = 5 : i64, tpu.core_type = #tpu.core_type<tc>, window_params = [{}, {pipeline_mode = #tpu.pipeline_mode<synchronous>, transform_indices = @transform_1, window_bounds = array<i64: 2, 16, 128>}, {pipeline_mode = #tpu.pipeline_mode<synchronous>, transform_indices = @transform_2, window_bounds = array<i64: 128, 384>}, {pipeline_mode = #tpu.pipeline_mode<synchronous>, transform_indices = @transform_3, window_bounds = array<i64: 128, 384>}, {pipeline_mode = #tpu.pipeline_mode<synchronous>, transform_indices = @transform_4, window_bounds = array<i64: 1, 384>}, {pipeline_mode = #tpu.pipeline_mode<synchronous>, transform_indices = @transform_5, window_bounds = array<i64: 1, 384>}, {pipeline_mode = #tpu.pipeline_mode<synchronous>, transform_indices = @transform_6, window_bounds = array<i64: 128, 384>}, {pipeline_mode = #tpu.pipeline_mode<synchronous>, transform_indices = @transform_7, window_bounds = array<i64: 128, 384>}, {pipeline_mode = #tpu.pipeline_mode<synchronous>, transform_indices = @transform_8, window_bounds = array<i64: 1, 384>}, {pipeline_mode = #tpu.pipeline_mode<synchronous>, transform_indices = @transform_9, window_bounds = array<i64: 1, 384>}, {pipeline_mode = #tpu.pipeline_mode<synchronous>, transform_indices = @transform_10, window_bounds = array<i64: 128, 128>}, {pipeline_mode = #tpu.pipeline_mode<synchronous>, transform_indices = @transform_11, window_bounds = array<i64: 1, 128>}, {transform_indices = @transform_12, window_bounds = array<i64: 128, 128>}, {transform_indices = @transform_13, window_bounds = array<i64: 1, 128>}, {pipeline_mode = #tpu.pipeline_mode<synchronous>, transform_indices = @transform_14, window_bounds = array<i64: 2, 16, 128>}, {pipeline_mode = #tpu.pipeline_mode<synchronous>, transform_indices = @transform_15, window_bounds = array<i64: 16, 128>}, {pipeline_mode = #tpu.pipeline_mode<synchronous>, transform_indices = @transform_16, window_bounds = array<i64: 16, 128>}]} {
    %c0_i32 = arith.constant 0 : i32
    %0 = arith.cmpi eq, %arg0, %c0_i32 : i32
    %1 = arith.extui %0 : i1 to i32
    %c0_i32_0 = arith.constant 0 : i32
    %2 = arith.cmpi ne, %1, %c0_i32_0 : i32
    scf.if %2 {
      %c0_23 = arith.constant 0 : index
      %41 = memref.load %arg1[%c0_23] : memref<16xi32, #tpu.memory_space<smem>>
      %c0_i32_24 = arith.constant 0 : i32
      %c0_i32_25 = arith.constant 0 : i32
      %42 = tpu.memref_slice %arg2[%41, %c0_i32_25] : memref<128x128xf32, #tpu.memory_space<any>> -> memref<1x128xf32, #tpu.memory_space<any>>
      %c0_i32_26 = arith.constant 0 : i32
      %c0_i32_27 = arith.constant 0 : i32
      %43 = tpu.memref_slice %arg19[%c0_i32_26, %c0_i32_27] : memref<16x128xf32, #tpu.memory_space<vmem>> -> memref<1x128xf32, #tpu.memory_space<vmem>>
      %44 = tpu.memref_slice %arg23[%c0_i32_24] : memref<16x!tpu.dma_semaphore, #tpu.memory_space<semaphore_mem>> -> memref<1x!tpu.dma_semaphore, #tpu.memory_space<semaphore_mem>>
      %45 = tpu.memref_squeeze %44 : memref<1x!tpu.dma_semaphore, #tpu.memory_space<semaphore_mem>> -> memref<!tpu.dma_semaphore, #tpu.memory_space<semaphore_mem>>
      tpu.enqueue_dma source(%42 : memref<1x128xf32, #tpu.memory_space<any>>) target(%43 : memref<1x128xf32, #tpu.memory_space<vmem>>) target_semaphore(%45 : memref<!tpu.dma_semaphore, #tpu.memory_space<semaphore_mem>>)
      %c1 = arith.constant 1 : index
      %46 = memref.load %arg1[%c1] : memref<16xi32, #tpu.memory_space<smem>>
      %c1_i32 = arith.constant 1 : i32
      %c0_i32_28 = arith.constant 0 : i32
      %47 = tpu.memref_slice %arg2[%46, %c0_i32_28] : memref<128x128xf32, #tpu.memory_space<any>> -> memref<1x128xf32, #tpu.memory_space<any>>
      %c1_i32_29 = arith.constant 1 : i32
      %c0_i32_30 = arith.constant 0 : i32
      %48 = tpu.memref_slice %arg19[%c1_i32_29, %c0_i32_30] : memref<16x128xf32, #tpu.memory_space<vmem>> -> memref<1x128xf32, #tpu.memory_space<vmem>>
      %49 = tpu.memref_slice %arg23[%c1_i32] : memref<16x!tpu.dma_semaphore, #tpu.memory_space<semaphore_mem>> -> memref<1x!tpu.dma_semaphore, #tpu.memory_space<semaphore_mem>>
      %50 = tpu.memref_squeeze %49 : memref<1x!tpu.dma_semaphore, #tpu.memory_space<semaphore_mem>> -> memref<!tpu.dma_semaphore, #tpu.memory_space<semaphore_mem>>
      tpu.enqueue_dma source(%47 : memref<1x128xf32, #tpu.memory_space<any>>) target(%48 : memref<1x128xf32, #tpu.memory_space<vmem>>) target_semaphore(%50 : memref<!tpu.dma_semaphore, #tpu.memory_space<semaphore_mem>>)
      %c2 = arith.constant 2 : index
      %51 = memref.load %arg1[%c2] : memref<16xi32, #tpu.memory_space<smem>>
      %c2_i32 = arith.constant 2 : i32
      %c0_i32_31 = arith.constant 0 : i32
      %52 = tpu.memref_slice %arg2[%51, %c0_i32_31] : memref<128x128xf32, #tpu.memory_space<any>> -> memref<1x128xf32, #tpu.memory_space<any>>
      %c2_i32_32 = arith.constant 2 : i32
      %c0_i32_33 = arith.constant 0 : i32
      %53 = tpu.memref_slice %arg19[%c2_i32_32, %c0_i32_33] : memref<16x128xf32, #tpu.memory_space<vmem>> -> memref<1x128xf32, #tpu.memory_space<vmem>>
      %54 = tpu.memref_slice %arg23[%c2_i32] : memref<16x!tpu.dma_semaphore, #tpu.memory_space<semaphore_mem>> -> memref<1x!tpu.dma_semaphore, #tpu.memory_space<semaphore_mem>>
      %55 = tpu.memref_squeeze %54 : memref<1x!tpu.dma_semaphore, #tpu.memory_space<semaphore_mem>> -> memref<!tpu.dma_semaphore, #tpu.memory_space<semaphore_mem>>
      tpu.enqueue_dma source(%52 : memref<1x128xf32, #tpu.memory_space<any>>) target(%53 : memref<1x128xf32, #tpu.memory_space<vmem>>) target_semaphore(%55 : memref<!tpu.dma_semaphore, #tpu.memory_space<semaphore_mem>>)
      %c3 = arith.constant 3 : index
      %56 = memref.load %arg1[%c3] : memref<16xi32, #tpu.memory_space<smem>>
      %c3_i32 = arith.constant 3 : i32
      %c0_i32_34 = arith.constant 0 : i32
      %57 = tpu.memref_slice %arg2[%56, %c0_i32_34] : memref<128x128xf32, #tpu.memory_space<any>> -> memref<1x128xf32, #tpu.memory_space<any>>
      %c3_i32_35 = arith.constant 3 : i32
      %c0_i32_36 = arith.constant 0 : i32
      %58 = tpu.memref_slice %arg19[%c3_i32_35, %c0_i32_36] : memref<16x128xf32, #tpu.memory_space<vmem>> -> memref<1x128xf32, #tpu.memory_space<vmem>>
      %59 = tpu.memref_slice %arg23[%c3_i32] : memref<16x!tpu.dma_semaphore, #tpu.memory_space<semaphore_mem>> -> memref<1x!tpu.dma_semaphore, #tpu.memory_space<semaphore_mem>>
      %60 = tpu.memref_squeeze %59 : memref<1x!tpu.dma_semaphore, #tpu.memory_space<semaphore_mem>> -> memref<!tpu.dma_semaphore, #tpu.memory_space<semaphore_mem>>
      tpu.enqueue_dma source(%57 : memref<1x128xf32, #tpu.memory_space<any>>) target(%58 : memref<1x128xf32, #tpu.memory_space<vmem>>) target_semaphore(%60 : memref<!tpu.dma_semaphore, #tpu.memory_space<semaphore_mem>>)
      %c4 = arith.constant 4 : index
      %61 = memref.load %arg1[%c4] : memref<16xi32, #tpu.memory_space<smem>>
      %c4_i32 = arith.constant 4 : i32
      %c0_i32_37 = arith.constant 0 : i32
      %62 = tpu.memref_slice %arg2[%61, %c0_i32_37] : memref<128x128xf32, #tpu.memory_space<any>> -> memref<1x128xf32, #tpu.memory_space<any>>
      %c4_i32_38 = arith.constant 4 : i32
      %c0_i32_39 = arith.constant 0 : i32
      %63 = tpu.memref_slice %arg19[%c4_i32_38, %c0_i32_39] : memref<16x128xf32, #tpu.memory_space<vmem>> -> memref<1x128xf32, #tpu.memory_space<vmem>>
      %64 = tpu.memref_slice %arg23[%c4_i32] : memref<16x!tpu.dma_semaphore, #tpu.memory_space<semaphore_mem>> -> memref<1x!tpu.dma_semaphore, #tpu.memory_space<semaphore_mem>>
      %65 = tpu.memref_squeeze %64 : memref<1x!tpu.dma_semaphore, #tpu.memory_space<semaphore_mem>> -> memref<!tpu.dma_semaphore, #tpu.memory_space<semaphore_mem>>
      tpu.enqueue_dma source(%62 : memref<1x128xf32, #tpu.memory_space<any>>) target(%63 : memref<1x128xf32, #tpu.memory_space<vmem>>) target_semaphore(%65 : memref<!tpu.dma_semaphore, #tpu.memory_space<semaphore_mem>>)
      %c5 = arith.constant 5 : index
      %66 = memref.load %arg1[%c5] : memref<16xi32, #tpu.memory_space<smem>>
      %c5_i32 = arith.constant 5 : i32
      %c0_i32_40 = arith.constant 0 : i32
      %67 = tpu.memref_slice %arg2[%66, %c0_i32_40] : memref<128x128xf32, #tpu.memory_space<any>> -> memref<1x128xf32, #tpu.memory_space<any>>
      %c5_i32_41 = arith.constant 5 : i32
      %c0_i32_42 = arith.constant 0 : i32
      %68 = tpu.memref_slice %arg19[%c5_i32_41, %c0_i32_42] : memref<16x128xf32, #tpu.memory_space<vmem>> -> memref<1x128xf32, #tpu.memory_space<vmem>>
      %69 = tpu.memref_slice %arg23[%c5_i32] : memref<16x!tpu.dma_semaphore, #tpu.memory_space<semaphore_mem>> -> memref<1x!tpu.dma_semaphore, #tpu.memory_space<semaphore_mem>>
      %70 = tpu.memref_squeeze %69 : memref<1x!tpu.dma_semaphore, #tpu.memory_space<semaphore_mem>> -> memref<!tpu.dma_semaphore, #tpu.memory_space<semaphore_mem>>
      tpu.enqueue_dma source(%67 : memref<1x128xf32, #tpu.memory_space<any>>) target(%68 : memref<1x128xf32, #tpu.memory_space<vmem>>) target_semaphore(%70 : memref<!tpu.dma_semaphore, #tpu.memory_space<semaphore_mem>>)
      %c6 = arith.constant 6 : index
      %71 = memref.load %arg1[%c6] : memref<16xi32, #tpu.memory_space<smem>>
      %c6_i32 = arith.constant 6 : i32
      %c0_i32_43 = arith.constant 0 : i32
      %72 = tpu.memref_slice %arg2[%71, %c0_i32_43] : memref<128x128xf32, #tpu.memory_space<any>> -> memref<1x128xf32, #tpu.memory_space<any>>
      %c6_i32_44 = arith.constant 6 : i32
      %c0_i32_45 = arith.constant 0 : i32
      %73 = tpu.memref_slice %arg19[%c6_i32_44, %c0_i32_45] : memref<16x128xf32, #tpu.memory_space<vmem>> -> memref<1x128xf32, #tpu.memory_space<vmem>>
      %74 = tpu.memref_slice %arg23[%c6_i32] : memref<16x!tpu.dma_semaphore, #tpu.memory_space<semaphore_mem>> -> memref<1x!tpu.dma_semaphore, #tpu.memory_space<semaphore_mem>>
      %75 = tpu.memref_squeeze %74 : memref<1x!tpu.dma_semaphore, #tpu.memory_space<semaphore_mem>> -> memref<!tpu.dma_semaphore, #tpu.memory_space<semaphore_mem>>
      tpu.enqueue_dma source(%72 : memref<1x128xf32, #tpu.memory_space<any>>) target(%73 : memref<1x128xf32, #tpu.memory_space<vmem>>) target_semaphore(%75 : memref<!tpu.dma_semaphore, #tpu.memory_space<semaphore_mem>>)
      %c7 = arith.constant 7 : index
      %76 = memref.load %arg1[%c7] : memref<16xi32, #tpu.memory_space<smem>>
      %c7_i32 = arith.constant 7 : i32
      %c0_i32_46 = arith.constant 0 : i32
      %77 = tpu.memref_slice %arg2[%76, %c0_i32_46] : memref<128x128xf32, #tpu.memory_space<any>> -> memref<1x128xf32, #tpu.memory_space<any>>
      %c7_i32_47 = arith.constant 7 : i32
      %c0_i32_48 = arith.constant 0 : i32
      %78 = tpu.memref_slice %arg19[%c7_i32_47, %c0_i32_48] : memref<16x128xf32, #tpu.memory_space<vmem>> -> memref<1x128xf32, #tpu.memory_space<vmem>>
      %79 = tpu.memref_slice %arg23[%c7_i32] : memref<16x!tpu.dma_semaphore, #tpu.memory_space<semaphore_mem>> -> memref<1x!tpu.dma_semaphore, #tpu.memory_space<semaphore_mem>>
      %80 = tpu.memref_squeeze %79 : memref<1x!tpu.dma_semaphore, #tpu.memory_space<semaphore_mem>> -> memref<!tpu.dma_semaphore, #tpu.memory_space<semaphore_mem>>
      tpu.enqueue_dma source(%77 : memref<1x128xf32, #tpu.memory_space<any>>) target(%78 : memref<1x128xf32, #tpu.memory_space<vmem>>) target_semaphore(%80 : memref<!tpu.dma_semaphore, #tpu.memory_space<semaphore_mem>>)
      %c8 = arith.constant 8 : index
      %81 = memref.load %arg1[%c8] : memref<16xi32, #tpu.memory_space<smem>>
      %c8_i32 = arith.constant 8 : i32
      %c0_i32_49 = arith.constant 0 : i32
      %82 = tpu.memref_slice %arg2[%81, %c0_i32_49] : memref<128x128xf32, #tpu.memory_space<any>> -> memref<1x128xf32, #tpu.memory_space<any>>
      %c8_i32_50 = arith.constant 8 : i32
      %c0_i32_51 = arith.constant 0 : i32
      %83 = tpu.memref_slice %arg19[%c8_i32_50, %c0_i32_51] : memref<16x128xf32, #tpu.memory_space<vmem>> -> memref<1x128xf32, #tpu.memory_space<vmem>>
      %84 = tpu.memref_slice %arg23[%c8_i32] : memref<16x!tpu.dma_semaphore, #tpu.memory_space<semaphore_mem>> -> memref<1x!tpu.dma_semaphore, #tpu.memory_space<semaphore_mem>>
      %85 = tpu.memref_squeeze %84 : memref<1x!tpu.dma_semaphore, #tpu.memory_space<semaphore_mem>> -> memref<!tpu.dma_semaphore, #tpu.memory_space<semaphore_mem>>
      tpu.enqueue_dma source(%82 : memref<1x128xf32, #tpu.memory_space<any>>) target(%83 : memref<1x128xf32, #tpu.memory_space<vmem>>) target_semaphore(%85 : memref<!tpu.dma_semaphore, #tpu.memory_space<semaphore_mem>>)
      %c9 = arith.constant 9 : index
      %86 = memref.load %arg1[%c9] : memref<16xi32, #tpu.memory_space<smem>>
      %c9_i32 = arith.constant 9 : i32
      %c0_i32_52 = arith.constant 0 : i32
      %87 = tpu.memref_slice %arg2[%86, %c0_i32_52] : memref<128x128xf32, #tpu.memory_space<any>> -> memref<1x128xf32, #tpu.memory_space<any>>
      %c9_i32_53 = arith.constant 9 : i32
      %c0_i32_54 = arith.constant 0 : i32
      %88 = tpu.memref_slice %arg19[%c9_i32_53, %c0_i32_54] : memref<16x128xf32, #tpu.memory_space<vmem>> -> memref<1x128xf32, #tpu.memory_space<vmem>>
      %89 = tpu.memref_slice %arg23[%c9_i32] : memref<16x!tpu.dma_semaphore, #tpu.memory_space<semaphore_mem>> -> memref<1x!tpu.dma_semaphore, #tpu.memory_space<semaphore_mem>>
      %90 = tpu.memref_squeeze %89 : memref<1x!tpu.dma_semaphore, #tpu.memory_space<semaphore_mem>> -> memref<!tpu.dma_semaphore, #tpu.memory_space<semaphore_mem>>
      tpu.enqueue_dma source(%87 : memref<1x128xf32, #tpu.memory_space<any>>) target(%88 : memref<1x128xf32, #tpu.memory_space<vmem>>) target_semaphore(%90 : memref<!tpu.dma_semaphore, #tpu.memory_space<semaphore_mem>>)
      %c10 = arith.constant 10 : index
      %91 = memref.load %arg1[%c10] : memref<16xi32, #tpu.memory_space<smem>>
      %c10_i32 = arith.constant 10 : i32
      %c0_i32_55 = arith.constant 0 : i32
      %92 = tpu.memref_slice %arg2[%91, %c0_i32_55] : memref<128x128xf32, #tpu.memory_space<any>> -> memref<1x128xf32, #tpu.memory_space<any>>
      %c10_i32_56 = arith.constant 10 : i32
      %c0_i32_57 = arith.constant 0 : i32
      %93 = tpu.memref_slice %arg19[%c10_i32_56, %c0_i32_57] : memref<16x128xf32, #tpu.memory_space<vmem>> -> memref<1x128xf32, #tpu.memory_space<vmem>>
      %94 = tpu.memref_slice %arg23[%c10_i32] : memref<16x!tpu.dma_semaphore, #tpu.memory_space<semaphore_mem>> -> memref<1x!tpu.dma_semaphore, #tpu.memory_space<semaphore_mem>>
      %95 = tpu.memref_squeeze %94 : memref<1x!tpu.dma_semaphore, #tpu.memory_space<semaphore_mem>> -> memref<!tpu.dma_semaphore, #tpu.memory_space<semaphore_mem>>
      tpu.enqueue_dma source(%92 : memref<1x128xf32, #tpu.memory_space<any>>) target(%93 : memref<1x128xf32, #tpu.memory_space<vmem>>) target_semaphore(%95 : memref<!tpu.dma_semaphore, #tpu.memory_space<semaphore_mem>>)
      %c11 = arith.constant 11 : index
      %96 = memref.load %arg1[%c11] : memref<16xi32, #tpu.memory_space<smem>>
      %c11_i32 = arith.constant 11 : i32
      %c0_i32_58 = arith.constant 0 : i32
      %97 = tpu.memref_slice %arg2[%96, %c0_i32_58] : memref<128x128xf32, #tpu.memory_space<any>> -> memref<1x128xf32, #tpu.memory_space<any>>
      %c11_i32_59 = arith.constant 11 : i32
      %c0_i32_60 = arith.constant 0 : i32
      %98 = tpu.memref_slice %arg19[%c11_i32_59, %c0_i32_60] : memref<16x128xf32, #tpu.memory_space<vmem>> -> memref<1x128xf32, #tpu.memory_space<vmem>>
      %99 = tpu.memref_slice %arg23[%c11_i32] : memref<16x!tpu.dma_semaphore, #tpu.memory_space<semaphore_mem>> -> memref<1x!tpu.dma_semaphore, #tpu.memory_space<semaphore_mem>>
      %100 = tpu.memref_squeeze %99 : memref<1x!tpu.dma_semaphore, #tpu.memory_space<semaphore_mem>> -> memref<!tpu.dma_semaphore, #tpu.memory_space<semaphore_mem>>
      tpu.enqueue_dma source(%97 : memref<1x128xf32, #tpu.memory_space<any>>) target(%98 : memref<1x128xf32, #tpu.memory_space<vmem>>) target_semaphore(%100 : memref<!tpu.dma_semaphore, #tpu.memory_space<semaphore_mem>>)
      %c12 = arith.constant 12 : index
      %101 = memref.load %arg1[%c12] : memref<16xi32, #tpu.memory_space<smem>>
      %c12_i32 = arith.constant 12 : i32
      %c0_i32_61 = arith.constant 0 : i32
      %102 = tpu.memref_slice %arg2[%101, %c0_i32_61] : memref<128x128xf32, #tpu.memory_space<any>> -> memref<1x128xf32, #tpu.memory_space<any>>
      %c12_i32_62 = arith.constant 12 : i32
      %c0_i32_63 = arith.constant 0 : i32
      %103 = tpu.memref_slice %arg19[%c12_i32_62, %c0_i32_63] : memref<16x128xf32, #tpu.memory_space<vmem>> -> memref<1x128xf32, #tpu.memory_space<vmem>>
      %104 = tpu.memref_slice %arg23[%c12_i32] : memref<16x!tpu.dma_semaphore, #tpu.memory_space<semaphore_mem>> -> memref<1x!tpu.dma_semaphore, #tpu.memory_space<semaphore_mem>>
      %105 = tpu.memref_squeeze %104 : memref<1x!tpu.dma_semaphore, #tpu.memory_space<semaphore_mem>> -> memref<!tpu.dma_semaphore, #tpu.memory_space<semaphore_mem>>
      tpu.enqueue_dma source(%102 : memref<1x128xf32, #tpu.memory_space<any>>) target(%103 : memref<1x128xf32, #tpu.memory_space<vmem>>) target_semaphore(%105 : memref<!tpu.dma_semaphore, #tpu.memory_space<semaphore_mem>>)
      %c13 = arith.constant 13 : index
      %106 = memref.load %arg1[%c13] : memref<16xi32, #tpu.memory_space<smem>>
      %c13_i32 = arith.constant 13 : i32
      %c0_i32_64 = arith.constant 0 : i32
      %107 = tpu.memref_slice %arg2[%106, %c0_i32_64] : memref<128x128xf32, #tpu.memory_space<any>> -> memref<1x128xf32, #tpu.memory_space<any>>
      %c13_i32_65 = arith.constant 13 : i32
      %c0_i32_66 = arith.constant 0 : i32
      %108 = tpu.memref_slice %arg19[%c13_i32_65, %c0_i32_66] : memref<16x128xf32, #tpu.memory_space<vmem>> -> memref<1x128xf32, #tpu.memory_space<vmem>>
      %109 = tpu.memref_slice %arg23[%c13_i32] : memref<16x!tpu.dma_semaphore, #tpu.memory_space<semaphore_mem>> -> memref<1x!tpu.dma_semaphore, #tpu.memory_space<semaphore_mem>>
      %110 = tpu.memref_squeeze %109 : memref<1x!tpu.dma_semaphore, #tpu.memory_space<semaphore_mem>> -> memref<!tpu.dma_semaphore, #tpu.memory_space<semaphore_mem>>
      tpu.enqueue_dma source(%107 : memref<1x128xf32, #tpu.memory_space<any>>) target(%108 : memref<1x128xf32, #tpu.memory_space<vmem>>) target_semaphore(%110 : memref<!tpu.dma_semaphore, #tpu.memory_space<semaphore_mem>>)
      %c14 = arith.constant 14 : index
      %111 = memref.load %arg1[%c14] : memref<16xi32, #tpu.memory_space<smem>>
      %c14_i32 = arith.constant 14 : i32
      %c0_i32_67 = arith.constant 0 : i32
      %112 = tpu.memref_slice %arg2[%111, %c0_i32_67] : memref<128x128xf32, #tpu.memory_space<any>> -> memref<1x128xf32, #tpu.memory_space<any>>
      %c14_i32_68 = arith.constant 14 : i32
      %c0_i32_69 = arith.constant 0 : i32
      %113 = tpu.memref_slice %arg19[%c14_i32_68, %c0_i32_69] : memref<16x128xf32, #tpu.memory_space<vmem>> -> memref<1x128xf32, #tpu.memory_space<vmem>>
      %114 = tpu.memref_slice %arg23[%c14_i32] : memref<16x!tpu.dma_semaphore, #tpu.memory_space<semaphore_mem>> -> memref<1x!tpu.dma_semaphore, #tpu.memory_space<semaphore_mem>>
      %115 = tpu.memref_squeeze %114 : memref<1x!tpu.dma_semaphore, #tpu.memory_space<semaphore_mem>> -> memref<!tpu.dma_semaphore, #tpu.memory_space<semaphore_mem>>
      tpu.enqueue_dma source(%112 : memref<1x128xf32, #tpu.memory_space<any>>) target(%113 : memref<1x128xf32, #tpu.memory_space<vmem>>) target_semaphore(%115 : memref<!tpu.dma_semaphore, #tpu.memory_space<semaphore_mem>>)
      %c15 = arith.constant 15 : index
      %116 = memref.load %arg1[%c15] : memref<16xi32, #tpu.memory_space<smem>>
      %c15_i32 = arith.constant 15 : i32
      %c0_i32_70 = arith.constant 0 : i32
      %117 = tpu.memref_slice %arg2[%116, %c0_i32_70] : memref<128x128xf32, #tpu.memory_space<any>> -> memref<1x128xf32, #tpu.memory_space<any>>
      %c15_i32_71 = arith.constant 15 : i32
      %c0_i32_72 = arith.constant 0 : i32
      %118 = tpu.memref_slice %arg19[%c15_i32_71, %c0_i32_72] : memref<16x128xf32, #tpu.memory_space<vmem>> -> memref<1x128xf32, #tpu.memory_space<vmem>>
      %119 = tpu.memref_slice %arg23[%c15_i32] : memref<16x!tpu.dma_semaphore, #tpu.memory_space<semaphore_mem>> -> memref<1x!tpu.dma_semaphore, #tpu.memory_space<semaphore_mem>>
      %120 = tpu.memref_squeeze %119 : memref<1x!tpu.dma_semaphore, #tpu.memory_space<semaphore_mem>> -> memref<!tpu.dma_semaphore, #tpu.memory_space<semaphore_mem>>
      tpu.enqueue_dma source(%117 : memref<1x128xf32, #tpu.memory_space<any>>) target(%118 : memref<1x128xf32, #tpu.memory_space<vmem>>) target_semaphore(%120 : memref<!tpu.dma_semaphore, #tpu.memory_space<semaphore_mem>>)
      %c0_i32_73 = arith.constant 0 : i32
      %c0_i32_74 = arith.constant 0 : i32
      %121 = tpu.memref_slice %arg2[%41, %c0_i32_74] : memref<128x128xf32, #tpu.memory_space<any>> -> memref<1x128xf32, #tpu.memory_space<any>>
      %c0_i32_75 = arith.constant 0 : i32
      %c0_i32_76 = arith.constant 0 : i32
      %122 = tpu.memref_slice %arg19[%c0_i32_75, %c0_i32_76] : memref<16x128xf32, #tpu.memory_space<vmem>> -> memref<1x128xf32, #tpu.memory_space<vmem>>
      %123 = tpu.memref_slice %arg23[%c0_i32_73] : memref<16x!tpu.dma_semaphore, #tpu.memory_space<semaphore_mem>> -> memref<1x!tpu.dma_semaphore, #tpu.memory_space<semaphore_mem>>
      %124 = tpu.memref_squeeze %123 : memref<1x!tpu.dma_semaphore, #tpu.memory_space<semaphore_mem>> -> memref<!tpu.dma_semaphore, #tpu.memory_space<semaphore_mem>>
      tpu.wait_dma2 semaphore(%124 : memref<!tpu.dma_semaphore, #tpu.memory_space<semaphore_mem>>) src(%121 : memref<1x128xf32, #tpu.memory_space<any>>) dst(%122 : memref<1x128xf32, #tpu.memory_space<vmem>>)
      %c1_i32_77 = arith.constant 1 : i32
      %c0_i32_78 = arith.constant 0 : i32
      %125 = tpu.memref_slice %arg2[%46, %c0_i32_78] : memref<128x128xf32, #tpu.memory_space<any>> -> memref<1x128xf32, #tpu.memory_space<any>>
      %c1_i32_79 = arith.constant 1 : i32
      %c0_i32_80 = arith.constant 0 : i32
      %126 = tpu.memref_slice %arg19[%c1_i32_79, %c0_i32_80] : memref<16x128xf32, #tpu.memory_space<vmem>> -> memref<1x128xf32, #tpu.memory_space<vmem>>
      %127 = tpu.memref_slice %arg23[%c1_i32_77] : memref<16x!tpu.dma_semaphore, #tpu.memory_space<semaphore_mem>> -> memref<1x!tpu.dma_semaphore, #tpu.memory_space<semaphore_mem>>
      %128 = tpu.memref_squeeze %127 : memref<1x!tpu.dma_semaphore, #tpu.memory_space<semaphore_mem>> -> memref<!tpu.dma_semaphore, #tpu.memory_space<semaphore_mem>>
      tpu.wait_dma2 semaphore(%128 : memref<!tpu.dma_semaphore, #tpu.memory_space<semaphore_mem>>) src(%125 : memref<1x128xf32, #tpu.memory_space<any>>) dst(%126 : memref<1x128xf32, #tpu.memory_space<vmem>>)
      %c2_i32_81 = arith.constant 2 : i32
      %c0_i32_82 = arith.constant 0 : i32
      %129 = tpu.memref_slice %arg2[%51, %c0_i32_82] : memref<128x128xf32, #tpu.memory_space<any>> -> memref<1x128xf32, #tpu.memory_space<any>>
      %c2_i32_83 = arith.constant 2 : i32
      %c0_i32_84 = arith.constant 0 : i32
      %130 = tpu.memref_slice %arg19[%c2_i32_83, %c0_i32_84] : memref<16x128xf32, #tpu.memory_space<vmem>> -> memref<1x128xf32, #tpu.memory_space<vmem>>
      %131 = tpu.memref_slice %arg23[%c2_i32_81] : memref<16x!tpu.dma_semaphore, #tpu.memory_space<semaphore_mem>> -> memref<1x!tpu.dma_semaphore, #tpu.memory_space<semaphore_mem>>
      %132 = tpu.memref_squeeze %131 : memref<1x!tpu.dma_semaphore, #tpu.memory_space<semaphore_mem>> -> memref<!tpu.dma_semaphore, #tpu.memory_space<semaphore_mem>>
      tpu.wait_dma2 semaphore(%132 : memref<!tpu.dma_semaphore, #tpu.memory_space<semaphore_mem>>) src(%129 : memref<1x128xf32, #tpu.memory_space<any>>) dst(%130 : memref<1x128xf32, #tpu.memory_space<vmem>>)
      %c3_i32_85 = arith.constant 3 : i32
      %c0_i32_86 = arith.constant 0 : i32
      %133 = tpu.memref_slice %arg2[%56, %c0_i32_86] : memref<128x128xf32, #tpu.memory_space<any>> -> memref<1x128xf32, #tpu.memory_space<any>>
      %c3_i32_87 = arith.constant 3 : i32
      %c0_i32_88 = arith.constant 0 : i32
      %134 = tpu.memref_slice %arg19[%c3_i32_87, %c0_i32_88] : memref<16x128xf32, #tpu.memory_space<vmem>> -> memref<1x128xf32, #tpu.memory_space<vmem>>
      %135 = tpu.memref_slice %arg23[%c3_i32_85] : memref<16x!tpu.dma_semaphore, #tpu.memory_space<semaphore_mem>> -> memref<1x!tpu.dma_semaphore, #tpu.memory_space<semaphore_mem>>
      %136 = tpu.memref_squeeze %135 : memref<1x!tpu.dma_semaphore, #tpu.memory_space<semaphore_mem>> -> memref<!tpu.dma_semaphore, #tpu.memory_space<semaphore_mem>>
      tpu.wait_dma2 semaphore(%136 : memref<!tpu.dma_semaphore, #tpu.memory_space<semaphore_mem>>) src(%133 : memref<1x128xf32, #tpu.memory_space<any>>) dst(%134 : memref<1x128xf32, #tpu.memory_space<vmem>>)
      %c4_i32_89 = arith.constant 4 : i32
      %c0_i32_90 = arith.constant 0 : i32
      %137 = tpu.memref_slice %arg2[%61, %c0_i32_90] : memref<128x128xf32, #tpu.memory_space<any>> -> memref<1x128xf32, #tpu.memory_space<any>>
      %c4_i32_91 = arith.constant 4 : i32
      %c0_i32_92 = arith.constant 0 : i32
      %138 = tpu.memref_slice %arg19[%c4_i32_91, %c0_i32_92] : memref<16x128xf32, #tpu.memory_space<vmem>> -> memref<1x128xf32, #tpu.memory_space<vmem>>
      %139 = tpu.memref_slice %arg23[%c4_i32_89] : memref<16x!tpu.dma_semaphore, #tpu.memory_space<semaphore_mem>> -> memref<1x!tpu.dma_semaphore, #tpu.memory_space<semaphore_mem>>
      %140 = tpu.memref_squeeze %139 : memref<1x!tpu.dma_semaphore, #tpu.memory_space<semaphore_mem>> -> memref<!tpu.dma_semaphore, #tpu.memory_space<semaphore_mem>>
      tpu.wait_dma2 semaphore(%140 : memref<!tpu.dma_semaphore, #tpu.memory_space<semaphore_mem>>) src(%137 : memref<1x128xf32, #tpu.memory_space<any>>) dst(%138 : memref<1x128xf32, #tpu.memory_space<vmem>>)
      %c5_i32_93 = arith.constant 5 : i32
      %c0_i32_94 = arith.constant 0 : i32
      %141 = tpu.memref_slice %arg2[%66, %c0_i32_94] : memref<128x128xf32, #tpu.memory_space<any>> -> memref<1x128xf32, #tpu.memory_space<any>>
      %c5_i32_95 = arith.constant 5 : i32
      %c0_i32_96 = arith.constant 0 : i32
      %142 = tpu.memref_slice %arg19[%c5_i32_95, %c0_i32_96] : memref<16x128xf32, #tpu.memory_space<vmem>> -> memref<1x128xf32, #tpu.memory_space<vmem>>
      %143 = tpu.memref_slice %arg23[%c5_i32_93] : memref<16x!tpu.dma_semaphore, #tpu.memory_space<semaphore_mem>> -> memref<1x!tpu.dma_semaphore, #tpu.memory_space<semaphore_mem>>
      %144 = tpu.memref_squeeze %143 : memref<1x!tpu.dma_semaphore, #tpu.memory_space<semaphore_mem>> -> memref<!tpu.dma_semaphore, #tpu.memory_space<semaphore_mem>>
      tpu.wait_dma2 semaphore(%144 : memref<!tpu.dma_semaphore, #tpu.memory_space<semaphore_mem>>) src(%141 : memref<1x128xf32, #tpu.memory_space<any>>) dst(%142 : memref<1x128xf32, #tpu.memory_space<vmem>>)
      %c6_i32_97 = arith.constant 6 : i32
      %c0_i32_98 = arith.constant 0 : i32
      %145 = tpu.memref_slice %arg2[%71, %c0_i32_98] : memref<128x128xf32, #tpu.memory_space<any>> -> memref<1x128xf32, #tpu.memory_space<any>>
      %c6_i32_99 = arith.constant 6 : i32
      %c0_i32_100 = arith.constant 0 : i32
      %146 = tpu.memref_slice %arg19[%c6_i32_99, %c0_i32_100] : memref<16x128xf32, #tpu.memory_space<vmem>> -> memref<1x128xf32, #tpu.memory_space<vmem>>
      %147 = tpu.memref_slice %arg23[%c6_i32_97] : memref<16x!tpu.dma_semaphore, #tpu.memory_space<semaphore_mem>> -> memref<1x!tpu.dma_semaphore, #tpu.memory_space<semaphore_mem>>
      %148 = tpu.memref_squeeze %147 : memref<1x!tpu.dma_semaphore, #tpu.memory_space<semaphore_mem>> -> memref<!tpu.dma_semaphore, #tpu.memory_space<semaphore_mem>>
      tpu.wait_dma2 semaphore(%148 : memref<!tpu.dma_semaphore, #tpu.memory_space<semaphore_mem>>) src(%145 : memref<1x128xf32, #tpu.memory_space<any>>) dst(%146 : memref<1x128xf32, #tpu.memory_space<vmem>>)
      %c7_i32_101 = arith.constant 7 : i32
      %c0_i32_102 = arith.constant 0 : i32
      %149 = tpu.memref_slice %arg2[%76, %c0_i32_102] : memref<128x128xf32, #tpu.memory_space<any>> -> memref<1x128xf32, #tpu.memory_space<any>>
      %c7_i32_103 = arith.constant 7 : i32
      %c0_i32_104 = arith.constant 0 : i32
      %150 = tpu.memref_slice %arg19[%c7_i32_103, %c0_i32_104] : memref<16x128xf32, #tpu.memory_space<vmem>> -> memref<1x128xf32, #tpu.memory_space<vmem>>
      %151 = tpu.memref_slice %arg23[%c7_i32_101] : memref<16x!tpu.dma_semaphore, #tpu.memory_space<semaphore_mem>> -> memref<1x!tpu.dma_semaphore, #tpu.memory_space<semaphore_mem>>
      %152 = tpu.memref_squeeze %151 : memref<1x!tpu.dma_semaphore, #tpu.memory_space<semaphore_mem>> -> memref<!tpu.dma_semaphore, #tpu.memory_space<semaphore_mem>>
      tpu.wait_dma2 semaphore(%152 : memref<!tpu.dma_semaphore, #tpu.memory_space<semaphore_mem>>) src(%149 : memref<1x128xf32, #tpu.memory_space<any>>) dst(%150 : memref<1x128xf32, #tpu.memory_space<vmem>>)
      %c8_i32_105 = arith.constant 8 : i32
      %c0_i32_106 = arith.constant 0 : i32
      %153 = tpu.memref_slice %arg2[%81, %c0_i32_106] : memref<128x128xf32, #tpu.memory_space<any>> -> memref<1x128xf32, #tpu.memory_space<any>>
      %c8_i32_107 = arith.constant 8 : i32
      %c0_i32_108 = arith.constant 0 : i32
      %154 = tpu.memref_slice %arg19[%c8_i32_107, %c0_i32_108] : memref<16x128xf32, #tpu.memory_space<vmem>> -> memref<1x128xf32, #tpu.memory_space<vmem>>
      %155 = tpu.memref_slice %arg23[%c8_i32_105] : memref<16x!tpu.dma_semaphore, #tpu.memory_space<semaphore_mem>> -> memref<1x!tpu.dma_semaphore, #tpu.memory_space<semaphore_mem>>
      %156 = tpu.memref_squeeze %155 : memref<1x!tpu.dma_semaphore, #tpu.memory_space<semaphore_mem>> -> memref<!tpu.dma_semaphore, #tpu.memory_space<semaphore_mem>>
      tpu.wait_dma2 semaphore(%156 : memref<!tpu.dma_semaphore, #tpu.memory_space<semaphore_mem>>) src(%153 : memref<1x128xf32, #tpu.memory_space<any>>) dst(%154 : memref<1x128xf32, #tpu.memory_space<vmem>>)
      %c9_i32_109 = arith.constant 9 : i32
      %c0_i32_110 = arith.constant 0 : i32
      %157 = tpu.memref_slice %arg2[%86, %c0_i32_110] : memref<128x128xf32, #tpu.memory_space<any>> -> memref<1x128xf32, #tpu.memory_space<any>>
      %c9_i32_111 = arith.constant 9 : i32
      %c0_i32_112 = arith.constant 0 : i32
      %158 = tpu.memref_slice %arg19[%c9_i32_111, %c0_i32_112] : memref<16x128xf32, #tpu.memory_space<vmem>> -> memref<1x128xf32, #tpu.memory_space<vmem>>
      %159 = tpu.memref_slice %arg23[%c9_i32_109] : memref<16x!tpu.dma_semaphore, #tpu.memory_space<semaphore_mem>> -> memref<1x!tpu.dma_semaphore, #tpu.memory_space<semaphore_mem>>
      %160 = tpu.memref_squeeze %159 : memref<1x!tpu.dma_semaphore, #tpu.memory_space<semaphore_mem>> -> memref<!tpu.dma_semaphore, #tpu.memory_space<semaphore_mem>>
      tpu.wait_dma2 semaphore(%160 : memref<!tpu.dma_semaphore, #tpu.memory_space<semaphore_mem>>) src(%157 : memref<1x128xf32, #tpu.memory_space<any>>) dst(%158 : memref<1x128xf32, #tpu.memory_space<vmem>>)
      %c10_i32_113 = arith.constant 10 : i32
      %c0_i32_114 = arith.constant 0 : i32
      %161 = tpu.memref_slice %arg2[%91, %c0_i32_114] : memref<128x128xf32, #tpu.memory_space<any>> -> memref<1x128xf32, #tpu.memory_space<any>>
      %c10_i32_115 = arith.constant 10 : i32
      %c0_i32_116 = arith.constant 0 : i32
      %162 = tpu.memref_slice %arg19[%c10_i32_115, %c0_i32_116] : memref<16x128xf32, #tpu.memory_space<vmem>> -> memref<1x128xf32, #tpu.memory_space<vmem>>
      %163 = tpu.memref_slice %arg23[%c10_i32_113] : memref<16x!tpu.dma_semaphore, #tpu.memory_space<semaphore_mem>> -> memref<1x!tpu.dma_semaphore, #tpu.memory_space<semaphore_mem>>
      %164 = tpu.memref_squeeze %163 : memref<1x!tpu.dma_semaphore, #tpu.memory_space<semaphore_mem>> -> memref<!tpu.dma_semaphore, #tpu.memory_space<semaphore_mem>>
      tpu.wait_dma2 semaphore(%164 : memref<!tpu.dma_semaphore, #tpu.memory_space<semaphore_mem>>) src(%161 : memref<1x128xf32, #tpu.memory_space<any>>) dst(%162 : memref<1x128xf32, #tpu.memory_space<vmem>>)
      %c11_i32_117 = arith.constant 11 : i32
      %c0_i32_118 = arith.constant 0 : i32
      %165 = tpu.memref_slice %arg2[%96, %c0_i32_118] : memref<128x128xf32, #tpu.memory_space<any>> -> memref<1x128xf32, #tpu.memory_space<any>>
      %c11_i32_119 = arith.constant 11 : i32
      %c0_i32_120 = arith.constant 0 : i32
      %166 = tpu.memref_slice %arg19[%c11_i32_119, %c0_i32_120] : memref<16x128xf32, #tpu.memory_space<vmem>> -> memref<1x128xf32, #tpu.memory_space<vmem>>
      %167 = tpu.memref_slice %arg23[%c11_i32_117] : memref<16x!tpu.dma_semaphore, #tpu.memory_space<semaphore_mem>> -> memref<1x!tpu.dma_semaphore, #tpu.memory_space<semaphore_mem>>
      %168 = tpu.memref_squeeze %167 : memref<1x!tpu.dma_semaphore, #tpu.memory_space<semaphore_mem>> -> memref<!tpu.dma_semaphore, #tpu.memory_space<semaphore_mem>>
      tpu.wait_dma2 semaphore(%168 : memref<!tpu.dma_semaphore, #tpu.memory_space<semaphore_mem>>) src(%165 : memref<1x128xf32, #tpu.memory_space<any>>) dst(%166 : memref<1x128xf32, #tpu.memory_space<vmem>>)
      %c12_i32_121 = arith.constant 12 : i32
      %c0_i32_122 = arith.constant 0 : i32
      %169 = tpu.memref_slice %arg2[%101, %c0_i32_122] : memref<128x128xf32, #tpu.memory_space<any>> -> memref<1x128xf32, #tpu.memory_space<any>>
      %c12_i32_123 = arith.constant 12 : i32
      %c0_i32_124 = arith.constant 0 : i32
      %170 = tpu.memref_slice %arg19[%c12_i32_123, %c0_i32_124] : memref<16x128xf32, #tpu.memory_space<vmem>> -> memref<1x128xf32, #tpu.memory_space<vmem>>
      %171 = tpu.memref_slice %arg23[%c12_i32_121] : memref<16x!tpu.dma_semaphore, #tpu.memory_space<semaphore_mem>> -> memref<1x!tpu.dma_semaphore, #tpu.memory_space<semaphore_mem>>
      %172 = tpu.memref_squeeze %171 : memref<1x!tpu.dma_semaphore, #tpu.memory_space<semaphore_mem>> -> memref<!tpu.dma_semaphore, #tpu.memory_space<semaphore_mem>>
      tpu.wait_dma2 semaphore(%172 : memref<!tpu.dma_semaphore, #tpu.memory_space<semaphore_mem>>) src(%169 : memref<1x128xf32, #tpu.memory_space<any>>) dst(%170 : memref<1x128xf32, #tpu.memory_space<vmem>>)
      %c13_i32_125 = arith.constant 13 : i32
      %c0_i32_126 = arith.constant 0 : i32
      %173 = tpu.memref_slice %arg2[%106, %c0_i32_126] : memref<128x128xf32, #tpu.memory_space<any>> -> memref<1x128xf32, #tpu.memory_space<any>>
      %c13_i32_127 = arith.constant 13 : i32
      %c0_i32_128 = arith.constant 0 : i32
      %174 = tpu.memref_slice %arg19[%c13_i32_127, %c0_i32_128] : memref<16x128xf32, #tpu.memory_space<vmem>> -> memref<1x128xf32, #tpu.memory_space<vmem>>
      %175 = tpu.memref_slice %arg23[%c13_i32_125] : memref<16x!tpu.dma_semaphore, #tpu.memory_space<semaphore_mem>> -> memref<1x!tpu.dma_semaphore, #tpu.memory_space<semaphore_mem>>
      %176 = tpu.memref_squeeze %175 : memref<1x!tpu.dma_semaphore, #tpu.memory_space<semaphore_mem>> -> memref<!tpu.dma_semaphore, #tpu.memory_space<semaphore_mem>>
      tpu.wait_dma2 semaphore(%176 : memref<!tpu.dma_semaphore, #tpu.memory_space<semaphore_mem>>) src(%173 : memref<1x128xf32, #tpu.memory_space<any>>) dst(%174 : memref<1x128xf32, #tpu.memory_space<vmem>>)
      %c14_i32_129 = arith.constant 14 : i32
      %c0_i32_130 = arith.constant 0 : i32
      %177 = tpu.memref_slice %arg2[%111, %c0_i32_130] : memref<128x128xf32, #tpu.memory_space<any>> -> memref<1x128xf32, #tpu.memory_space<any>>
      %c14_i32_131 = arith.constant 14 : i32
      %c0_i32_132 = arith.constant 0 : i32
      %178 = tpu.memref_slice %arg19[%c14_i32_131, %c0_i32_132] : memref<16x128xf32, #tpu.memory_space<vmem>> -> memref<1x128xf32, #tpu.memory_space<vmem>>
      %179 = tpu.memref_slice %arg23[%c14_i32_129] : memref<16x!tpu.dma_semaphore, #tpu.memory_space<semaphore_mem>> -> memref<1x!tpu.dma_semaphore, #tpu.memory_space<semaphore_mem>>
      %180 = tpu.memref_squeeze %179 : memref<1x!tpu.dma_semaphore, #tpu.memory_space<semaphore_mem>> -> memref<!tpu.dma_semaphore, #tpu.memory_space<semaphore_mem>>
      tpu.wait_dma2 semaphore(%180 : memref<!tpu.dma_semaphore, #tpu.memory_space<semaphore_mem>>) src(%177 : memref<1x128xf32, #tpu.memory_space<any>>) dst(%178 : memref<1x128xf32, #tpu.memory_space<vmem>>)
      %c15_i32_133 = arith.constant 15 : i32
      %c0_i32_134 = arith.constant 0 : i32
      %181 = tpu.memref_slice %arg2[%116, %c0_i32_134] : memref<128x128xf32, #tpu.memory_space<any>> -> memref<1x128xf32, #tpu.memory_space<any>>
      %c15_i32_135 = arith.constant 15 : i32
      %c0_i32_136 = arith.constant 0 : i32
      %182 = tpu.memref_slice %arg19[%c15_i32_135, %c0_i32_136] : memref<16x128xf32, #tpu.memory_space<vmem>> -> memref<1x128xf32, #tpu.memory_space<vmem>>
      %183 = tpu.memref_slice %arg23[%c15_i32_133] : memref<16x!tpu.dma_semaphore, #tpu.memory_space<semaphore_mem>> -> memref<1x!tpu.dma_semaphore, #tpu.memory_space<semaphore_mem>>
      %184 = tpu.memref_squeeze %183 : memref<1x!tpu.dma_semaphore, #tpu.memory_space<semaphore_mem>> -> memref<!tpu.dma_semaphore, #tpu.memory_space<semaphore_mem>>
      tpu.wait_dma2 semaphore(%184 : memref<!tpu.dma_semaphore, #tpu.memory_space<semaphore_mem>>) src(%181 : memref<1x128xf32, #tpu.memory_space<any>>) dst(%182 : memref<1x128xf32, #tpu.memory_space<vmem>>)
      %c0_137 = arith.constant 0 : index
      %c0_138 = arith.constant 0 : index
      %185 = vector.load %arg19[%c0_137, %c0_138] : memref<16x128xf32, #tpu.memory_space<vmem>>, vector<16x128xf32>
      %c0_139 = arith.constant 0 : index
      %c0_140 = arith.constant 0 : index
      %c0_141 = arith.constant 0 : index
      %186 = vector.load %arg3[%c0_139, %c0_140, %c0_141] : memref<2x16x128xf32, #tpu.memory_space<vmem>>, vector<1x16x128xf32>
      %187 = vector.shape_cast %186 : vector<1x16x128xf32> to vector<16x128xf32>
      %188 = arith.truncf %185 : vector<16x128xf32> to vector<16x128xbf16>
      %c0_142 = arith.constant 0 : index
      %c0_143 = arith.constant 0 : index
      %189 = vector.load %arg4[%c0_142, %c0_143] : memref<128x384xbf16, #tpu.memory_space<vmem>>, vector<128x384xbf16>
      %cst_144 = arith.constant dense<0.000000e+00> : vector<16x384xf32>
      %190 = tpu.matmul %188, %189, %cst_144 {dimension_numbers = #tpu.dot_dimension_numbers<[1], [0], [0], [1], [0, 0, 1, 1], [], []>} : vector<16x128xbf16>, vector<128x384xbf16>, vector<16x384xf32> -> vector<16x384xf32>
      %c0_145 = arith.constant 0 : index
      %c0_146 = arith.constant 0 : index
      %191 = vector.load %arg6[%c0_145, %c0_146] : memref<1x384xf32, #tpu.memory_space<vmem>>, vector<1x384xf32>
      %192 = vector.broadcast %191 : vector<1x384xf32> to vector<16x384xf32>
      %193 = arith.addf %190, %192 : vector<16x384xf32>
      %194 = arith.truncf %187 : vector<16x128xf32> to vector<16x128xbf16>
      %c0_147 = arith.constant 0 : index
      %c0_148 = arith.constant 0 : index
      %195 = vector.load %arg5[%c0_147, %c0_148] : memref<128x384xbf16, #tpu.memory_space<vmem>>, vector<128x384xbf16>
      %cst_149 = arith.constant dense<0.000000e+00> : vector<16x384xf32>
      %196 = tpu.matmul %194, %195, %cst_149 {dimension_numbers = #tpu.dot_dimension_numbers<[1], [0], [0], [1], [0, 0, 1, 1], [], []>} : vector<16x128xbf16>, vector<128x384xbf16>, vector<16x384xf32> -> vector<16x384xf32>
      %c0_150 = arith.constant 0 : index
      %c0_151 = arith.constant 0 : index
      %197 = vector.load %arg7[%c0_150, %c0_151] : memref<1x384xf32, #tpu.memory_space<vmem>>, vector<1x384xf32>
      %198 = vector.broadcast %197 : vector<1x384xf32> to vector<16x384xf32>
      %199 = arith.addf %196, %198 : vector<16x384xf32>
      %200 = vector.extract_strided_slice %193 {offsets = [0, 0], sizes = [16, 128], strides = [1, 1]} : vector<16x384xf32> to vector<16x128xf32>
      %201 = vector.extract_strided_slice %193 {offsets = [0, 128], sizes = [16, 128], strides = [1, 1]} : vector<16x384xf32> to vector<16x128xf32>
      %202 = vector.extract_strided_slice %193 {offsets = [0, 256], sizes = [16, 128], strides = [1, 1]} : vector<16x384xf32> to vector<16x128xf32>
      %203 = vector.extract_strided_slice %199 {offsets = [0, 0], sizes = [16, 128], strides = [1, 1]} : vector<16x384xf32> to vector<16x128xf32>
      %204 = vector.extract_strided_slice %199 {offsets = [0, 128], sizes = [16, 128], strides = [1, 1]} : vector<16x384xf32> to vector<16x128xf32>
      %205 = vector.extract_strided_slice %199 {offsets = [0, 256], sizes = [16, 128], strides = [1, 1]} : vector<16x384xf32> to vector<16x128xf32>
      %206 = arith.addf %200, %203 : vector<16x128xf32>
      %207 = arith.negf %206 : vector<16x128xf32>
      %208 = math.exp %207 : vector<16x128xf32>
      %cst_152 = arith.constant 1.000000e+00 : f32
      %209 = vector.broadcast %cst_152 : f32 to vector<16x128xf32>
      %210 = arith.addf %209, %208 : vector<16x128xf32>
      %211 = arith.divf %209, %210 : vector<16x128xf32>
      %212 = arith.addf %201, %204 : vector<16x128xf32>
      %213 = arith.negf %212 : vector<16x128xf32>
      %214 = math.exp %213 : vector<16x128xf32>
      %cst_153 = arith.constant 1.000000e+00 : f32
      %215 = vector.broadcast %cst_153 : f32 to vector<16x128xf32>
      %216 = arith.addf %215, %214 : vector<16x128xf32>
      %217 = arith.divf %215, %216 : vector<16x128xf32>
      %218 = arith.mulf %211, %205 : vector<16x128xf32>
      %219 = arith.addf %202, %218 : vector<16x128xf32>
      %220 = math.tanh %219 : vector<16x128xf32>
      %cst_154 = arith.constant 1.000000e+00 : f32
      %221 = vector.broadcast %cst_154 : f32 to vector<16x128xf32>
      %222 = arith.subf %221, %217 : vector<16x128xf32>
      %223 = arith.mulf %222, %220 : vector<16x128xf32>
      %224 = arith.mulf %217, %187 : vector<16x128xf32>
      %225 = arith.addf %223, %224 : vector<16x128xf32>
      %c0_155 = arith.constant 0 : index
      %c0_156 = arith.constant 0 : index
      %c0_157 = arith.constant 0 : index
      %226 = vector.load %arg16[%c0_155, %c0_156, %c0_157] : memref<2x16x128xf32, #tpu.memory_space<vmem>>, vector<1x16x128xf32>
      %227 = vector.shape_cast %226 : vector<1x16x128xf32> to vector<16x128xf32>
      %228 = vector.shape_cast %225 : vector<16x128xf32> to vector<1x16x128xf32>
      tpu.vector_store %arg16[%c0_155, %c0_156, %c0_157], %228 {strides = array<i32>} : memref<2x16x128xf32, #tpu.memory_space<vmem>>, vector<1x16x128xf32>,
      %c1_158 = arith.constant 1 : index
      %c0_159 = arith.constant 0 : index
      %c0_160 = arith.constant 0 : index
      %229 = vector.load %arg3[%c1_158, %c0_159, %c0_160] : memref<2x16x128xf32, #tpu.memory_space<vmem>>, vector<1x16x128xf32>
      %230 = vector.shape_cast %229 : vector<1x16x128xf32> to vector<16x128xf32>
      %231 = arith.truncf %225 : vector<16x128xf32> to vector<16x128xbf16>
      %c0_161 = arith.constant 0 : index
      %c0_162 = arith.constant 0 : index
      %232 = vector.load %arg8[%c0_161, %c0_162] : memref<128x384xbf16, #tpu.memory_space<vmem>>, vector<128x384xbf16>
      %cst_163 = arith.constant dense<0.000000e+00> : vector<16x384xf32>
      %233 = tpu.matmul %231, %232, %cst_163 {dimension_numbers = #tpu.dot_dimension_numbers<[1], [0], [0], [1], [0, 0, 1, 1], [], []>} : vector<16x128xbf16>, vector<128x384xbf16>, vector<16x384xf32> -> vector<16x384xf32>
      %c0_164 = arith.constant 0 : index
      %c0_165 = arith.constant 0 : index
      %234 = vector.load %arg10[%c0_164, %c0_165] : memref<1x384xf32, #tpu.memory_space<vmem>>, vector<1x384xf32>
      %235 = vector.broadcast %234 : vector<1x384xf32> to vector<16x384xf32>
      %236 = arith.addf %233, %235 : vector<16x384xf32>
      %237 = arith.truncf %230 : vector<16x128xf32> to vector<16x128xbf16>
      %c0_166 = arith.constant 0 : index
      %c0_167 = arith.constant 0 : index
      %238 = vector.load %arg9[%c0_166, %c0_167] : memref<128x384xbf16, #tpu.memory_space<vmem>>, vector<128x384xbf16>
      %cst_168 = arith.constant dense<0.000000e+00> : vector<16x384xf32>
      %239 = tpu.matmul %237, %238, %cst_168 {dimension_numbers = #tpu.dot_dimension_numbers<[1], [0], [0], [1], [0, 0, 1, 1], [], []>} : vector<16x128xbf16>, vector<128x384xbf16>, vector<16x384xf32> -> vector<16x384xf32>
      %c0_169 = arith.constant 0 : index
      %c0_170 = arith.constant 0 : index
      %240 = vector.load %arg11[%c0_169, %c0_170] : memref<1x384xf32, #tpu.memory_space<vmem>>, vector<1x384xf32>
      %241 = vector.broadcast %240 : vector<1x384xf32> to vector<16x384xf32>
      %242 = arith.addf %239, %241 : vector<16x384xf32>
      %243 = vector.extract_strided_slice %236 {offsets = [0, 0], sizes = [16, 128], strides = [1, 1]} : vector<16x384xf32> to vector<16x128xf32>
      %244 = vector.extract_strided_slice %236 {offsets = [0, 128], sizes = [16, 128], strides = [1, 1]} : vector<16x384xf32> to vector<16x128xf32>
      %245 = vector.extract_strided_slice %236 {offsets = [0, 256], sizes = [16, 128], strides = [1, 1]} : vector<16x384xf32> to vector<16x128xf32>
      %246 = vector.extract_strided_slice %242 {offsets = [0, 0], sizes = [16, 128], strides = [1, 1]} : vector<16x384xf32> to vector<16x128xf32>
      %247 = vector.extract_strided_slice %242 {offsets = [0, 128], sizes = [16, 128], strides = [1, 1]} : vector<16x384xf32> to vector<16x128xf32>
      %248 = vector.extract_strided_slice %242 {offsets = [0, 256], sizes = [16, 128], strides = [1, 1]} : vector<16x384xf32> to vector<16x128xf32>
      %249 = arith.addf %243, %246 : vector<16x128xf32>
      %250 = arith.negf %249 : vector<16x128xf32>
      %251 = math.exp %250 : vector<16x128xf32>
      %cst_171 = arith.constant 1.000000e+00 : f32
      %252 = vector.broadcast %cst_171 : f32 to vector<16x128xf32>
      %253 = arith.addf %252, %251 : vector<16x128xf32>
      %254 = arith.divf %252, %253 : vector<16x128xf32>
      %255 = arith.addf %244, %247 : vector<16x128xf32>
      %256 = arith.negf %255 : vector<16x128xf32>
      %257 = math.exp %256 : vector<16x128xf32>
      %cst_172 = arith.constant 1.000000e+00 : f32
      %258 = vector.broadcast %cst_172 : f32 to vector<16x128xf32>
      %259 = arith.addf %258, %257 : vector<16x128xf32>
      %260 = arith.divf %258, %259 : vector<16x128xf32>
      %261 = arith.mulf %254, %248 : vector<16x128xf32>
      %262 = arith.addf %245, %261 : vector<16x128xf32>
      %263 = math.tanh %262 : vector<16x128xf32>
      %cst_173 = arith.constant 1.000000e+00 : f32
      %264 = vector.broadcast %cst_173 : f32 to vector<16x128xf32>
      %265 = arith.subf %264, %260 : vector<16x128xf32>
      %266 = arith.mulf %265, %263 : vector<16x128xf32>
      %267 = arith.mulf %260, %230 : vector<16x128xf32>
      %268 = arith.addf %266, %267 : vector<16x128xf32>
      %c1_174 = arith.constant 1 : index
      %c0_175 = arith.constant 0 : index
      %c0_176 = arith.constant 0 : index
      %269 = vector.load %arg16[%c1_174, %c0_175, %c0_176] : memref<2x16x128xf32, #tpu.memory_space<vmem>>, vector<1x16x128xf32>
      %270 = vector.shape_cast %269 : vector<1x16x128xf32> to vector<16x128xf32>
      %271 = vector.shape_cast %268 : vector<16x128xf32> to vector<1x16x128xf32>
      tpu.vector_store %arg16[%c1_174, %c0_175, %c0_176], %271 {strides = array<i32>} : memref<2x16x128xf32, #tpu.memory_space<vmem>>, vector<1x16x128xf32>,
      %272 = arith.truncf %268 : vector<16x128xf32> to vector<16x128xbf16>
      %c0_177 = arith.constant 0 : index
      %c0_178 = arith.constant 0 : index
      %273 = vector.load %arg12[%c0_177, %c0_178] : memref<128x128xbf16, #tpu.memory_space<vmem>>, vector<128x128xbf16>
      %cst_179 = arith.constant dense<0.000000e+00> : vector<16x128xf32>
      %274 = tpu.matmul %272, %273, %cst_179 {dimension_numbers = #tpu.dot_dimension_numbers<[1], [0], [0], [1], [0, 0, 1, 1], [], []>} : vector<16x128xbf16>, vector<128x128xbf16>, vector<16x128xf32> -> vector<16x128xf32>
      %c0_180 = arith.constant 0 : index
      %c0_181 = arith.constant 0 : index
      %275 = vector.load %arg13[%c0_180, %c0_181] : memref<1x128xf32, #tpu.memory_space<vmem>>, vector<1x128xf32>
      %276 = vector.broadcast %275 : vector<1x128xf32> to vector<16x128xf32>
      %277 = arith.addf %274, %276 : vector<16x128xf32>
      %cst_182 = arith.constant 0.000000e+00 : f32
      %278 = vector.broadcast %cst_182 : f32 to vector<16x128xf32>
      %279 = arith.maximumf %277, %278 : vector<16x128xf32>
      %280 = arith.truncf %279 : vector<16x128xf32> to vector<16x128xbf16>
      %c0_183 = arith.constant 0 : index
      %c0_184 = arith.constant 0 : index
      %281 = vector.load %arg20[%c0_183, %c0_184] : memref<16x128xbf16, #tpu.memory_space<vmem>>, vector<16x128xbf16>
      tpu.vector_store %arg20[%c0_183, %c0_184], %280 {strides = array<i32>} : memref<16x128xbf16, #tpu.memory_space<vmem>>, vector<16x128xbf16>,
      %cst_185 = arith.constant -1.000000e+30 : f32
      %282 = vector.broadcast %cst_185 : f32 to vector<16x1xf32>
      %c0_186 = arith.constant 0 : index
      %c0_187 = arith.constant 0 : index
      %283 = vector.load %arg21[%c0_186, %c0_187] : memref<16x1xf32, #tpu.memory_space<vmem>>, vector<16x1xf32>
      tpu.vector_store %arg21[%c0_186, %c0_187], %282 {strides = array<i32>} : memref<16x1xf32, #tpu.memory_space<vmem>>, vector<16x1xf32>,
      %cst_188 = arith.constant 0.000000e+00 : f32
      %284 = vector.broadcast %cst_188 : f32 to vector<16x1xf32>
      %c0_189 = arith.constant 0 : index
      %c0_190 = arith.constant 0 : index
      %285 = vector.load %arg22[%c0_189, %c0_190] : memref<16x1xf32, #tpu.memory_space<vmem>>, vector<16x1xf32>
      tpu.vector_store %arg22[%c0_189, %c0_190], %284 {strides = array<i32>} : memref<16x1xf32, #tpu.memory_space<vmem>>, vector<16x1xf32>,
    } else {
    }
    %c0 = arith.constant 0 : index
    %c0_1 = arith.constant 0 : index
    %3 = vector.load %arg20[%c0, %c0_1] : memref<16x128xbf16, #tpu.memory_space<vmem>>, vector<16x128xbf16>
    %c0_2 = arith.constant 0 : index
    %c0_3 = arith.constant 0 : index
    %4 = vector.load %arg14[%c0_2, %c0_3] : memref<128x128xbf16, #tpu.memory_space<vmem>>, vector<128x128xbf16>
    %cst = arith.constant dense<0.000000e+00> : vector<16x128xf32>
    %5 = tpu.matmul %3, %4, %cst {dimension_numbers = #tpu.dot_dimension_numbers<[1], [0], [0], [1], [0, 0, 1, 1], [], []>} : vector<16x128xbf16>, vector<128x128xbf16>, vector<16x128xf32> -> vector<16x128xf32>
    %c0_4 = arith.constant 0 : index
    %c0_5 = arith.constant 0 : index
    %6 = vector.load %arg15[%c0_4, %c0_5] : memref<1x128xf32, #tpu.memory_space<vmem>>, vector<1x128xf32>
    %7 = vector.broadcast %6 : vector<1x128xf32> to vector<16x128xf32>
    %8 = arith.addf %5, %7 : vector<16x128xf32>
    %c128_i32 = arith.constant 128 : i32
    %9 = arith.muli %arg0, %c128_i32 : i32
    %10 = tpu.assume_multiple %9, 128 : i32
    %c0_6 = arith.constant 0 : index
    %11 = arith.index_cast %10 : i32 to index
    %12 = vector.load %arg17[%c0_6, %11] : memref<16x128xf32, #tpu.memory_space<vmem>>, vector<16x128xf32>
    tpu.vector_store %arg17[%c0_6, %11], %8 {strides = array<i32>} : memref<16x128xf32, #tpu.memory_space<vmem>>, vector<16x128xf32>,
    %c128_i32_7 = arith.constant 128 : i32
    %13 = arith.muli %arg0, %c128_i32_7 : i32
    %14 = tpu.iota {dimensions = array<i32: 1>} : vector<16x128xi32>
    %15 = vector.broadcast %13 : i32 to vector<16x128xi32>
    %16 = arith.addi %15, %14 : vector<16x128xi32>
    %c40_i32 = arith.constant 40 : i32
    %17 = vector.broadcast %c40_i32 : i32 to vector<16x128xi32>
    %18 = arith.cmpi slt, %16, %17 : vector<16x128xi32>
    %cst_8 = arith.constant -1.000000e+30 : f32
    %19 = vector.broadcast %cst_8 : f32 to vector<16x128xf32>
    %20 = arith.select %18, %8, %19 : vector<16x128xi1>, vector<16x128xf32>
    %cst_9 = arith.constant dense<0xFF800000> : vector<16xf32>
    %21 = vector.multi_reduction <maximumf>, %20, %cst_9 [1] : vector<16x128xf32> to vector<16xf32>
    %22 = vector.shape_cast %21 : vector<16xf32> to vector<16x1xf32>
    %c0_10 = arith.constant 0 : index
    %c0_11 = arith.constant 0 : index
    %23 = vector.load %arg21[%c0_10, %c0_11] : memref<16x1xf32, #tpu.memory_space<vmem>>, vector<16x1xf32>
    %24 = arith.maximumf %23, %22 : vector<16x1xf32>
    %c0_12 = arith.constant 0 : index
    %c0_13 = arith.constant 0 : index
    %25 = vector.load %arg22[%c0_12, %c0_13] : memref<16x1xf32, #tpu.memory_space<vmem>>, vector<16x1xf32>
    %c0_14 = arith.constant 0 : index
    %c0_15 = arith.constant 0 : index
    %26 = vector.load %arg21[%c0_14, %c0_15] : memref<16x1xf32, #tpu.memory_space<vmem>>, vector<16x1xf32>
    %27 = arith.subf %26, %24 : vector<16x1xf32>
    %28 = math.exp %27 : vector<16x1xf32>
    %29 = arith.mulf %25, %28 : vector<16x1xf32>
    %30 = vector.broadcast %24 : vector<16x1xf32> to vector<16x128xf32>
    %31 = arith.subf %20, %30 : vector<16x128xf32>
    %32 = math.exp %31 : vector<16x128xf32>
    %cst_16 = arith.constant dense<0.000000e+00> : vector<16xf32>
    %33 = vector.multi_reduction <add>, %32, %cst_16 [1] : vector<16x128xf32> to vector<16xf32>
    %34 = vector.shape_cast %33 : vector<16xf32> to vector<16x1xf32>
    %35 = arith.addf %29, %34 : vector<16x1xf32>
    %c0_17 = arith.constant 0 : index
    %c0_18 = arith.constant 0 : index
    %36 = vector.load %arg22[%c0_17, %c0_18] : memref<16x1xf32, #tpu.memory_space<vmem>>, vector<16x1xf32>
    tpu.vector_store %arg22[%c0_17, %c0_18], %35 {strides = array<i32>} : memref<16x1xf32, #tpu.memory_space<vmem>>, vector<16x1xf32>,
    %c0_19 = arith.constant 0 : index
    %c0_20 = arith.constant 0 : index
    %37 = vector.load %arg21[%c0_19, %c0_20] : memref<16x1xf32, #tpu.memory_space<vmem>>, vector<16x1xf32>
    tpu.vector_store %arg21[%c0_19, %c0_20], %24 {strides = array<i32>} : memref<16x1xf32, #tpu.memory_space<vmem>>, vector<16x1xf32>,
    %c0_i32_21 = arith.constant 0 : i32
    %38 = arith.cmpi eq, %arg0, %c0_i32_21 : i32
    %39 = arith.extui %38 : i1 to i32
    %c0_i32_22 = arith.constant 0 : i32
    %40 = arith.cmpi ne, %39, %c0_i32_22 : i32
    scf.if %40 {
      %c0_23 = arith.constant 0 : index
      %c0_24 = arith.constant 0 : index
      %41 = vector.load %arg21[%c0_23, %c0_24] : memref<16x1xf32, #tpu.memory_space<vmem>>, vector<16x1xf32>
      %c0_25 = arith.constant 0 : index
      %c0_26 = arith.constant 0 : index
      %42 = vector.load %arg22[%c0_25, %c0_26] : memref<16x1xf32, #tpu.memory_space<vmem>>, vector<16x1xf32>
      %43 = math.log %42 : vector<16x1xf32>
      %44 = arith.addf %41, %43 : vector<16x1xf32>
      %c0_27 = arith.constant 0 : index
      %c0_28 = arith.constant 0 : index
      %45 = vector.load %arg17[%c0_27, %c0_28] : memref<16x128xf32, #tpu.memory_space<vmem>>, vector<16x128xf32>
      %46 = vector.broadcast %44 : vector<16x1xf32> to vector<16x128xf32>
      %47 = arith.subf %45, %46 : vector<16x128xf32>
      %c0_29 = arith.constant 0 : index
      %c0_30 = arith.constant 0 : index
      %48 = vector.load %arg18[%c0_29, %c0_30] : memref<16x128xf32, #tpu.memory_space<vmem>>, vector<16x128xf32>
      tpu.vector_store %arg18[%c0_29, %c0_30], %47 {strides = array<i32>} : memref<16x128xf32, #tpu.memory_space<vmem>>, vector<16x128xf32>,
    } else {
    }
    return
  }
  func.func @transform_1(%arg0: i32, %arg1: memref<16xi32, #tpu.memory_space<smem>>) -> (i32, i32, i32) {
    %c0_i32 = arith.constant 0 : i32
    %c0_i32_0 = arith.constant 0 : i32
    %c0_i32_1 = arith.constant 0 : i32
    %c0_i32_2 = arith.constant 0 : i32
    return %c0_i32, %c0_i32_0, %c0_i32_1 : i32, i32, i32
  }
  func.func @transform_2(%arg0: i32, %arg1: memref<16xi32, #tpu.memory_space<smem>>) -> (i32, i32) {
    %c0_i32 = arith.constant 0 : i32
    %c0_i32_0 = arith.constant 0 : i32
    %c0_i32_1 = arith.constant 0 : i32
    return %c0_i32, %c0_i32_0 : i32, i32
  }
  func.func @transform_3(%arg0: i32, %arg1: memref<16xi32, #tpu.memory_space<smem>>) -> (i32, i32) {
    %c0_i32 = arith.constant 0 : i32
    %c0_i32_0 = arith.constant 0 : i32
    %c0_i32_1 = arith.constant 0 : i32
    return %c0_i32, %c0_i32_0 : i32, i32
  }
  func.func @transform_4(%arg0: i32, %arg1: memref<16xi32, #tpu.memory_space<smem>>) -> (i32, i32) {
    %c0_i32 = arith.constant 0 : i32
    %c0_i32_0 = arith.constant 0 : i32
    %c0_i32_1 = arith.constant 0 : i32
    return %c0_i32, %c0_i32_0 : i32, i32
  }
  func.func @transform_5(%arg0: i32, %arg1: memref<16xi32, #tpu.memory_space<smem>>) -> (i32, i32) {
    %c0_i32 = arith.constant 0 : i32
    %c0_i32_0 = arith.constant 0 : i32
    %c0_i32_1 = arith.constant 0 : i32
    return %c0_i32, %c0_i32_0 : i32, i32
  }
  func.func @transform_6(%arg0: i32, %arg1: memref<16xi32, #tpu.memory_space<smem>>) -> (i32, i32) {
    %c0_i32 = arith.constant 0 : i32
    %c0_i32_0 = arith.constant 0 : i32
    %c0_i32_1 = arith.constant 0 : i32
    return %c0_i32, %c0_i32_0 : i32, i32
  }
  func.func @transform_7(%arg0: i32, %arg1: memref<16xi32, #tpu.memory_space<smem>>) -> (i32, i32) {
    %c0_i32 = arith.constant 0 : i32
    %c0_i32_0 = arith.constant 0 : i32
    %c0_i32_1 = arith.constant 0 : i32
    return %c0_i32, %c0_i32_0 : i32, i32
  }
  func.func @transform_8(%arg0: i32, %arg1: memref<16xi32, #tpu.memory_space<smem>>) -> (i32, i32) {
    %c0_i32 = arith.constant 0 : i32
    %c0_i32_0 = arith.constant 0 : i32
    %c0_i32_1 = arith.constant 0 : i32
    return %c0_i32, %c0_i32_0 : i32, i32
  }
  func.func @transform_9(%arg0: i32, %arg1: memref<16xi32, #tpu.memory_space<smem>>) -> (i32, i32) {
    %c0_i32 = arith.constant 0 : i32
    %c0_i32_0 = arith.constant 0 : i32
    %c0_i32_1 = arith.constant 0 : i32
    return %c0_i32, %c0_i32_0 : i32, i32
  }
  func.func @transform_10(%arg0: i32, %arg1: memref<16xi32, #tpu.memory_space<smem>>) -> (i32, i32) {
    %c0_i32 = arith.constant 0 : i32
    %c0_i32_0 = arith.constant 0 : i32
    %c0_i32_1 = arith.constant 0 : i32
    return %c0_i32, %c0_i32_0 : i32, i32
  }
  func.func @transform_11(%arg0: i32, %arg1: memref<16xi32, #tpu.memory_space<smem>>) -> (i32, i32) {
    %c0_i32 = arith.constant 0 : i32
    %c0_i32_0 = arith.constant 0 : i32
    %c0_i32_1 = arith.constant 0 : i32
    return %c0_i32, %c0_i32_0 : i32, i32
  }
  func.func @transform_12(%arg0: i32, %arg1: memref<16xi32, #tpu.memory_space<smem>>) -> (i32, i32) {
    %c0_i32 = arith.constant 0 : i32
    %c0_i32_0 = arith.constant 0 : i32
    return %c0_i32, %arg0 : i32, i32
  }
  func.func @transform_13(%arg0: i32, %arg1: memref<16xi32, #tpu.memory_space<smem>>) -> (i32, i32) {
    %c0_i32 = arith.constant 0 : i32
    %c0_i32_0 = arith.constant 0 : i32
    return %c0_i32, %arg0 : i32, i32
  }
  func.func @transform_14(%arg0: i32, %arg1: memref<16xi32, #tpu.memory_space<smem>>) -> (i32, i32, i32) {
    %c0_i32 = arith.constant 0 : i32
    %c0_i32_0 = arith.constant 0 : i32
    %c0_i32_1 = arith.constant 0 : i32
    %c0_i32_2 = arith.constant 0 : i32
    return %c0_i32, %c0_i32_0, %c0_i32_1 : i32, i32, i32
  }
  func.func @transform_15(%arg0: i32, %arg1: memref<16xi32, #tpu.memory_space<smem>>) -> (i32, i32) {
    %c0_i32 = arith.constant 0 : i32
    %c0_i32_0 = arith.constant 0 : i32
    %c0_i32_1 = arith.constant 0 : i32
    return %c0_i32, %c0_i32_0 : i32, i32
  }
  func.func @transform_16(%arg0: i32, %arg1: memref<16xi32, #tpu.memory_space<smem>>) -> (i32, i32) {
    %c0_i32 = arith.constant 0 : i32
    %c0_i32_0 = arith.constant 0 : i32
    %c0_i32_1 = arith.constant 0 : i32
    return %c0_i32, %c0_i32_0 : i32, i32
  }
}

</mosaic_0001>

<llo_original>
// kernel: baseline_gru_decoder_forward.1
$region0: #{baseline_gru_decoder_forward.1}
  #allocation0 [shape = 'u32[]', space=smem, size = 0x4, offset = 0x4, fixed_abs, tag = 'smem constant byte address 0x4 - core index']
  #allocation1 [shape = 'u32[144,128]{1,0:T(1,128)}', space=vmem, size = 0x12000, scoped, tag = 'internal scratch']
  #allocation2 [shape = 'f32[16,128]{1,0:T(8,128)}', space=vmem, size = 0x2000, scoped, tag = 'scratch operand']
  #allocation3 [shape = 'bf16[16,128]{1,0:T(16,128)(2,1)}', space=vmem, size = 0x1000, scoped, tag = 'scratch operand']
  #allocation4 [shape = 'f32[16,1]{1,0:T(8,128)}', space=vmem, size = 0x2000, scoped, tag = 'scratch operand']
  #allocation5 [shape = 'f32[16,1]{1,0:T(8,128)}', space=vmem, size = 0x2000, scoped, tag = 'scratch operand']
  #allocation6 [shape = 's32[16]{0}', space=sflag, size = 0x40, scoped, tag = 'scratch operand']
  #allocation7 [shape = 's32[1]{0}', space=sflag, size = 0x4, scoped, tag = 'scoped memory for baseline_gru_decoder_forward.1']
  #allocation8 [shape = 'u8[512]{0}', space=smem, size = 0x200, scoped, tag = 'prefetched SMEM operand 0']
  #allocation19 [shape = 's32[]', space=sflag, size = 0x4, offset = 0, fixed_abs, tag = 'sflag constant byte address 0x0 - dummy sync flag']
  #allocation20 [shape = 's32[]', space=sflag, size = 0x4, offset = 0, fixed_abs, tag = 'sflag constant byte address 0x0 - dummy sync flag']
  #allocation21 [shape = 'u32[]', space=smem, size = 0x4, offset = 0x44, fixed_abs, tag = 'smem constant byte address 0x44 - assertion arg 0']
  #allocation22 [shape = 'u32[]', space=smem, size = 0x4, offset = 0x48, fixed_abs, tag = 'smem constant byte address 0x48 - assertion arg 1']
  #allocation23 [shape = 's32[]', space=sflag, size = 0x4, offset = 0, fixed_abs, tag = 'sflag constant byte address 0x0 - dummy sync flag']
  #allocation24 [shape = 's32[]', space=sflag, size = 0x4, offset = 0, fixed_abs, tag = 'sflag constant byte address 0x0 - dummy sync flag']
  #allocation25 [shape = 's32[]', space=sflag, size = 0x4, offset = 0, fixed_abs, tag = 'sflag constant byte address 0x0 - dummy sync flag']
  #allocation26 [shape = 's32[]', space=sflag, size = 0x4, offset = 0, fixed_abs, tag = 'sflag constant byte address 0x0 - dummy sync flag']
  #allocation27 [shape = 's32[]', space=sflag, size = 0x4, offset = 0, fixed_abs, tag = 'sflag constant byte address 0x0 - dummy sync flag']
  #allocation28 [shape = 's32[]', space=sflag, size = 0x4, offset = 0, fixed_abs, tag = 'sflag constant byte address 0x0 - dummy sync flag']
  #allocation29 [shape = 's32[]', space=sflag, size = 0x4, offset = 0, fixed_abs, tag = 'sflag constant byte address 0x0 - dummy sync flag']
  #allocation30 [shape = 's32[]', space=sflag, size = 0x4, offset = 0, fixed_abs, tag = 'sflag constant byte address 0x0 - dummy sync flag']
  #allocation31 [shape = 's32[]', space=sflag, size = 0x4, offset = 0, fixed_abs, tag = 'sflag constant byte address 0x0 - dummy sync flag']
  #allocation32 [shape = 's32[]', space=sflag, size = 0x4, offset = 0, fixed_abs, tag = 'sflag constant byte address 0x0 - dummy sync flag']
  #allocation33 [shape = 's32[]', space=sflag, size = 0x4, offset = 0, fixed_abs, tag = 'sflag constant byte address 0x0 - dummy sync flag']
  #allocation34 [shape = 's32[]', space=sflag, size = 0x4, offset = 0, fixed_abs, tag = 'sflag constant byte address 0x0 - dummy sync flag']
  #allocation35 [shape = 's32[]', space=sflag, size = 0x4, offset = 0, fixed_abs, tag = 'sflag constant byte address 0x0 - dummy sync flag']
  #allocation36 [shape = 's32[]', space=sflag, size = 0x4, offset = 0, fixed_abs, tag = 'sflag constant byte address 0x0 - dummy sync flag']
  #allocation37 [shape = 's32[]', space=sflag, size = 0x4, offset = 0, fixed_abs, tag = 'sflag constant byte address 0x0 - dummy sync flag']
  #allocation38 [shape = 's32[]', space=sflag, size = 0x4, offset = 0, fixed_abs, tag = 'sflag constant byte address 0x0 - dummy sync flag']
  #allocation39 [shape = 's32[]', space=sflag, size = 0x4, offset = 0, fixed_abs, tag = 'sflag constant byte address 0x0 - dummy sync flag']
  #allocation40 [shape = 's32[]', space=sflag, size = 0x4, offset = 0, fixed_abs, tag = 'sflag constant byte address 0x0 - dummy sync flag']
  #allocation41 [shape = 's32[]', space=sflag, size = 0x4, offset = 0, fixed_abs, tag = 'sflag constant byte address 0x0 - dummy sync flag']
  #allocation42 [shape = 's32[]', space=sflag, size = 0x4, offset = 0, fixed_abs, tag = 'sflag constant byte address 0x0 - dummy sync flag']
  #allocation43 [shape = 's32[]', space=sflag, size = 0x4, offset = 0, fixed_abs, tag = 'sflag constant byte address 0x0 - dummy sync flag']
  #allocation44 [shape = 's32[]', space=sflag, size = 0x4, offset = 0, fixed_abs, tag = 'sflag constant byte address 0x0 - dummy sync flag']
  #allocation45 [shape = 's32[]', space=sflag, size = 0x4, offset = 0, fixed_abs, tag = 'sflag constant byte address 0x0 - dummy sync flag']
  #allocation46 [shape = 's32[]', space=sflag, size = 0x4, offset = 0, fixed_abs, tag = 'sflag constant byte address 0x0 - dummy sync flag']
  #allocation47 [shape = 's32[]', space=sflag, size = 0x4, offset = 0, fixed_abs, tag = 'sflag constant byte address 0x0 - dummy sync flag']
  #allocation48 [shape = 's32[]', space=sflag, size = 0x4, offset = 0, fixed_abs, tag = 'sflag constant byte address 0x0 - dummy sync flag']
  #allocation49 [shape = 's32[]', space=sflag, size = 0x4, offset = 0, fixed_abs, tag = 'sflag constant byte address 0x0 - dummy sync flag']
  #allocation50 [shape = 's32[]', space=sflag, size = 0x4, offset = 0, fixed_abs, tag = 'sflag constant byte address 0x0 - dummy sync flag']
  #allocation51 [shape = 's32[]', space=sflag, size = 0x4, offset = 0, fixed_abs, tag = 'sflag constant byte address 0x0 - dummy sync flag']
  #allocation52 [shape = 's32[]', space=sflag, size = 0x4, offset = 0, fixed_abs, tag = 'sflag constant byte address 0x0 - dummy sync flag']
  %s0 = inlined_call_operand.vmem [shape: s32[16], index: 0, kind: input, shape index: {}]
  %s1 = inlined_call_operand.hbm [shape: f32[128,128], index: 1, kind: input, shape index: {}]
  %s2 = inlined_call_operand.vmem [shape: f32[2,16,128], index: 2, kind: input, shape index: {}]
  %s3 = inlined_call_operand.hbm [shape: bf16[128,384], index: 3, kind: input, shape index: {}]
  %s4 = inlined_call_operand.hbm [shape: bf16[128,384], index: 4, kind: input, shape index: {}]
  %s5 = inlined_call_operand.vmem [shape: f32[1,384], index: 5, kind: input, shape index: {}]
  %s6 = inlined_call_operand.vmem [shape: f32[1,384], index: 6, kind: input, shape index: {}]
  %s7 = inlined_call_operand.hbm [shape: bf16[128,384], index: 7, kind: input, shape index: {}]
  %s8 = inlined_call_operand.hbm [shape: bf16[128,384], index: 8, kind: input, shape index: {}]
  %s9 = inlined_call_operand.vmem [shape: f32[1,384], index: 9, kind: input, shape index: {}]
  %s10 = inlined_call_operand.vmem [shape: f32[1,384], index: 10, kind: input, shape index: {}]
  %s11 = inlined_call_operand.hbm [shape: bf16[128,128], index: 11, kind: input, shape index: {}]
  %s12 = inlined_call_operand.vmem [shape: f32[1,128], index: 12, kind: input, shape index: {}]
  %s13 = inlined_call_operand.hbm [shape: bf16[128,128], index: 13, kind: input, shape index: {}]
  %s14 = inlined_call_operand.vmem [shape: f32[1,128], index: 14, kind: input, shape index: {}]
  %s15 = inlined_call_operand.vmem [shape: f32[2,16,128], index: 15, kind: output, shape index: {0}]
  %s16 = inlined_call_operand.vmem [shape: f32[16,128], index: 16, kind: output, shape index: {1}]
  %s17 = inlined_call_operand.vmem [shape: f32[16,128], index: 17, kind: output, shape index: {2}]
  %18 = xla_tuple %s15, %s16, %s17
  %s19 = sld [smem:[#allocation0]]
  $region174: #{baseline_gru_decoder_forward.1} parent=0
    _
  %s21 = ssub.s32 1, %s19
  %s22 = scalar_select 0, %s21, %s19
  %s23 = sshll.u32 %s0, 4
  %s24 = int_to_ptr.vmem [resolvable:$true] %s23
  %26 = dma.vmem_to_smem %s24, 16, [#allocation8], [#allocation7]
  %27 = dma.done [#allocation7], 16
  %28 = sfence
  $region1: #{baseline_gru_decoder_forward.1} parent=0
    #allocation9 [shape = 'u8[98304]{0}', space=vmem, size = 0x18000, scoped, tag = 'input window, operand 3, single buffered']
    #allocation10 [shape = 's32[1]{0}', space=sflag, size = 0x4, scoped, tag = 'scoped memory for baseline_gru_decoder_forward.1']
    #allocation11 [shape = 'u8[98304]{0}', space=vmem, size = 0x18000, scoped, tag = 'input window, operand 4, single buffered']
    #allocation12 [shape = 's32[1]{0}', space=sflag, size = 0x4, scoped, tag = 'scoped memory for baseline_gru_decoder_forward.1']
    #allocation13 [shape = 'u8[98304]{0}', space=vmem, size = 0x18000, scoped, tag = 'input window, operand 7, single buffered']
    #allocation14 [shape = 'u8[98304]{0}', space=vmem, size = 0x18000, scoped, tag = 'input window, operand 8, single buffered']
    #allocation15 [shape = 's32[1]{0}', space=sflag, size = 0x4, scoped, tag = 'scoped memory for baseline_gru_decoder_forward.1']
    #allocation16 [shape = 'u8[32768]{0}', space=vmem, size = 0x8000, scoped, tag = 'input window, operand 11, single buffered']
    #allocation17 [shape = 'u8[32768]{0}', space=vmem, size = 0x8000, scoped, tag = 'input window, operand 13, single buffered']
    #allocation18 [shape = 's32[1]{0}', space=sflag, size = 0x4, scoped, tag = 'scoped memory for baseline_gru_decoder_forward.1']
    %29 = vsyncpa [#allocation10], 0
    %30 = vsyncpa [#allocation12], 0
    %31 = vsyncpa [#allocation15], 0
    %32 = vsyncpa [#allocation18], 0
    // Predicated region
    $region2: #{baseline_gru_decoder_forward.1} parent=1 // pred_check
      _
    $region3: #{baseline_gru_decoder_forward.1} parent=1 // pred_check_branch
      %34 = sbr.rel (0) target = $region5
    $region4: #{baseline_gru_decoder_forward.1} parent=1 // pred_region
      _
    $region5: #{baseline_gru_decoder_forward.1} parent=1 // pred_fallthru
      _
    // Predicated region
    $region6: #{baseline_gru_decoder_forward.1} parent=1 // pred_check
      _
    $region7: #{baseline_gru_decoder_forward.1} parent=1 // pred_check_branch
      %36 = sbr.rel (0) target = $region9
    $region8: #{baseline_gru_decoder_forward.1} parent=1 // pred_region
      %s38 = ssub.s32 3072, 3072
      %39 = vsyncadd [#allocation10], %s38
      %s40 = sshll.u32 [#allocation9], 4
      %s41 = int_to_ptr.vmem [resolvable:$true] %s40
      %46 = dma.hbm_to_vmem [thread:$0]  %s3, 3072, %s41, [#allocation10], 192, 192, 12
    $region9: #{baseline_gru_decoder_forward.1} parent=1 // pred_fallthru
      _
    // Predicated region
    $region10: #{baseline_gru_decoder_forward.1} parent=1 // pred_check
      _
    $region11: #{baseline_gru_decoder_forward.1} parent=1 // pred_check_branch
      %48 = sbr.rel (0) target = $region13
    $region12: #{baseline_gru_decoder_forward.1} parent=1 // pred_region
      %s50 = ssub.s32 3072, 3072
      %51 = vsyncadd [#allocation12], %s50
      %s52 = sshll.u32 [#allocation11], 4
      %s53 = int_to_ptr.vmem [resolvable:$true] %s52
      %58 = dma.hbm_to_vmem [thread:$0]  %s4, 3072, %s53, [#allocation12], 192, 192, 12
    $region13: #{baseline_gru_decoder_forward.1} parent=1 // pred_fallthru
      _
    // Predicated region
    $region14: #{baseline_gru_decoder_forward.1} parent=1 // pred_check
      _
    $region15: #{baseline_gru_decoder_forward.1} parent=1 // pred_check_branch
      %60 = sbr.rel (0) target = $region17
    $region16: #{baseline_gru_decoder_forward.1} parent=1 // pred_region
      _
    $region17: #{baseline_gru_decoder_forward.1} parent=1 // pred_fallthru
      _
    // Predicated region
    $region18: #{baseline_gru_decoder_forward.1} parent=1 // pred_check
      _
    $region19: #{baseline_gru_decoder_forward.1} parent=1 // pred_check_branch
      %62 = sbr.rel (0) target = $region21
    $region20: #{baseline_gru_decoder_forward.1} parent=1 // pred_region
      _
    $region21: #{baseline_gru_decoder_forward.1} parent=1 // pred_fallthru
      _
    // Predicated region
    $region22: #{baseline_gru_decoder_forward.1} parent=1 // pred_check
      _
    $region23: #{baseline_gru_decoder_forward.1} parent=1 // pred_check_branch
      %64 = sbr.rel (0) target = $region25
    $region24: #{baseline_gru_decoder_forward.1} parent=1 // pred_region
      %s66 = ssub.s32 3072, 3072
      %67 = vsyncadd [#allocation12], %s66
      %s68 = sshll.u32 [#allocation13], 4
      %s69 = int_to_ptr.vmem [resolvable:$true] %s68
      %74 = dma.hbm_to_vmem [thread:$0]  %s7, 3072, %s69, [#allocation12], 192, 192, 12
    $region25: #{baseline_gru_decoder_forward.1} parent=1 // pred_fallthru
      _
    // Predicated region
    $region26: #{baseline_gru_decoder_forward.1} parent=1 // pred_check
      _
    $region27: #{baseline_gru_decoder_forward.1} parent=1 // pred_check_branch
      %76 = sbr.rel (0) target = $region29
    $region28: #{baseline_gru_decoder_forward.1} parent=1 // pred_region
      %s78 = ssub.s32 3072, 3072
      %79 = vsyncadd [#allocation15], %s78
      %s80 = sshll.u32 [#allocation14], 4
      %s81 = int_to_ptr.vmem [resolvable:$true] %s80
      %86 = dma.hbm_to_vmem [thread:$0]  %s8, 3072, %s81, [#allocation15], 192, 192, 12
    $region29: #{baseline_gru_decoder_forward.1} parent=1 // pred_fallthru
      _
    // Predicated region
    $region30: #{baseline_gru_decoder_forward.1} parent=1 // pred_check
      _
    $region31: #{baseline_gru_decoder_forward.1} parent=1 // pred_check_branch
      %88 = sbr.rel (0) target = $region33
    $region32: #{baseline_gru_decoder_forward.1} parent=1 // pred_region
      _
    $region33: #{baseline_gru_decoder_forward.1} parent=1 // pred_fallthru
      _
    // Predicated region
    $region34: #{baseline_gru_decoder_forward.1} parent=1 // pred_check
      _
    $region35: #{baseline_gru_decoder_forward.1} parent=1 // pred_check_branch
      %90 = sbr.rel (0) target = $region37
    $region36: #{baseline_gru_decoder_forward.1} parent=1 // pred_region
      _
    $region37: #{baseline_gru_decoder_forward.1} parent=1 // pred_fallthru
      _
    // Predicated region
    $region38: #{baseline_gru_decoder_forward.1} parent=1 // pred_check
      _
    $region39: #{baseline_gru_decoder_forward.1} parent=1 // pred_check_branch
      %92 = sbr.rel (0) target = $region41
    $region40: #{baseline_gru_decoder_forward.1} parent=1 // pred_region
      %s94 = ssub.s32 1024, 1024
      %95 = vsyncadd [#allocation15], %s94
      %s96 = sshll.u32 [#allocation16], 4
      %s97 = int_to_ptr.vmem [resolvable:$true] %s96
      %102 = dma.hbm_to_vmem [thread:$0]  %s11, 1024, %s97, [#allocation15], 64, 64, 4
    $region41: #{baseline_gru_decoder_forward.1} parent=1 // pred_fallthru
      _
    // Predicated region
    $region42: #{baseline_gru_decoder_forward.1} parent=1 // pred_check
      _
    $region43: #{baseline_gru_decoder_forward.1} parent=1 // pred_check_branch
      %104 = sbr.rel (0) target = $region45
    $region44: #{baseline_gru_decoder_forward.1} parent=1 // pred_region
      _
    $region45: #{baseline_gru_decoder_forward.1} parent=1 // pred_fallthru
      _
    // Predicated region
    $region46: #{baseline_gru_decoder_forward.1} parent=1 // pred_check
      _
    $region47: #{baseline_gru_decoder_forward.1} parent=1 // pred_check_branch
      %106 = sbr.rel (0) target = $region49
    $region48: #{baseline_gru_decoder_forward.1} parent=1 // pred_region
      %s108 = ssub.s32 1024, 1024
      %109 = vsyncadd [#allocation18], %s108
      %s110 = sshll.u32 [#allocation17], 4
      %s111 = int_to_ptr.vmem [resolvable:$true] %s110
      %116 = dma.hbm_to_vmem [thread:$0]  %s13, 1024, %s111, [#allocation18], 64, 64, 4
    $region49: #{baseline_gru_decoder_forward.1} parent=1 // pred_fallthru
      _
    // Predicated region
    $region50: #{baseline_gru_decoder_forward.1} parent=1 // pred_check
      _
    $region51: #{baseline_gru_decoder_forward.1} parent=1 // pred_check_branch
      %118 = sbr.rel (0) target = $region53
    $region52: #{baseline_gru_decoder_forward.1} parent=1 // pred_region
      _
    $region53: #{baseline_gru_decoder_forward.1} parent=1 // pred_fallthru
      _
    // Predicated region
    $region54: #{baseline_gru_decoder_forward.1} parent=1 // pred_check
      _
    $region55: #{baseline_gru_decoder_forward.1} parent=1 // pred_check_branch
      %120 = sbr.rel (0) target = $region57
    $region56: #{baseline_gru_decoder_forward.1} parent=1 // pred_region
      %121 = dma.done [#allocation10], 3072
    $region57: #{baseline_gru_decoder_forward.1} parent=1 // pred_fallthru
      _
    // Predicated region
    $region58: #{baseline_gru_decoder_forward.1} parent=1 // pred_check
      _
    $region59: #{baseline_gru_decoder_forward.1} parent=1 // pred_check_branch
      %123 = sbr.rel (0) target = $region61
    $region60: #{baseline_gru_decoder_forward.1} parent=1 // pred_region
      %124 = dma.done [#allocation12], 3072
    $region61: #{baseline_gru_decoder_forward.1} parent=1 // pred_fallthru
      _
    // Predicated region
    $region62: #{baseline_gru_decoder_forward.1} parent=1 // pred_check
      _
    $region63: #{baseline_gru_decoder_forward.1} parent=1 // pred_check_branch
      %126 = sbr.rel (0) target = $region65
    $region64: #{baseline_gru_decoder_forward.1} parent=1 // pred_region
      %127 = dma.done [#allocation12], 3072
    $region65: #{baseline_gru_decoder_forward.1} parent=1 // pred_fallthru
      _
    // Predicated region
    $region66: #{baseline_gru_decoder_forward.1} parent=1 // pred_check
      _
    $region67: #{baseline_gru_decoder_forward.1} parent=1 // pred_check_branch
      %129 = sbr.rel (0) target = $region69
    $region68: #{baseline_gru_decoder_forward.1} parent=1 // pred_region
      %130 = dma.done [#allocation15], 3072
    $region69: #{baseline_gru_decoder_forward.1} parent=1 // pred_fallthru
      _
    // Predicated region
    $region70: #{baseline_gru_decoder_forward.1} parent=1 // pred_check
      _
    $region71: #{baseline_gru_decoder_forward.1} parent=1 // pred_check_branch
      %132 = sbr.rel (0) target = $region73
    $region72: #{baseline_gru_decoder_forward.1} parent=1 // pred_region
      %133 = dma.done [#allocation15], 1024
    $region73: #{baseline_gru_decoder_forward.1} parent=1 // pred_fallthru
      _
    // Predicated region
    $region74: #{baseline_gru_decoder_forward.1} parent=1 // pred_check
      _
    $region75: #{baseline_gru_decoder_forward.1} parent=1 // pred_check_branch
      %135 = sbr.rel (0) target = $region77
    $region76: #{baseline_gru_decoder_forward.1} parent=1 // pred_region
      %136 = dma.done [#allocation18], 1024
    $region77: #{baseline_gru_decoder_forward.1} parent=1 // pred_fallthru
      _
    %p138 = scmp.eq.s32.totalorder 0, 0
    // Predicated region
    $region78: #{baseline_gru_decoder_forward.1} parent=1 // pred_check
      %p139 = pneg %p138
    $region79: #{baseline_gru_decoder_forward.1} parent=1 // pred_check_branch
      %141 = sbr.rel (%p139) target = $region81
    $region80: #{baseline_gru_decoder_forward.1} parent=1 // pred_region
      %s142 = sld [smem:[#allocation8]]
      %s143 = smul.addr %s142, 16
      %s144 = scalar_lea.hbm %s1, %s143
      // Predicated region
      $region82: #{baseline_gru_decoder_forward.1} parent=80 // pred_check
        _
      $region83: #{baseline_gru_decoder_forward.1} parent=80 // pred_check_branch
        %146 = sbr.rel target = $region85
      $region84: #{baseline_gru_decoder_forward.1} parent=80 // pred_region
        %147 = sst [smem:[#allocation21]] [#allocation20]
        %148 = sst [smem:[#allocation22]] [#allocation19]
      $region85: #{baseline_gru_decoder_forward.1} parent=80 // pred_fallthru
        _
      %150 = shalt.err (0)
      %s152 = sshll.u32 [#allocation2], 4
      %s153 = int_to_ptr.vmem [resolvable:$true] %s152
      %155 = dma.hbm_to_vmem [thread:$0]  %s144, 16, %s153, [#allocation6]
      %s156 = sld [smem:[#allocation8 + $0x1]]
      %s157 = smul.addr %s156, 16
      %s158 = scalar_lea.hbm %s1, %s157
      %s159 = scalar_lea.vmem [#allocation2], 1
      %s160 = scalar_lea.sflag [#allocation6], 1
      // Predicated region
      $region86: #{baseline_gru_decoder_forward.1} parent=80 // pred_check
        _
      $region87: #{baseline_gru_decoder_forward.1} parent=80 // pred_check_branch
        %162 = sbr.rel target = $region89
      $region88: #{baseline_gru_decoder_forward.1} parent=80 // pred_region
        %163 = sst [smem:[#allocation21]] [#allocation24]
        %164 = sst [smem:[#allocation22]] [#allocation23]
      $region89: #{baseline_gru_decoder_forward.1} parent=80 // pred_fallthru
        _
      %166 = shalt.err (0)
      %s168 = sshll.u32 %s159, 4
      %s169 = int_to_ptr.vmem [resolvable:$true] %s168
      %171 = dma.hbm_to_vmem [thread:$0]  %s158, 16, %s169, %s160
      %s172 = sld [smem:[#allocation8 + $0x2]]
      %s173 = smul.addr %s172, 16
      %s174 = scalar_lea.hbm %s1, %s173
      %s175 = scalar_lea.vmem [#allocation2], 2
      %s176 = scalar_lea.sflag [#allocation6], 2
      // Predicated region
      $region90: #{baseline_gru_decoder_forward.1} parent=80 // pred_check
        _
      $region91: #{baseline_gru_decoder_forward.1} parent=80 // pred_check_branch
        %178 = sbr.rel target = $region93
      $region92: #{baseline_gru_decoder_forward.1} parent=80 // pred_region
        %179 = sst [smem:[#allocation21]] [#allocation26]
        %180 = sst [smem:[#allocation22]] [#allocation25]
      $region93: #{baseline_gru_decoder_forward.1} parent=80 // pred_fallthru
        _
      %182 = shalt.err (0)
      %s184 = sshll.u32 %s175, 4
      %s185 = int_to_ptr.vmem [resolvable:$true] %s184
      %187 = dma.hbm_to_vmem [thread:$0]  %s174, 16, %s185, %s176
      %s188 = sld [smem:[#allocation8 + $0x3]]
      %s189 = smul.addr %s188, 16
      %s190 = scalar_lea.hbm %s1, %s189
      %s191 = scalar_lea.vmem [#allocation2], 3
      %s192 = scalar_lea.sflag [#allocation6], 3
      // Predicated region
      $region94: #{baseline_gru_decoder_forward.1} parent=80 // pred_check
        _
      $region95: #{baseline_gru_decoder_forward.1} parent=80 // pred_check_branch
        %194 = sbr.rel target = $region97
      $region96: #{baseline_gru_decoder_forward.1} parent=80 // pred_region
        %195 = sst [smem:[#allocation21]] [#allocation28]
        %196 = sst [smem:[#allocation22]] [#allocation27]
      $region97: #{baseline_gru_decoder_forward.1} parent=80 // pred_fallthru
        _
      %198 = shalt.err (0)
      %s200 = sshll.u32 %s191, 4
      %s201 = int_to_ptr.vmem [resolvable:$true] %s200
      %203 = dma.hbm_to_vmem [thread:$0]  %s190, 16, %s201, %s192
      %s204 = sld [smem:[#allocation8 + $0x4]]
      %s205 = smul.addr %s204, 16
      %s206 = scalar_lea.hbm %s1, %s205
      %s207 = scalar_lea.vmem [#allocation2], 4
      %s208 = scalar_lea.sflag [#allocation6], 4
      // Predicated region
      $region98: #{baseline_gru_decoder_forward.1} parent=80 // pred_check
        _
      $region99: #{baseline_gru_decoder_forward.1} parent=80 // pred_check_branch
        %210 = sbr.rel target = $region101
      $region100: #{baseline_gru_decoder_forward.1} parent=80 // pred_region
        %211 = sst [smem:[#allocation21]] [#allocation30]
        %212 = sst [smem:[#allocation22]] [#allocation29]
      $region101: #{baseline_gru_decoder_forward.1} parent=80 // pred_fallthru
        _
      %214 = shalt.err (0)
      %s216 = sshll.u32 %s207, 4
      %s217 = int_to_ptr.vmem [resolvable:$true] %s216
      %219 = dma.hbm_to_vmem [thread:$0]  %s206, 16, %s217, %s208
      %s220 = sld [smem:[#allocation8 + $0x5]]
      %s221 = smul.addr %s220, 16
      %s222 = scalar_lea.hbm %s1, %s221
      %s223 = scalar_lea.vmem [#allocation2], 5
      %s224 = scalar_lea.sflag [#allocation6], 5
      // Predicated region
      $region102: #{baseline_gru_decoder_forward.1} parent=80 // pred_check
        _
      $region103: #{baseline_gru_decoder_forward.1} parent=80 // pred_check_branch
        %226 = sbr.rel target = $region105
      $region104: #{baseline_gru_decoder_forward.1} parent=80 // pred_region
        %227 = sst [smem:[#allocation21]] [#allocation32]
        %228 = sst [smem:[#allocation22]] [#allocation31]
      $region105: #{baseline_gru_decoder_forward.1} parent=80 // pred_fallthru
        _
      %230 = shalt.err (0)
      %s232 = sshll.u32 %s223, 4
      %s233 = int_to_ptr.vmem [resolvable:$true] %s232
      %235 = dma.hbm_to_vmem [thread:$0]  %s222, 16, %s233, %s224
      %s236 = sld [smem:[#allocation8 + $0x6]]
      %s237 = smul.addr %s236, 16
      %s238 = scalar_lea.hbm %s1, %s237
      %s239 = scalar_lea.vmem [#allocation2], 6
      %s240 = scalar_lea.sflag [#allocation6], 6
      // Predicated region
      $region106: #{baseline_gru_decoder_forward.1} parent=80 // pred_check
        _
      $region107: #{baseline_gru_decoder_forward.1} parent=80 // pred_check_branch
        %242 = sbr.rel target = $region109
      $region108: #{baseline_gru_decoder_forward.1} parent=80 // pred_region
        %243 = sst [smem:[#allocation21]] [#allocation34]
        %244 = sst [smem:[#allocation22]] [#allocation33]
      $region109: #{baseline_gru_decoder_forward.1} parent=80 // pred_fallthru
        _
      %246 = shalt.err (0)
      %s248 = sshll.u32 %s239, 4
      %s249 = int_to_ptr.vmem [resolvable:$true] %s248
      %251 = dma.hbm_to_vmem [thread:$0]  %s238, 16, %s249, %s240
      %s252 = sld [smem:[#allocation8 + $0x7]]
      %s253 = smul.addr %s252, 16
      %s254 = scalar_lea.hbm %s1, %s253
      %s255 = scalar_lea.vmem [#allocation2], 7
      %s256 = scalar_lea.sflag [#allocation6], 7
      // Predicated region
      $region110: #{baseline_gru_decoder_forward.1} parent=80 // pred_check
        _
      $region111: #{baseline_gru_decoder_forward.1} parent=80 // pred_check_branch
        %258 = sbr.rel target = $region113
      $region112: #{baseline_gru_decoder_forward.1} parent=80 // pred_region
        %259 = sst [smem:[#allocation21]] [#allocation36]
        %260 = sst [smem:[#allocation22]] [#allocation35]
      $region113: #{baseline_gru_decoder_forward.1} parent=80 // pred_fallthru
        _
      %262 = shalt.err (0)
      %s264 = sshll.u32 %s255, 4
      %s265 = int_to_ptr.vmem [resolvable:$true] %s264
      %267 = dma.hbm_to_vmem [thread:$0]  %s254, 16, %s265, %s256
      %s268 = sld [smem:[#allocation8 + $0x8]]
      %s269 = smul.addr %s268, 16
      %s270 = scalar_lea.hbm %s1, %s269
      %s271 = scalar_lea.vmem [#allocation2], 8
      %s272 = scalar_lea.sflag [#allocation6], 8
      // Predicated region
      $region114: #{baseline_gru_decoder_forward.1} parent=80 // pred_check
        _
      $region115: #{baseline_gru_decoder_forward.1} parent=80 // pred_check_branch
        %274 = sbr.rel target = $region117
      $region116: #{baseline_gru_decoder_forward.1} parent=80 // pred_region
        %275 = sst [smem:[#allocation21]] [#allocation38]
        %276 = sst [smem:[#allocation22]] [#allocation37]
      $region117: #{baseline_gru_decoder_forward.1} parent=80 // pred_fallthru
        _
      %278 = shalt.err (0)
      %s280 = sshll.u32 %s271, 4
      %s281 = int_to_ptr.vmem [resolvable:$true] %s280
      %283 = dma.hbm_to_vmem [thread:$0]  %s270, 16, %s281, %s272
      %s284 = sld [smem:[#allocation8 + $0x9]]
      %s285 = smul.addr %s284, 16
      %s286 = scalar_lea.hbm %s1, %s285
      %s287 = scalar_lea.vmem [#allocation2], 9
      %s288 = scalar_lea.sflag [#allocation6], 9
      // Predicated region
      $region118: #{baseline_gru_decoder_forward.1} parent=80 // pred_check
        _
      $region119: #{baseline_gru_decoder_forward.1} parent=80 // pred_check_branch
        %290 = sbr.rel target = $region121
      $region120: #{baseline_gru_decoder_forward.1} parent=80 // pred_region
        %291 = sst [smem:[#allocation21]] [#allocation40]
        %292 = sst [smem:[#allocation22]] [#allocation39]
      $region121: #{baseline_gru_decoder_forward.1} parent=80 // pred_fallthru
        _
      %294 = shalt.err (0)
      %s296 = sshll.u32 %s287, 4
      %s297 = int_to_ptr.vmem [resolvable:$true] %s296
      %299 = dma.hbm_to_vmem [thread:$0]  %s286, 16, %s297, %s288
      %s300 = sld [smem:[#allocation8 + $0xa]]
      %s301 = smul.addr %s300, 16
      %s302 = scalar_lea.hbm %s1, %s301
      %s303 = scalar_lea.vmem [#allocation2], 10
      %s304 = scalar_lea.sflag [#allocation6], 10
      // Predicated region
      $region122: #{baseline_gru_decoder_forward.1} parent=80 // pred_check
        _
      $region123: #{baseline_gru_decoder_forward.1} parent=80 // pred_check_branch
        %306 = sbr.rel target = $region125
      $region124: #{baseline_gru_decoder_forward.1} parent=80 // pred_region
        %307 = sst [smem:[#allocation21]] [#allocation42]
        %308 = sst [smem:[#allocation22]] [#allocation41]
      $region125: #{baseline_gru_decoder_forward.1} parent=80 // pred_fallthru
        _
      %310 = shalt.err (0)
      %s312 = sshll.u32 %s303, 4
      %s313 = int_to_ptr.vmem [resolvable:$true] %s312
      %315 = dma.hbm_to_vmem [thread:$0]  %s302, 16, %s313, %s304
      %s316 = sld [smem:[#allocation8 + $0xb]]
      %s317 = smul.addr %s316, 16
      %s318 = scalar_lea.hbm %s1, %s317
      %s319 = scalar_lea.vmem [#allocation2], 11
      %s320 = scalar_lea.sflag [#allocation6], 11
      // Predicated region
      $region126: #{baseline_gru_decoder_forward.1} parent=80 // pred_check
        _
      $region127: #{baseline_gru_decoder_forward.1} parent=80 // pred_check_branch
        %322 = sbr.rel target = $region129
      $region128: #{baseline_gru_decoder_forward.1} parent=80 // pred_region
        %323 = sst [smem:[#allocation21]] [#allocation44]
        %324 = sst [smem:[#allocation22]] [#allocation43]
      $region129: #{baseline_gru_decoder_forward.1} parent=80 // pred_fallthru
        _
      %326 = shalt.err (0)
      %s328 = sshll.u32 %s319, 4
      %s329 = int_to_ptr.vmem [resolvable:$true] %s328
      %331 = dma.hbm_to_vmem [thread:$0]  %s318, 16, %s329, %s320
      %s332 = sld [smem:[#allocation8 + $0xc]]
      %s333 = smul.addr %s332, 16
      %s334 = scalar_lea.hbm %s1, %s333
      %s335 = scalar_lea.vmem [#allocation2], 12
      %s336 = scalar_lea.sflag [#allocation6], 12
      // Predicated region
      $region130: #{baseline_gru_decoder_forward.1} parent=80 // pred_check
        _
      $region131: #{baseline_gru_decoder_forward.1} parent=80 // pred_check_branch
        %338 = sbr.rel target = $region133
      $region132: #{baseline_gru_decoder_forward.1} parent=80 // pred_region
        %339 = sst [smem:[#allocation21]] [#allocation46]
        %340 = sst [smem:[#allocation22]] [#allocation45]
      $region133: #{baseline_gru_decoder_forward.1} parent=80 // pred_fallthru
        _
      %342 = shalt.err (0)
      %s344 = sshll.u32 %s335, 4
      %s345 = int_to_ptr.vmem [resolvable:$true] %s344
      %347 = dma.hbm_to_vmem [thread:$0]  %s334, 16, %s345, %s336
      %s348 = sld [smem:[#allocation8 + $0xd]]
      %s349 = smul.addr %s348, 16
      %s350 = scalar_lea.hbm %s1, %s349
      %s351 = scalar_lea.vmem [#allocation2], 13
      %s352 = scalar_lea.sflag [#allocation6], 13
      // Predicated region
      $region134: #{baseline_gru_decoder_forward.1} parent=80 // pred_check
        _
      $region135: #{baseline_gru_decoder_forward.1} parent=80 // pred_check_branch
        %354 = sbr.rel target = $region137
      $region136: #{baseline_gru_decoder_forward.1} parent=80 // pred_region
        %355 = sst [smem:[#allocation21]] [#allocation48]
        %356 = sst [smem:[#allocation22]] [#allocation47]
      $region137: #{baseline_gru_decoder_forward.1} parent=80 // pred_fallthru
        _
      %358 = shalt.err (0)
      %s360 = sshll.u32 %s351, 4
      %s361 = int_to_ptr.vmem [resolvable:$true] %s360
      %363 = dma.hbm_to_vmem [thread:$0]  %s350, 16, %s361, %s352
      %s364 = sld [smem:[#allocation8 + $0xe]]
      %s365 = smul.addr %s364, 16
      %s366 = scalar_lea.hbm %s1, %s365
      %s367 = scalar_lea.vmem [#allocation2], 14
      %s368 = scalar_lea.sflag [#allocation6], 14
      // Predicated region
      $region138: #{baseline_gru_decoder_forward.1} parent=80 // pred_check
        _
      $region139: #{baseline_gru_decoder_forward.1} parent=80 // pred_check_branch
        %370 = sbr.rel target = $region141
      $region140: #{baseline_gru_decoder_forward.1} parent=80 // pred_region
        %371 = sst [smem:[#allocation21]] [#allocation50]
        %372 = sst [smem:[#allocation22]] [#allocation49]
      $region141: #{baseline_gru_decoder_forward.1} parent=80 // pred_fallthru
        _
      %374 = shalt.err (0)
      %s376 = sshll.u32 %s367, 4
      %s377 = int_to_ptr.vmem [resolvable:$true] %s376
      %379 = dma.hbm_to_vmem [thread:$0]  %s366, 16, %s377, %s368
      %s380 = sld [smem:[#allocation8 + $0xf]]
      %s381 = smul.addr %s380, 16
      %s382 = scalar_lea.hbm %s1, %s381
      %s383 = scalar_lea.vmem [#allocation2], 15
      %s384 = scalar_lea.sflag [#allocation6], 15
      // Predicated region
      $region142: #{baseline_gru_decoder_forward.1} parent=80 // pred_check
        _
      $region143: #{baseline_gru_decoder_forward.1} parent=80 // pred_check_branch
        %386 = sbr.rel target = $region145
      $region144: #{baseline_gru_decoder_forward.1} parent=80 // pred_region
        %387 = sst [smem:[#allocation21]] [#allocation52]
        %388 = sst [smem:[#allocation22]] [#allocation51]
      $region145: #{baseline_gru_decoder_forward.1} parent=80 // pred_fallthru
        _
      %390 = shalt.err (0)
      %s392 = sshll.u32 %s383, 4
      %s393 = int_to_ptr.vmem [resolvable:$true] %s392
      %395 = dma.hbm_to_vmem [thread:$0]  %s382, 16, %s393, %s384
      %s396 = smul.u32 1, 1
      %s397 = sshll.u32 %s396, 4
      %398 = dma.done [#allocation6], %s397
      %s399 = sshll.u32 %s396, 4
      %400 = dma.done %s160, %s399
      %s401 = sshll.u32 %s396, 4
      %402 = dma.done %s176, %s401
      %s403 = sshll.u32 %s396, 4
      %404 = dma.done %s192, %s403
      %s405 = sshll.u32 %s396, 4
      %406 = dma.done %s208, %s405
      %s407 = sshll.u32 %s396, 4
      %408 = dma.done %s224, %s407
      %s409 = sshll.u32 %s396, 4
      %410 = dma.done %s240, %s409
      %s411 = sshll.u32 %s396, 4
      %412 = dma.done %s256, %s411
      %s413 = sshll.u32 %s396, 4
      %414 = dma.done %s272, %s413
      %s415 = sshll.u32 %s396, 4
      %416 = dma.done %s288, %s415
      %s417 = sshll.u32 %s396, 4
      %418 = dma.done %s304, %s417
      %s419 = sshll.u32 %s396, 4
      %420 = dma.done %s320, %s419
      %s421 = sshll.u32 %s396, 4
      %422 = dma.done %s336, %s421
      %s423 = sshll.u32 %s396, 4
      %424 = dma.done %s352, %s423
      %s425 = sshll.u32 %s396, 4
      %426 = dma.done %s368, %s425
      %s427 = sshll.u32 %s396, 4
      %428 = dma.done %s384, %s427
      %v429 = vld [vmem:[#allocation2] sm:$0xff]
      %v430 = vld [vmem:[#allocation2 + $0x8] sm:$0xff]
      %v431 = vld [vmem:[%s2] sm:$0xff]
      %v432 = vld [vmem:[%s2 + $0x8] sm:$0xff]
      %v433 = vpack.c.bf16 %v430, %v429
      %v434 = vld [vmem:[#allocation9] sm:$0xff]
      %v435 = vld [vmem:[#allocation9 + $0x8] sm:$0xf]
      %v436 = vld [vmem:[#allocation9 + $0xc] sm:$0xff]
      %v437 = vld [vmem:[#allocation9 + $0x14] sm:$0xf]
      %v438 = vld [vmem:[#allocation9 + $0x18] sm:$0xff]
      %v439 = vld [vmem:[#allocation9 + $0x20] sm:$0xf]
      %v440 = vld [vmem:[#allocation9 + $0x24] sm:$0xff]
      %v441 = vld [vmem:[#allocation9 + $0x2c] sm:$0xf]
      %v442 = vld [vmem:[#allocation9 + $0x30] sm:$0xff]
      %v443 = vld [vmem:[#allocation9 + $0x38] sm:$0xf]
      %v444 = vld [vmem:[#allocation9 + $0x3c] sm:$0xff]
      %v445 = vld [vmem:[#allocation9 + $0x44] sm:$0xf]
      %v446 = vld [vmem:[#allocation9 + $0x48] sm:$0xff]
      %v447 = vld [vmem:[#allocation9 + $0x50] sm:$0xf]
      %v448 = vld [vmem:[#allocation9 + $0x54] sm:$0xff]
      %v449 = vld [vmem:[#allocation9 + $0x5c] sm:$0xf]
      %v450 = vld [vmem:[#allocation9 + $0x60] sm:$0xff]
      %v451 = vld [vmem:[#allocation9 + $0x68] sm:$0xf]
      %v452 = vld [vmem:[#allocation9 + $0x6c] sm:$0xff]
      %v453 = vld [vmem:[#allocation9 + $0x74] sm:$0xf]
      %v454 = vld [vmem:[#allocation9 + $0x78] sm:$0xff]
      %v455 = vld [vmem:[#allocation9 + $0x80] sm:$0xf]
      %v456 = vld [vmem:[#allocation9 + $0x84] sm:$0xff]
      %v457 = vld [vmem:[#allocation9 + $0x8c] sm:$0xf]
      %v458 = vld [vmem:[#allocation9 + $0x90] sm:$0xff]
      %v459 = vld [vmem:[#allocation9 + $0x98] sm:$0xf]
      %v460 = vld [vmem:[#allocation9 + $0x9c] sm:$0xff]
      %v461 = vld [vmem:[#allocation9 + $0xa4] sm:$0xf]
      %v462 = vld [vmem:[#allocation9 + $0xa8] sm:$0xff]
      %v463 = vld [vmem:[#allocation9 + $0xb0] sm:$0xf]
      %v464 = vld [vmem:[#allocation9 + $0xb4] sm:$0xff]
      %v465 = vld [vmem:[#allocation9 + $0xbc] sm:$0xf]
      %v466 = vld [vmem:[%s5] sm:$0x7]
      %v468 = vlaneseq
      %v469 = vshrl.u32 %v468, 7
      %v470 = vsub.s32 0, %v469
      %v471 = vrot.slane %v466, %v470
      %v472 = vlaneseq
      %v473 = vshrl.u32 %v472, 7
      %v474 = vsub.s32 1, %v473
      %v475 = vrot.slane %v466, %v474
      %v476 = vlaneseq
      %v477 = vshrl.u32 %v476, 7
      %v478 = vsub.s32 2, %v477
      %v479 = vrot.slane %v466, %v478
      %v515 = vunpack.c.l.b16 %v434
      %v516 = vunpack.c.h.b16 %v434
      %v517 = vunpack.c.l.b16 %v435
      %v518 = vunpack.c.l.b16 %v436
      %v519 = vunpack.c.h.b16 %v436
      %v520 = vunpack.c.l.b16 %v437
      %v521 = vunpack.c.l.b16 %v438
      %v522 = vunpack.c.h.b16 %v438
      %v523 = vunpack.c.l.b16 %v439
      %v524 = vunpack.c.l.b16 %v440
      %v525 = vunpack.c.h.b16 %v440
      %v526 = vunpack.c.l.b16 %v441
      %v527 = vunpack.c.l.b16 %v442
      %v528 = vunpack.c.h.b16 %v442
      %v529 = vunpack.c.l.b16 %v443
      %v530 = vunpack.c.l.b16 %v444
      %v531 = vunpack.c.h.b16 %v444
      %v532 = vunpack.c.l.b16 %v445
      %v533 = vunpack.c.l.b16 %v446
      %v534 = vunpack.c.h.b16 %v446
      %v535 = vunpack.c.l.b16 %v447
      %v536 = vunpack.c.l.b16 %v448
      %v537 = vunpack.c.h.b16 %v448
      %v538 = vunpack.c.l.b16 %v449
      %v539 = vunpack.c.l.b16 %v450
      %v540 = vunpack.c.h.b16 %v450
      %v541 = vunpack.c.l.b16 %v451
      %v542 = vunpack.c.l.b16 %v452
      %v543 = vunpack.c.h.b16 %v452
      %v544 = vunpack.c.l.b16 %v453
      %v545 = vunpack.c.l.b16 %v454
      %v546 = vunpack.c.h.b16 %v454
      %v547 = vunpack.c.l.b16 %v455
      %v548 = vunpack.c.l.b16 %v456
      %v549 = vunpack.c.h.b16 %v456
      %v550 = vunpack.c.l.b16 %v457
      %v551 = vunpack.c.l.b16 %v458
      %v552 = vunpack.c.h.b16 %v458
      %v553 = vunpack.c.l.b16 %v459
      %v554 = vunpack.c.l.b16 %v460
      %v555 = vunpack.c.h.b16 %v460
      %v556 = vunpack.c.l.b16 %v461
      %v557 = vunpack.c.l.b16 %v462
      %v558 = vunpack.c.h.b16 %v462
      %v559 = vunpack.c.l.b16 %v463
      %v560 = vunpack.c.l.b16 %v464
      %v561 = vunpack.c.h.b16 %v464
      %v562 = vunpack.c.l.b16 %v465
      %v563 = vpack.c.b16 %v518, %v515
      %v564 = vpack.c.b16 %v519, %v516
      %v565 = vpack.c.b16 %v520, %v517
      %v566 = vpack.c.b16 %v524, %v521
      %v567 = vpack.c.b16 %v525, %v522
      %v568 = vpack.c.b16 %v526, %v523
      %v569 = vpack.c.b16 %v530, %v527
      %v570 = vpack.c.b16 %v531, %v528
      %v571 = vpack.c.b16 %v532, %v529
      %v572 = vpack.c.b16 %v536, %v533
      %v573 = vpack.c.b16 %v537, %v534
      %v574 = vpack.c.b16 %v538, %v535
      %v575 = vpack.c.b16 %v542, %v539
      %v576 = vpack.c.b16 %v543, %v540
      %v577 = vpack.c.b16 %v544, %v541
      %v578 = vpack.c.b16 %v548, %v545
      %v579 = vpack.c.b16 %v549, %v546
      %v580 = vpack.c.b16 %v550, %v547
      %v581 = vpack.c.b16 %v554, %v551
      %v582 = vpack.c.b16 %v555, %v552
      %v583 = vpack.c.b16 %v556, %v553
      %v584 = vpack.c.b16 %v560, %v557
      %v585 = vpack.c.b16 %v561, %v558
      %v586 = vpack.c.b16 %v562, %v559
      %611 = vmatprep.subr.bf16.mxu0 %v564
      %612 = vmatpush1.bf16.msra.mxu0 %v563
      %613 = vmatprep.subr.bf16.mxu0 %v567
      %614 = vmatpush1.bf16.msra.mxu0 %v566
      %615 = vmatprep.subr.bf16.mxu0 %v570
      %616 = vmatpush1.bf16.msra.mxu0 %v569
      %617 = vmatprep.subr.bf16.mxu0 %v573
      %618 = vmatpush1.bf16.msra.mxu0 %v572
      %619 = vmatprep.subr.bf16.mxu0 %v576
      %620 = vmatpush1.bf16.msra.mxu0 %v575
      %621 = vmatprep.subr.bf16.mxu0 %v579
      %622 = vmatpush1.bf16.msra.mxu0 %v578
      %623 = vmatprep.subr.bf16.mxu0 %v582
      %624 = vmatpush1.bf16.msra.mxu0 %v581
      %625 = vmatprep.subr.bf16.mxu0 %v585
      %626 = vmatpush1.bf16.msra.mxu0 %v584
      %627 = vmatprep.subr.bf16.mxu0 0
      %628 = vmatpush1.bf16.msra.mxu0 0
      %629 = vmatprep.subr.bf16.mxu0 0
      %630 = vmatpush1.bf16.msra.mxu0 0
      %631 = vmatprep.subr.bf16.mxu0 0
      %632 = vmatpush1.bf16.msra.mxu0 0
      %633 = vmatprep.subr.bf16.mxu0 0
      %634 = vmatpush1.bf16.msra.mxu0 0
      %635 = vmatprep.subr.bf16.mxu0 0
      %636 = vmatpush1.bf16.msra.mxu0 0
      %637 = vmatprep.subr.bf16.mxu0 0
      %638 = vmatpush1.bf16.msra.mxu0 0
      %639 = vmatprep.subr.bf16.mxu0 0
      %640 = vmatpush1.bf16.msra.mxu0 0
      %641 = vmatprep.subr.bf16.mxu0 0
      %642 = vmatpush1.bf16.msra.mxu0 0
      %643 = vmatprep.mubr.bf16.mxu0 0
      %644 = vmatmul.mubr.bf16.gmra.mrb[0].mxu0 %v433
      %v645 = vpop.f32.mrb[0].mxu0
      %v646 = vadd.f32 %v471, %v645
      %v647 = vpop.f32.mrb[0].mxu0
      %v648 = vadd.f32 %v475, %v647
      %v649 = vpop.f32.mrb[0].mxu0
      %v650 = vadd.f32 %v471, %v649
      %v651 = vpop.f32.mrb[0].mxu0
      %v652 = vadd.f32 %v475, %v651
      %653 = vdwg.mxu0
      %654 = vmatprep.subr.bf16.mxu0 0
      %655 = vmatpush1.bf16.msra.mxu0 %v565
      %656 = vmatprep.subr.bf16.mxu0 0
      %657 = vmatpush1.bf16.msra.mxu0 %v568
      %658 = vmatprep.subr.bf16.mxu0 0
      %659 = vmatpush1.bf16.msra.mxu0 %v571
      %660 = vmatprep.subr.bf16.mxu0 0
      %661 = vmatpush1.bf16.msra.mxu0 %v574
      %662 = vmatprep.subr.bf16.mxu0 0
      %663 = vmatpush1.bf16.msra.mxu0 %v577
      %664 = vmatprep.subr.bf16.mxu0 0
      %665 = vmatpush1.bf16.msra.mxu0 %v580
      %666 = vmatprep.subr.bf16.mxu0 0
      %667 = vmatpush1.bf16.msra.mxu0 %v583
      %668 = vmatprep.subr.bf16.mxu0 0
      %669 = vmatpush1.bf16.msra.mxu0 %v586
      %670 = vmatprep.subr.bf16.mxu0 0
      %671 = vmatpush1.bf16.msra.mxu0 0
      %672 = vmatprep.subr.bf16.mxu0 0
      %673 = vmatpush1.bf16.msra.mxu0 0
      %674 = vmatprep.subr.bf16.mxu0 0
      %675 = vmatpush1.bf16.msra.mxu0 0
      %676 = vmatprep.subr.bf16.mxu0 0
      %677 = vmatpush1.bf16.msra.mxu0 0
      %678 = vmatprep.subr.bf16.mxu0 0
      %679 = vmatpush1.bf16.msra.mxu0 0
      %680 = vmatprep.subr.bf16.mxu0 0
      %681 = vmatpush1.bf16.msra.mxu0 0
      %682 = vmatprep.subr.bf16.mxu0 0
      %683 = vmatpush1.bf16.msra.mxu0 0
      %684 = vmatprep.subr.bf16.mxu0 0
      %685 = vmatpush1.bf16.msra.mxu0 0
      %686 = vmatprep.mubr.bf16.mxu0 0
      %687 = vmatmul.mubr.bf16.gmra.mrb[0].mxu0 %v433
      %v688 = vpop.f32.mrb[0].mxu0
      %v689 = vadd.f32 %v479, %v688
      %v690 = vpop.f32.mrb[0].mxu0
      %v691 = vpop.f32.mrb[0].mxu0
      %v692 = vadd.f32 %v479, %v691
      %v693 = vpop.f32.mrb[0].mxu0
      %694 = vdwg.mxu0
      %v695 = vpack.c.bf16 %v432, %v431
      %v696 = vld [vmem:[#allocation11] sm:$0xff]
      %v697 = vld [vmem:[#allocation11 + $0x8] sm:$0xf]
      %v698 = vld [vmem:[#allocation11 + $0xc] sm:$0xff]
      %v699 = vld [vmem:[#allocation11 + $0x14] sm:$0xf]
      %v700 = vld [vmem:[#allocation11 + $0x18] sm:$0xff]
      %v701 = vld [vmem:[#allocation11 + $0x20] sm:$0xf]
      %v702 = vld [vmem:[#allocation11 + $0x24] sm:$0xff]
      %v703 = vld [vmem:[#allocation11 + $0x2c] sm:$0xf]
      %v704 = vld [vmem:[#allocation11 + $0x30] sm:$0xff]
      %v705 = vld [vmem:[#allocation11 + $0x38] sm:$0xf]
      %v706 = vld [vmem:[#allocation11 + $0x3c] sm:$0xff]
      %v707 = vld [vmem:[#allocation11 + $0x44] sm:$0xf]
      %v708 = vld [vmem:[#allocation11 + $0x48] sm:$0xff]
      %v709 = vld [vmem:[#allocation11 + $0x50] sm:$0xf]
      %v710 = vld [vmem:[#allocation11 + $0x54] sm:$0xff]
      %v711 = vld [vmem:[#allocation11 + $0x5c] sm:$0xf]
      %v712 = vld [vmem:[#allocation11 + $0x60] sm:$0xff]
      %v713 = vld [vmem:[#allocation11 + $0x68] sm:$0xf]
      %v714 = vld [vmem:[#allocation11 + $0x6c] sm:$0xff]
      %v715 = vld [vmem:[#allocation11 + $0x74] sm:$0xf]
      %v716 = vld [vmem:[#allocation11 + $0x78] sm:$0xff]
      %v717 = vld [vmem:[#allocation11 + $0x80] sm:$0xf]
      %v718 = vld [vmem:[#allocation11 + $0x84] sm:$0xff]
      %v719 = vld [vmem:[#allocation11 + $0x8c] sm:$0xf]
      %v720 = vld [vmem:[#allocation11 + $0x90] sm:$0xff]
      %v721 = vld [vmem:[#allocation11 + $0x98] sm:$0xf]
      %v722 = vld [vmem:[#allocation11 + $0x9c] sm:$0xff]
      %v723 = vld [vmem:[#allocation11 + $0xa4] sm:$0xf]
      %v724 = vld [vmem:[#allocation11 + $0xa8] sm:$0xff]
      %v725 = vld [vmem:[#allocation11 + $0xb0] sm:$0xf]
      %v726 = vld [vmem:[#allocation11 + $0xb4] sm:$0xff]
      %v727 = vld [vmem:[#allocation11 + $0xbc] sm:$0xf]
      %v728 = vld [vmem:[%s6] sm:$0x7]
      %v730 = vlaneseq
      %v731 = vshrl.u32 %v730, 7
      %v732 = vsub.s32 0, %v731
      %v733 = vrot.slane %v728, %v732
      %v734 = vlaneseq
      %v735 = vshrl.u32 %v734, 7
      %v736 = vsub.s32 1, %v735
      %v737 = vrot.slane %v728, %v736
      %v738 = vlaneseq
      %v739 = vshrl.u32 %v738, 7
      %v740 = vsub.s32 2, %v739
      %v741 = vrot.slane %v728, %v740
      %v777 = vunpack.c.l.b16 %v696
      %v778 = vunpack.c.h.b16 %v696
      %v779 = vunpack.c.l.b16 %v697
      %v780 = vunpack.c.l.b16 %v698
      %v781 = vunpack.c.h.b16 %v698
      %v782 = vunpack.c.l.b16 %v699
      %v783 = vunpack.c.l.b16 %v700
      %v784 = vunpack.c.h.b16 %v700
      %v785 = vunpack.c.l.b16 %v701
      %v786 = vunpack.c.l.b16 %v702
      %v787 = vunpack.c.h.b16 %v702
      %v788 = vunpack.c.l.b16 %v703
      %v789 = vunpack.c.l.b16 %v704
      %v790 = vunpack.c.h.b16 %v704
      %v791 = vunpack.c.l.b16 %v705
      %v792 = vunpack.c.l.b16 %v706
      %v793 = vunpack.c.h.b16 %v706
      %v794 = vunpack.c.l.b16 %v707
      %v795 = vunpack.c.l.b16 %v708
      %v796 = vunpack.c.h.b16 %v708
      %v797 = vunpack.c.l.b16 %v709
      %v798 = vunpack.c.l.b16 %v710
      %v799 = vunpack.c.h.b16 %v710
      %v800 = vunpack.c.l.b16 %v711
      %v801 = vunpack.c.l.b16 %v712
      %v802 = vunpack.c.h.b16 %v712
      %v803 = vunpack.c.l.b16 %v713
      %v804 = vunpack.c.l.b16 %v714
      %v805 = vunpack.c.h.b16 %v714
      %v806 = vunpack.c.l.b16 %v715
      %v807 = vunpack.c.l.b16 %v716
      %v808 = vunpack.c.h.b16 %v716
      %v809 = vunpack.c.l.b16 %v717
      %v810 = vunpack.c.l.b16 %v718
      %v811 = vunpack.c.h.b16 %v718
      %v812 = vunpack.c.l.b16 %v719
      %v813 = vunpack.c.l.b16 %v720
      %v814 = vunpack.c.h.b16 %v720
      %v815 = vunpack.c.l.b16 %v721
      %v816 = vunpack.c.l.b16 %v722
      %v817 = vunpack.c.h.b16 %v722
      %v818 = vunpack.c.l.b16 %v723
      %v819 = vunpack.c.l.b16 %v724
      %v820 = vunpack.c.h.b16 %v724
      %v821 = vunpack.c.l.b16 %v725
      %v822 = vunpack.c.l.b16 %v726
      %v823 = vunpack.c.h.b16 %v726
      %v824 = vunpack.c.l.b16 %v727
      %v825 = vpack.c.b16 %v780, %v777
      %v826 = vpack.c.b16 %v781, %v778
      %v827 = vpack.c.b16 %v782, %v779
      %v828 = vpack.c.b16 %v786, %v783
      %v829 = vpack.c.b16 %v787, %v784
      %v830 = vpack.c.b16 %v788, %v785
      %v831 = vpack.c.b16 %v792, %v789
      %v832 = vpack.c.b16 %v793, %v790
      %v833 = vpack.c.b16 %v794, %v791
      %v834 = vpack.c.b16 %v798, %v795
      %v835 = vpack.c.b16 %v799, %v796
      %v836 = vpack.c.b16 %v800, %v797
      %v837 = vpack.c.b16 %v804, %v801
      %v838 = vpack.c.b16 %v805, %v802
      %v839 = vpack.c.b16 %v806, %v803
      %v840 = vpack.c.b16 %v810, %v807
      %v841 = vpack.c.b16 %v811, %v808
      %v842 = vpack.c.b16 %v812, %v809
      %v843 = vpack.c.b16 %v816, %v813
      %v844 = vpack.c.b16 %v817, %v814
      %v845 = vpack.c.b16 %v818, %v815
      %v846 = vpack.c.b16 %v822, %v819
      %v847 = vpack.c.b16 %v823, %v820
      %v848 = vpack.c.b16 %v824, %v821
      %873 = vmatprep.subr.bf16.mxu0 %v826
      %874 = vmatpush1.bf16.msra.mxu0 %v825
      %875 = vmatprep.subr.bf16.mxu0 %v829
      %876 = vmatpush1.bf16.msra.mxu0 %v828
      %877 = vmatprep.subr.bf16.mxu0 %v832
      %878 = vmatpush1.bf16.msra.mxu0 %v831
      %879 = vmatprep.subr.bf16.mxu0 %v835
      %880 = vmatpush1.bf16.msra.mxu0 %v834
      %881 = vmatprep.subr.bf16.mxu0 %v838
      %882 = vmatpush1.bf16.msra.mxu0 %v837
      %883 = vmatprep.subr.bf16.mxu0 %v841
      %884 = vmatpush1.bf16.msra.mxu0 %v840
      %885 = vmatprep.subr.bf16.mxu0 %v844
      %886 = vmatpush1.bf16.msra.mxu0 %v843
      %887 = vmatprep.subr.bf16.mxu0 %v847
      %888 = vmatpush1.bf16.msra.mxu0 %v846
      %889 = vmatprep.subr.bf16.mxu0 0
      %890 = vmatpush1.bf16.msra.mxu0 0
      %891 = vmatprep.subr.bf16.mxu0 0
      %892 = vmatpush1.bf16.msra.mxu0 0
      %893 = vmatprep.subr.bf16.mxu0 0
      %894 = vmatpush1.bf16.msra.mxu0 0
      %895 = vmatprep.subr.bf16.mxu0 0
      %896 = vmatpush1.bf16.msra.mxu0 0
      %897 = vmatprep.subr.bf16.mxu0 0
      %898 = vmatpush1.bf16.msra.mxu0 0
      %899 = vmatprep.subr.bf16.mxu0 0
      %900 = vmatpush1.bf16.msra.mxu0 0
      %901 = vmatprep.subr.bf16.mxu0 0
      %902 = vmatpush1.bf16.msra.mxu0 0
      %903 = vmatprep.subr.bf16.mxu0 0
      %904 = vmatpush1.bf16.msra.mxu0 0
      %905 = vmatprep.mubr.bf16.mxu0 0
      %906 = vmatmul.mubr.bf16.gmra.mrb[0].mxu0 %v695
      %v907 = vpop.f32.mrb[0].mxu0
      %v908 = vadd.f32 %v733, %v907
      %v909 = vpop.f32.mrb[0].mxu0
      %v910 = vadd.f32 %v737, %v909
      %v911 = vpop.f32.mrb[0].mxu0
      %v912 = vadd.f32 %v733, %v911
      %v913 = vpop.f32.mrb[0].mxu0
      %v914 = vadd.f32 %v737, %v913
      %915 = vdwg.mxu0
      %916 = vmatprep.subr.bf16.mxu0 0
      %917 = vmatpush1.bf16.msra.mxu0 %v827
      %918 = vmatprep.subr.bf16.mxu0 0
      %919 = vmatpush1.bf16.msra.mxu0 %v830
      %920 = vmatprep.subr.bf16.mxu0 0
      %921 = vmatpush1.bf16.msra.mxu0 %v833
      %922 = vmatprep.subr.bf16.mxu0 0
      %923 = vmatpush1.bf16.msra.mxu0 %v836
      %924 = vmatprep.subr.bf16.mxu0 0
      %925 = vmatpush1.bf16.msra.mxu0 %v839
      %926 = vmatprep.subr.bf16.mxu0 0
      %927 = vmatpush1.bf16.msra.mxu0 %v842
      %928 = vmatprep.subr.bf16.mxu0 0
      %929 = vmatpush1.bf16.msra.mxu0 %v845
      %930 = vmatprep.subr.bf16.mxu0 0
      %931 = vmatpush1.bf16.msra.mxu0 %v848
      %932 = vmatprep.subr.bf16.mxu0 0
      %933 = vmatpush1.bf16.msra.mxu0 0
      %934 = vmatprep.subr.bf16.mxu0 0
      %935 = vmatpush1.bf16.msra.mxu0 0
      %936 = vmatprep.subr.bf16.mxu0 0
      %937 = vmatpush1.bf16.msra.mxu0 0
      %938 = vmatprep.subr.bf16.mxu0 0
      %939 = vmatpush1.bf16.msra.mxu0 0
      %940 = vmatprep.subr.bf16.mxu0 0
      %941 = vmatpush1.bf16.msra.mxu0 0
      %942 = vmatprep.subr.bf16.mxu0 0
      %943 = vmatpush1.bf16.msra.mxu0 0
      %944 = vmatprep.subr.bf16.mxu0 0
      %945 = vmatpush1.bf16.msra.mxu0 0
      %946 = vmatprep.subr.bf16.mxu0 0
      %947 = vmatpush1.bf16.msra.mxu0 0
      %948 = vmatprep.mubr.bf16.mxu0 0
      %949 = vmatmul.mubr.bf16.gmra.mrb[0].mxu0 %v695
      %v950 = vpop.f32.mrb[0].mxu0
      %v951 = vadd.f32 %v741, %v950
      %v952 = vpop.f32.mrb[0].mxu0
      %v953 = vpop.f32.mrb[0].mxu0
      %v954 = vadd.f32 %v741, %v953
      %v955 = vpop.f32.mrb[0].mxu0
      %956 = vdwg.mxu0
      %v957 = vadd.f32 %v646, %v908
      %v958 = vadd.f32 %v650, %v912
      %v959 = vxor.u32 %v957, 2147483648
      %v960 = vxor.u32 %v958, 2147483648
      %v961 = vmul.f32 %v959, 1.442695
      %v962 = vpow.pop %v961
      %v963 = vmul.f32 %v960, 1.442695
      %v964 = vpow.pop %v963
      %v965 = vadd.f32 %v962, 1.0
      %v966 = vadd.f32 %v964, 1.0
      %v967 = vrcp.pop %v965
      %v968 = vmul.f32 1.0, %v967
      %v969 = vrcp.pop %v966
      %v970 = vmul.f32 1.0, %v969
      %v971 = vadd.f32 %v648, %v910
      %v972 = vadd.f32 %v652, %v914
      %v973 = vxor.u32 %v971, 2147483648
      %v974 = vxor.u32 %v972, 2147483648
      %v975 = vmul.f32 %v973, 1.442695
      %v976 = vpow.pop %v975
      %v977 = vmul.f32 %v974, 1.442695
      %v978 = vpow.pop %v977
      %v979 = vadd.f32 %v976, 1.0
      %v980 = vadd.f32 %v978, 1.0
      %v981 = vrcp.pop %v979
      %v982 = vmul.f32 1.0, %v981
      %v983 = vrcp.pop %v980
      %v984 = vmul.f32 1.0, %v983
      %v985 = vmul.f32 %v968, %v951
      %v986 = vmul.f32 %v970, %v954
      %v987 = vadd.f32 %v689, %v985
      %v988 = vadd.f32 %v692, %v986
      %v989 = vtanh.pop %v987
      %v990 = vtanh.pop %v988
      %v991 = vsub.f32 1.0, %v982
      %v992 = vsub.f32 1.0, %v984
      %v993 = vmul.f32 %v991, %v989
      %v994 = vmul.f32 %v992, %v990
      %v995 = vmul.f32 %v982, %v431
      %v996 = vmul.f32 %v984, %v432
      %v997 = vadd.f32 %v993, %v995
      %v998 = vadd.f32 %v994, %v996
      %999 = vst [vmem:[%s15] sm:$0xff] %v997
      %1000 = vst [vmem:[%s15 + $0x8] sm:$0xff] %v998
      %s1001 = scalar_lea.vmem %s2, 16
      %v1002 = vld [vmem:[%s1001] sm:$0xff]
      %v1003 = vld [vmem:[%s1001 + $0x8] sm:$0xff]
      %v1004 = vpack.c.bf16 %v998, %v997
      %v1005 = vld [vmem:[#allocation13] sm:$0xff]
      %v1006 = vld [vmem:[#allocation13 + $0x8] sm:$0xf]
      %v1007 = vld [vmem:[#allocation13 + $0xc] sm:$0xff]
      %v1008 = vld [vmem:[#allocation13 + $0x14] sm:$0xf]
      %v1009 = vld [vmem:[#allocation13 + $0x18] sm:$0xff]
      %v1010 = vld [vmem:[#allocation13 + $0x20] sm:$0xf]
      %v1011 = vld [vmem:[#allocation13 + $0x24] sm:$0xff]
      %v1012 = vld [vmem:[#allocation13 + $0x2c] sm:$0xf]
      %v1013 = vld [vmem:[#allocation13 + $0x30] sm:$0xff]
      %v1014 = vld [vmem:[#allocation13 + $0x38] sm:$0xf]
      %v1015 = vld [vmem:[#allocation13 + $0x3c] sm:$0xff]
      %v1016 = vld [vmem:[#allocation13 + $0x44] sm:$0xf]
      %v1017 = vld [vmem:[#allocation13 + $0x48] sm:$0xff]
      %v1018 = vld [vmem:[#allocation13 + $0x50] sm:$0xf]
      %v1019 = vld [vmem:[#allocation13 + $0x54] sm:$0xff]
      %v1020 = vld [vmem:[#allocation13 + $0x5c] sm:$0xf]
      %v1021 = vld [vmem:[#allocation13 + $0x60] sm:$0xff]
      %v1022 = vld [vmem:[#allocation13 + $0x68] sm:$0xf]
      %v1023 = vld [vmem:[#allocation13 + $0x6c] sm:$0xff]
      %v1024 = vld [vmem:[#allocation13 + $0x74] sm:$0xf]
      %v1025 = vld [vmem:[#allocation13 + $0x78] sm:$0xff]
      %v1026 = vld [vmem:[#allocation13 + $0x80] sm:$0xf]
      %v1027 = vld [vmem:[#allocation13 + $0x84] sm:$0xff]
      %v1028 = vld [vmem:[#allocation13 + $0x8c] sm:$0xf]
      %v1029 = vld [vmem:[#allocation13 + $0x90] sm:$0xff]
      %v1030 = vld [vmem:[#allocation13 + $0x98] sm:$0xf]
      %v1031 = vld [vmem:[#allocation13 + $0x9c] sm:$0xff]
      %v1032 = vld [vmem:[#allocation13 + $0xa4] sm:$0xf]
      %v1033 = vld [vmem:[#allocation13 + $0xa8] sm:$0xff]
      %v1034 = vld [vmem:[#allocation13 + $0xb0] sm:$0xf]
      %v1035 = vld [vmem:[#allocation13 + $0xb4] sm:$0xff]
      %v1036 = vld [vmem:[#allocation13 + $0xbc] sm:$0xf]
      %v1037 = vld [vmem:[%s9] sm:$0x7]
      %v1039 = vlaneseq
      %v1040 = vshrl.u32 %v1039, 7
      %v1041 = vsub.s32 0, %v1040
      %v1042 = vrot.slane %v1037, %v1041
      %v1043 = vlaneseq
      %v1044 = vshrl.u32 %v1043, 7
      %v1045 = vsub.s32 1, %v1044
      %v1046 = vrot.slane %v1037, %v1045
      %v1047 = vlaneseq
      %v1048 = vshrl.u32 %v1047, 7
      %v1049 = vsub.s32 2, %v1048
      %v1050 = vrot.slane %v1037, %v1049
      %v1086 = vunpack.c.l.b16 %v1005
      %v1087 = vunpack.c.h.b16 %v1005
      %v1088 = vunpack.c.l.b16 %v1006
      %v1089 = vunpack.c.l.b16 %v1007
      %v1090 = vunpack.c.h.b16 %v1007
      %v1091 = vunpack.c.l.b16 %v1008
      %v1092 = vunpack.c.l.b16 %v1009
      %v1093 = vunpack.c.h.b16 %v1009
      %v1094 = vunpack.c.l.b16 %v1010
      %v1095 = vunpack.c.l.b16 %v1011
      %v1096 = vunpack.c.h.b16 %v1011
      %v1097 = vunpack.c.l.b16 %v1012
      %v1098 = vunpack.c.l.b16 %v1013
      %v1099 = vunpack.c.h.b16 %v1013
      %v1100 = vunpack.c.l.b16 %v1014
      %v1101 = vunpack.c.l.b16 %v1015
      %v1102 = vunpack.c.h.b16 %v1015
      %v1103 = vunpack.c.l.b16 %v1016
      %v1104 = vunpack.c.l.b16 %v1017
      %v1105 = vunpack.c.h.b16 %v1017
      %v1106 = vunpack.c.l.b16 %v1018
      %v1107 = vunpack.c.l.b16 %v1019
      %v1108 = vunpack.c.h.b16 %v1019
      %v1109 = vunpack.c.l.b16 %v1020
      %v1110 = vunpack.c.l.b16 %v1021
      %v1111 = vunpack.c.h.b16 %v1021
      %v1112 = vunpack.c.l.b16 %v1022
      %v1113 = vunpack.c.l.b16 %v1023
      %v1114 = vunpack.c.h.b16 %v1023
      %v1115 = vunpack.c.l.b16 %v1024
      %v1116 = vunpack.c.l.b16 %v1025
      %v1117 = vunpack.c.h.b16 %v1025
      %v1118 = vunpack.c.l.b16 %v1026
      %v1119 = vunpack.c.l.b16 %v1027
      %v1120 = vunpack.c.h.b16 %v1027
      %v1121 = vunpack.c.l.b16 %v1028
      %v1122 = vunpack.c.l.b16 %v1029
      %v1123 = vunpack.c.h.b16 %v1029
      %v1124 = vunpack.c.l.b16 %v1030
      %v1125 = vunpack.c.l.b16 %v1031
      %v1126 = vunpack.c.h.b16 %v1031
      %v1127 = vunpack.c.l.b16 %v1032
      %v1128 = vunpack.c.l.b16 %v1033
      %v1129 = vunpack.c.h.b16 %v1033
      %v1130 = vunpack.c.l.b16 %v1034
      %v1131 = vunpack.c.l.b16 %v1035
      %v1132 = vunpack.c.h.b16 %v1035
      %v1133 = vunpack.c.l.b16 %v1036
      %v1134 = vpack.c.b16 %v1089, %v1086
      %v1135 = vpack.c.b16 %v1090, %v1087
      %v1136 = vpack.c.b16 %v1091, %v1088
      %v1137 = vpack.c.b16 %v1095, %v1092
      %v1138 = vpack.c.b16 %v1096, %v1093
      %v1139 = vpack.c.b16 %v1097, %v1094
      %v1140 = vpack.c.b16 %v1101, %v1098
      %v1141 = vpack.c.b16 %v1102, %v1099
      %v1142 = vpack.c.b16 %v1103, %v1100
      %v1143 = vpack.c.b16 %v1107, %v1104
      %v1144 = vpack.c.b16 %v1108, %v1105
      %v1145 = vpack.c.b16 %v1109, %v1106
      %v1146 = vpack.c.b16 %v1113, %v1110
      %v1147 = vpack.c.b16 %v1114, %v1111
      %v1148 = vpack.c.b16 %v1115, %v1112
      %v1149 = vpack.c.b16 %v1119, %v1116
      %v1150 = vpack.c.b16 %v1120, %v1117
      %v1151 = vpack.c.b16 %v1121, %v1118
      %v1152 = vpack.c.b16 %v1125, %v1122
      %v1153 = vpack.c.b16 %v1126, %v1123
      %v1154 = vpack.c.b16 %v1127, %v1124
      %v1155 = vpack.c.b16 %v1131, %v1128
      %v1156 = vpack.c.b16 %v1132, %v1129
      %v1157 = vpack.c.b16 %v1133, %v1130
      %1182 = vmatprep.subr.bf16.mxu0 %v1135
      %1183 = vmatpush1.bf16.msra.mxu0 %v1134
      %1184 = vmatprep.subr.bf16.mxu0 %v1138
      %1185 = vmatpush1.bf16.msra.mxu0 %v1137
      %1186 = vmatprep.subr.bf16.mxu0 %v1141
      %1187 = vmatpush1.bf16.msra.mxu0 %v1140
      %1188 = vmatprep.subr.bf16.mxu0 %v1144
      %1189 = vmatpush1.bf16.msra.mxu0 %v1143
      %1190 = vmatprep.subr.bf16.mxu0 %v1147
      %1191 = vmatpush1.bf16.msra.mxu0 %v1146
      %1192 = vmatprep.subr.bf16.mxu0 %v1150
      %1193 = vmatpush1.bf16.msra.mxu0 %v1149
      %1194 = vmatprep.subr.bf16.mxu0 %v1153
      %1195 = vmatpush1.bf16.msra.mxu0 %v1152
      %1196 = vmatprep.subr.bf16.mxu0 %v1156
      %1197 = vmatpush1.bf16.msra.mxu0 %v1155
      %1198 = vmatprep.subr.bf16.mxu0 0
      %1199 = vmatpush1.bf16.msra.mxu0 0
      %1200 = vmatprep.subr.bf16.mxu0 0
      %1201 = vmatpush1.bf16.msra.mxu0 0
      %1202 = vmatprep.subr.bf16.mxu0 0
      %1203 = vmatpush1.bf16.msra.mxu0 0
      %1204 = vmatprep.subr.bf16.mxu0 0
      %1205 = vmatpush1.bf16.msra.mxu0 0
      %1206 = vmatprep.subr.bf16.mxu0 0
      %1207 = vmatpush1.bf16.msra.mxu0 0
      %1208 = vmatprep.subr.bf16.mxu0 0
      %1209 = vmatpush1.bf16.msra.mxu0 0
      %1210 = vmatprep.subr.bf16.mxu0 0
      %1211 = vmatpush1.bf16.msra.mxu0 0
      %1212 = vmatprep.subr.bf16.mxu0 0
      %1213 = vmatpush1.bf16.msra.mxu0 0
      %1214 = vmatprep.mubr.bf16.mxu0 0
      %1215 = vmatmul.mubr.bf16.gmra.mrb[0].mxu0 %v1004
      %v1216 = vpop.f32.mrb[0].mxu0
      %v1217 = vadd.f32 %v1042, %v1216
      %v1218 = vpop.f32.mrb[0].mxu0
      %v1219 = vadd.f32 %v1046, %v1218
      %v1220 = vpop.f32.mrb[0].mxu0
      %v1221 = vadd.f32 %v1042, %v1220
      %v1222 = vpop.f32.mrb[0].mxu0
      %v1223 = vadd.f32 %v1046, %v1222
      %1224 = vdwg.mxu0
      %1225 = vmatprep.subr.bf16.mxu0 0
      %1226 = vmatpush1.bf16.msra.mxu0 %v1136
      %1227 = vmatprep.subr.bf16.mxu0 0
      %1228 = vmatpush1.bf16.msra.mxu0 %v1139
      %1229 = vmatprep.subr.bf16.mxu0 0
      %1230 = vmatpush1.bf16.msra.mxu0 %v1142
      %1231 = vmatprep.subr.bf16.mxu0 0
      %1232 = vmatpush1.bf16.msra.mxu0 %v1145
      %1233 = vmatprep.subr.bf16.mxu0 0
      %1234 = vmatpush1.bf16.msra.mxu0 %v1148
      %1235 = vmatprep.subr.bf16.mxu0 0
      %1236 = vmatpush1.bf16.msra.mxu0 %v1151
      %1237 = vmatprep.subr.bf16.mxu0 0
      %1238 = vmatpush1.bf16.msra.mxu0 %v1154
      %1239 = vmatprep.subr.bf16.mxu0 0
      %1240 = vmatpush1.bf16.msra.mxu0 %v1157
      %1241 = vmatprep.subr.bf16.mxu0 0
      %1242 = vmatpush1.bf16.msra.mxu0 0
      %1243 = vmatprep.subr.bf16.mxu0 0
      %1244 = vmatpush1.bf16.msra.mxu0 0
      %1245 = vmatprep.subr.bf16.mxu0 0
      %1246 = vmatpush1.bf16.msra.mxu0 0
      %1247 = vmatprep.subr.bf16.mxu0 0
      %1248 = vmatpush1.bf16.msra.mxu0 0
      %1249 = vmatprep.subr.bf16.mxu0 0
      %1250 = vmatpush1.bf16.msra.mxu0 0
      %1251 = vmatprep.subr.bf16.mxu0 0
      %1252 = vmatpush1.bf16.msra.mxu0 0
      %1253 = vmatprep.subr.bf16.mxu0 0
      %1254 = vmatpush1.bf16.msra.mxu0 0
      %1255 = vmatprep.subr.bf16.mxu0 0
      %1256 = vmatpush1.bf16.msra.mxu0 0
      %1257 = vmatprep.mubr.bf16.mxu0 0
      %1258 = vmatmul.mubr.bf16.gmra.mrb[0].mxu0 %v1004
      %v1259 = vpop.f32.mrb[0].mxu0
      %v1260 = vadd.f32 %v1050, %v1259
      %v1261 = vpop.f32.mrb[0].mxu0
      %v1262 = vpop.f32.mrb[0].mxu0
      %v1263 = vadd.f32 %v1050, %v1262
      %v1264 = vpop.f32.mrb[0].mxu0
      %1265 = vdwg.mxu0
      %v1266 = vpack.c.bf16 %v1003, %v1002
      %v1267 = vld [vmem:[#allocation14] sm:$0xff]
      %v1268 = vld [vmem:[#allocation14 + $0x8] sm:$0xf]
      %v1269 = vld [vmem:[#allocation14 + $0xc] sm:$0xff]
      %v1270 = vld [vmem:[#allocation14 + $0x14] sm:$0xf]
      %v1271 = vld [vmem:[#allocation14 + $0x18] sm:$0xff]
      %v1272 = vld [vmem:[#allocation14 + $0x20] sm:$0xf]
      %v1273 = vld [vmem:[#allocation14 + $0x24] sm:$0xff]
      %v1274 = vld [vmem:[#allocation14 + $0x2c] sm:$0xf]
      %v1275 = vld [vmem:[#allocation14 + $0x30] sm:$0xff]
      %v1276 = vld [vmem:[#allocation14 + $0x38] sm:$0xf]
      %v1277 = vld [vmem:[#allocation14 + $0x3c] sm:$0xff]
      %v1278 = vld [vmem:[#allocation14 + $0x44] sm:$0xf]
      %v1279 = vld [vmem:[#allocation14 + $0x48] sm:$0xff]
      %v1280 = vld [vmem:[#allocation14 + $0x50] sm:$0xf]
      %v1281 = vld [vmem:[#allocation14 + $0x54] sm:$0xff]
      %v1282 = vld [vmem:[#allocation14 + $0x5c] sm:$0xf]
      %v1283 = vld [vmem:[#allocation14 + $0x60] sm:$0xff]
      %v1284 = vld [vmem:[#allocation14 + $0x68] sm:$0xf]
      %v1285 = vld [vmem:[#allocation14 + $0x6c] sm:$0xff]
      %v1286 = vld [vmem:[#allocation14 + $0x74] sm:$0xf]
      %v1287 = vld [vmem:[#allocation14 + $0x78] sm:$0xff]
      %v1288 = vld [vmem:[#allocation14 + $0x80] sm:$0xf]
      %v1289 = vld [vmem:[#allocation14 + $0x84] sm:$0xff]
      %v1290 = vld [vmem:[#allocation14 + $0x8c] sm:$0xf]
      %v1291 = vld [vmem:[#allocation14 + $0x90] sm:$0xff]
      %v1292 = vld [vmem:[#allocation14 + $0x98] sm:$0xf]
      %v1293 = vld [vmem:[#allocation14 + $0x9c] sm:$0xff]
      %v1294 = vld [vmem:[#allocation14 + $0xa4] sm:$0xf]
      %v1295 = vld [vmem:[#allocation14 + $0xa8] sm:$0xff]
      %v1296 = vld [vmem:[#allocation14 + $0xb0] sm:$0xf]
      %v1297 = vld [vmem:[#allocation14 + $0xb4] sm:$0xff]
      %v1298 = vld [vmem:[#allocation14 + $0xbc] sm:$0xf]
      %v1299 = vld [vmem:[%s10] sm:$0x7]
      %v1301 = vlaneseq
      %v1302 = vshrl.u32 %v1301, 7
      %v1303 = vsub.s32 0, %v1302
      %v1304 = vrot.slane %v1299, %v1303
      %v1305 = vlaneseq
      %v1306 = vshrl.u32 %v1305, 7
      %v1307 = vsub.s32 1, %v1306
      %v1308 = vrot.slane %v1299, %v1307
      %v1309 = vlaneseq
      %v1310 = vshrl.u32 %v1309, 7
      %v1311 = vsub.s32 2, %v1310
      %v1312 = vrot.slane %v1299, %v1311
      %v1348 = vunpack.c.l.b16 %v1267
      %v1349 = vunpack.c.h.b16 %v1267
      %v1350 = vunpack.c.l.b16 %v1268
      %v1351 = vunpack.c.l.b16 %v1269
      %v1352 = vunpack.c.h.b16 %v1269
      %v1353 = vunpack.c.l.b16 %v1270
      %v1354 = vunpack.c.l.b16 %v1271
      %v1355 = vunpack.c.h.b16 %v1271
      %v1356 = vunpack.c.l.b16 %v1272
      %v1357 = vunpack.c.l.b16 %v1273
      %v1358 = vunpack.c.h.b16 %v1273
      %v1359 = vunpack.c.l.b16 %v1274
      %v1360 = vunpack.c.l.b16 %v1275
      %v1361 = vunpack.c.h.b16 %v1275
      %v1362 = vunpack.c.l.b16 %v1276
      %v1363 = vunpack.c.l.b16 %v1277
      %v1364 = vunpack.c.h.b16 %v1277
      %v1365 = vunpack.c.l.b16 %v1278
      %v1366 = vunpack.c.l.b16 %v1279
      %v1367 = vunpack.c.h.b16 %v1279
      %v1368 = vunpack.c.l.b16 %v1280
      %v1369 = vunpack.c.l.b16 %v1281
      %v1370 = vunpack.c.h.b16 %v1281
      %v1371 = vunpack.c.l.b16 %v1282
      %v1372 = vunpack.c.l.b16 %v1283
      %v1373 = vunpack.c.h.b16 %v1283
      %v1374 = vunpack.c.l.b16 %v1284
      %v1375 = vunpack.c.l.b16 %v1285
      %v1376 = vunpack.c.h.b16 %v1285
      %v1377 = vunpack.c.l.b16 %v1286
      %v1378 = vunpack.c.l.b16 %v1287
      %v1379 = vunpack.c.h.b16 %v1287
      %v1380 = vunpack.c.l.b16 %v1288
      %v1381 = vunpack.c.l.b16 %v1289
      %v1382 = vunpack.c.h.b16 %v1289
      %v1383 = vunpack.c.l.b16 %v1290
      %v1384 = vunpack.c.l.b16 %v1291
      %v1385 = vunpack.c.h.b16 %v1291
      %v1386 = vunpack.c.l.b16 %v1292
      %v1387 = vunpack.c.l.b16 %v1293
      %v1388 = vunpack.c.h.b16 %v1293
      %v1389 = vunpack.c.l.b16 %v1294
      %v1390 = vunpack.c.l.b16 %v1295
      %v1391 = vunpack.c.h.b16 %v1295
      %v1392 = vunpack.c.l.b16 %v1296
      %v1393 = vunpack.c.l.b16 %v1297
      %v1394 = vunpack.c.h.b16 %v1297
      %v1395 = vunpack.c.l.b16 %v1298
      %v1396 = vpack.c.b16 %v1351, %v1348
      %v1397 = vpack.c.b16 %v1352, %v1349
      %v1398 = vpack.c.b16 %v1353, %v1350
      %v1399 = vpack.c.b16 %v1357, %v1354
      %v1400 = vpack.c.b16 %v1358, %v1355
      %v1401 = vpack.c.b16 %v1359, %v1356
      %v1402 = vpack.c.b16 %v1363, %v1360
      %v1403 = vpack.c.b16 %v1364, %v1361
      %v1404 = vpack.c.b16 %v1365, %v1362
      %v1405 = vpack.c.b16 %v1369, %v1366
      %v1406 = vpack.c.b16 %v1370, %v1367
      %v1407 = vpack.c.b16 %v1371, %v1368
      %v1408 = vpack.c.b16 %v1375, %v1372
      %v1409 = vpack.c.b16 %v1376, %v1373
      %v1410 = vpack.c.b16 %v1377, %v1374
      %v1411 = vpack.c.b16 %v1381, %v1378
      %v1412 = vpack.c.b16 %v1382, %v1379
      %v1413 = vpack.c.b16 %v1383, %v1380
      %v1414 = vpack.c.b16 %v1387, %v1384
      %v1415 = vpack.c.b16 %v1388, %v1385
      %v1416 = vpack.c.b16 %v1389, %v1386
      %v1417 = vpack.c.b16 %v1393, %v1390
      %v1418 = vpack.c.b16 %v1394, %v1391
      %v1419 = vpack.c.b16 %v1395, %v1392
      %1444 = vmatprep.subr.bf16.mxu0 %v1397
      %1445 = vmatpush1.bf16.msra.mxu0 %v1396
      %1446 = vmatprep.subr.bf16.mxu0 %v1400
      %1447 = vmatpush1.bf16.msra.mxu0 %v1399
      %1448 = vmatprep.subr.bf16.mxu0 %v1403
      %1449 = vmatpush1.bf16.msra.mxu0 %v1402
      %1450 = vmatprep.subr.bf16.mxu0 %v1406
      %1451 = vmatpush1.bf16.msra.mxu0 %v1405
      %1452 = vmatprep.subr.bf16.mxu0 %v1409
      %1453 = vmatpush1.bf16.msra.mxu0 %v1408
      %1454 = vmatprep.subr.bf16.mxu0 %v1412
      %1455 = vmatpush1.bf16.msra.mxu0 %v1411
      %1456 = vmatprep.subr.bf16.mxu0 %v1415
      %1457 = vmatpush1.bf16.msra.mxu0 %v1414
      %1458 = vmatprep.subr.bf16.mxu0 %v1418
      %1459 = vmatpush1.bf16.msra.mxu0 %v1417
      %1460 = vmatprep.subr.bf16.mxu0 0
      %1461 = vmatpush1.bf16.msra.mxu0 0
      %1462 = vmatprep.subr.bf16.mxu0 0
      %1463 = vmatpush1.bf16.msra.mxu0 0
      %1464 = vmatprep.subr.bf16.mxu0 0
      %1465 = vmatpush1.bf16.msra.mxu0 0
      %1466 = vmatprep.subr.bf16.mxu0 0
      %1467 = vmatpush1.bf16.msra.mxu0 0
      %1468 = vmatprep.subr.bf16.mxu0 0
      %1469 = vmatpush1.bf16.msra.mxu0 0
      %1470 = vmatprep.subr.bf16.mxu0 0
      %1471 = vmatpush1.bf16.msra.mxu0 0
      %1472 = vmatprep.subr.bf16.mxu0 0
      %1473 = vmatpush1.bf16.msra.mxu0 0
      %1474 = vmatprep.subr.bf16.mxu0 0
      %1475 = vmatpush1.bf16.msra.mxu0 0
      %1476 = vmatprep.mubr.bf16.mxu0 0
      %1477 = vmatmul.mubr.bf16.gmra.mrb[0].mxu0 %v1266
      %v1478 = vpop.f32.mrb[0].mxu0
      %v1479 = vadd.f32 %v1304, %v1478
      %v1480 = vpop.f32.mrb[0].mxu0
      %v1481 = vadd.f32 %v1308, %v1480
      %v1482 = vpop.f32.mrb[0].mxu0
      %v1483 = vadd.f32 %v1304, %v1482
      %v1484 = vpop.f32.mrb[0].mxu0
      %v1485 = vadd.f32 %v1308, %v1484
      %1486 = vdwg.mxu0
      %1487 = vmatprep.subr.bf16.mxu0 0
      %1488 = vmatpush1.bf16.msra.mxu0 %v1398
      %1489 = vmatprep.subr.bf16.mxu0 0
      %1490 = vmatpush1.bf16.msra.mxu0 %v1401
      %1491 = vmatprep.subr.bf16.mxu0 0
      %1492 = vmatpush1.bf16.msra.mxu0 %v1404
      %1493 = vmatprep.subr.bf16.mxu0 0
      %1494 = vmatpush1.bf16.msra.mxu0 %v1407
      %1495 = vmatprep.subr.bf16.mxu0 0
      %1496 = vmatpush1.bf16.msra.mxu0 %v1410
      %1497 = vmatprep.subr.bf16.mxu0 0
      %1498 = vmatpush1.bf16.msra.mxu0 %v1413
      %1499 = vmatprep.subr.bf16.mxu0 0
      %1500 = vmatpush1.bf16.msra.mxu0 %v1416
      %1501 = vmatprep.subr.bf16.mxu0 0
      %1502 = vmatpush1.bf16.msra.mxu0 %v1419
      %1503 = vmatprep.subr.bf16.mxu0 0
      %1504 = vmatpush1.bf16.msra.mxu0 0
      %1505 = vmatprep.subr.bf16.mxu0 0
      %1506 = vmatpush1.bf16.msra.mxu0 0
      %1507 = vmatprep.subr.bf16.mxu0 0
      %1508 = vmatpush1.bf16.msra.mxu0 0
      %1509 = vmatprep.subr.bf16.mxu0 0
      %1510 = vmatpush1.bf16.msra.mxu0 0
      %1511 = vmatprep.subr.bf16.mxu0 0
      %1512 = vmatpush1.bf16.msra.mxu0 0
      %1513 = vmatprep.subr.bf16.mxu0 0
      %1514 = vmatpush1.bf16.msra.mxu0 0
      %1515 = vmatprep.subr.bf16.mxu0 0
      %1516 = vmatpush1.bf16.msra.mxu0 0
      %1517 = vmatprep.subr.bf16.mxu0 0
      %1518 = vmatpush1.bf16.msra.mxu0 0
      %1519 = vmatprep.mubr.bf16.mxu0 0
      %1520 = vmatmul.mubr.bf16.gmra.mrb[0].mxu0 %v1266
      %v1521 = vpop.f32.mrb[0].mxu0
      %v1522 = vadd.f32 %v1312, %v1521
      %v1523 = vpop.f32.mrb[0].mxu0
      %v1524 = vpop.f32.mrb[0].mxu0
      %v1525 = vadd.f32 %v1312, %v1524
      %v1526 = vpop.f32.mrb[0].mxu0
      %1527 = vdwg.mxu0
      %v1528 = vadd.f32 %v1217, %v1479
      %v1529 = vadd.f32 %v1221, %v1483
      %v1530 = vxor.u32 %v1528, 2147483648
      %v1531 = vxor.u32 %v1529, 2147483648
      %v1532 = vmul.f32 %v1530, 1.442695
      %v1533 = vpow.pop %v1532
      %v1534 = vmul.f32 %v1531, 1.442695
      %v1535 = vpow.pop %v1534
      %v1536 = vadd.f32 %v1533, 1.0
      %v1537 = vadd.f32 %v1535, 1.0
      %v1538 = vrcp.pop %v1536
      %v1539 = vmul.f32 1.0, %v1538
      %v1540 = vrcp.pop %v1537
      %v1541 = vmul.f32 1.0, %v1540
      %v1542 = vadd.f32 %v1219, %v1481
      %v1543 = vadd.f32 %v1223, %v1485
      %v1544 = vxor.u32 %v1542, 2147483648
      %v1545 = vxor.u32 %v1543, 2147483648
      %v1546 = vmul.f32 %v1544, 1.442695
      %v1547 = vpow.pop %v1546
      %v1548 = vmul.f32 %v1545, 1.442695
      %v1549 = vpow.pop %v1548
      %v1550 = vadd.f32 %v1547, 1.0
      %v1551 = vadd.f32 %v1549, 1.0
      %v1552 = vrcp.pop %v1550
      %v1553 = vmul.f32 1.0, %v1552
      %v1554 = vrcp.pop %v1551
      %v1555 = vmul.f32 1.0, %v1554
      %v1556 = vmul.f32 %v1539, %v1522
      %v1557 = vmul.f32 %v1541, %v1525
      %v1558 = vadd.f32 %v1260, %v1556
      %v1559 = vadd.f32 %v1263, %v1557
      %v1560 = vtanh.pop %v1558
      %v1561 = vtanh.pop %v1559
      %v1562 = vsub.f32 1.0, %v1553
      %v1563 = vsub.f32 1.0, %v1555
      %v1564 = vmul.f32 %v1562, %v1560
      %v1565 = vmul.f32 %v1563, %v1561
      %v1566 = vmul.f32 %v1553, %v1002
      %v1567 = vmul.f32 %v1555, %v1003
      %v1568 = vadd.f32 %v1564, %v1566
      %v1569 = vadd.f32 %v1565, %v1567
      %s1570 = scalar_lea.vmem %s15, 16
      %1571 = vst [vmem:[%s1570] sm:$0xff] %v1568
      %1572 = vst [vmem:[%s1570 + $0x8] sm:$0xff] %v1569
      %v1573 = vpack.c.bf16 %v1569, %v1568
      %v1574 = vld [vmem:[#allocation16] sm:$0xf]
      %v1575 = vld [vmem:[#allocation16 + $0x4] sm:$0xf]
      %v1576 = vld [vmem:[#allocation16 + $0x8] sm:$0xf]
      %v1577 = vld [vmem:[#allocation16 + $0xc] sm:$0xf]
      %v1578 = vld [vmem:[#allocation16 + $0x10] sm:$0xf]
      %v1579 = vld [vmem:[#allocation16 + $0x14] sm:$0xf]
      %v1580 = vld [vmem:[#allocation16 + $0x18] sm:$0xf]
      %v1581 = vld [vmem:[#allocation16 + $0x1c] sm:$0xf]
      %v1582 = vld [vmem:[#allocation16 + $0x20] sm:$0xf]
      %v1583 = vld [vmem:[#allocation16 + $0x24] sm:$0xf]
      %v1584 = vld [vmem:[#allocation16 + $0x28] sm:$0xf]
      %v1585 = vld [vmem:[#allocation16 + $0x2c] sm:$0xf]
      %v1586 = vld [vmem:[#allocation16 + $0x30] sm:$0xf]
      %v1587 = vld [vmem:[#allocation16 + $0x34] sm:$0xf]
      %v1588 = vld [vmem:[#allocation16 + $0x38] sm:$0xf]
      %v1589 = vld [vmem:[#allocation16 + $0x3c] sm:$0xf]
      %v1590 = vld [vmem:[%s12] sm:$0x1]
      %v1592 = vlaneseq
      %v1593 = vshrl.u32 %v1592, 7
      %v1594 = vsub.s32 0, %v1593
      %v1595 = vrot.slane %v1590, %v1594
      %v1613 = vunpack.c.l.b16 %v1574
      %v1614 = vunpack.c.l.b16 %v1575
      %v1615 = vunpack.c.l.b16 %v1576
      %v1616 = vunpack.c.l.b16 %v1577
      %v1617 = vunpack.c.l.b16 %v1578
      %v1618 = vunpack.c.l.b16 %v1579
      %v1619 = vunpack.c.l.b16 %v1580
      %v1620 = vunpack.c.l.b16 %v1581
      %v1621 = vunpack.c.l.b16 %v1582
      %v1622 = vunpack.c.l.b16 %v1583
      %v1623 = vunpack.c.l.b16 %v1584
      %v1624 = vunpack.c.l.b16 %v1585
      %v1625 = vunpack.c.l.b16 %v1586
      %v1626 = vunpack.c.l.b16 %v1587
      %v1627 = vunpack.c.l.b16 %v1588
      %v1628 = vunpack.c.l.b16 %v1589
      %v1629 = vpack.c.b16 %v1614, %v1613
      %v1630 = vpack.c.b16 %v1616, %v1615
      %v1631 = vpack.c.b16 %v1618, %v1617
      %v1632 = vpack.c.b16 %v1620, %v1619
      %v1633 = vpack.c.b16 %v1622, %v1621
      %v1634 = vpack.c.b16 %v1624, %v1623
      %v1635 = vpack.c.b16 %v1626, %v1625
      %v1636 = vpack.c.b16 %v1628, %v1627
      %1645 = vmatprep.subr.bf16.mxu0 0
      %1646 = vmatpush1.bf16.msra.mxu0 %v1629
      %1647 = vmatprep.subr.bf16.mxu0 0
      %1648 = vmatpush1.bf16.msra.mxu0 %v1630
      %1649 = vmatprep.subr.bf16.mxu0 0
      %1650 = vmatpush1.bf16.msra.mxu0 %v1631
      %1651 = vmatprep.subr.bf16.mxu0 0
      %1652 = vmatpush1.bf16.msra.mxu0 %v1632
      %1653 = vmatprep.subr.bf16.mxu0 0
      %1654 = vmatpush1.bf16.msra.mxu0 %v1633
      %1655 = vmatprep.subr.bf16.mxu0 0
      %1656 = vmatpush1.bf16.msra.mxu0 %v1634
      %1657 = vmatprep.subr.bf16.mxu0 0
      %1658 = vmatpush1.bf16.msra.mxu0 %v1635
      %1659 = vmatprep.subr.bf16.mxu0 0
      %1660 = vmatpush1.bf16.msra.mxu0 %v1636
      %1661 = vmatprep.subr.bf16.mxu0 0
      %1662 = vmatpush1.bf16.msra.mxu0 0
      %1663 = vmatprep.subr.bf16.mxu0 0
      %1664 = vmatpush1.bf16.msra.mxu0 0
      %1665 = vmatprep.subr.bf16.mxu0 0
      %1666 = vmatpush1.bf16.msra.mxu0 0
      %1667 = vmatprep.subr.bf16.mxu0 0
      %1668 = vmatpush1.bf16.msra.mxu0 0
      %1669 = vmatprep.subr.bf16.mxu0 0
      %1670 = vmatpush1.bf16.msra.mxu0 0
      %1671 = vmatprep.subr.bf16.mxu0 0
      %1672 = vmatpush1.bf16.msra.mxu0 0
      %1673 = vmatprep.subr.bf16.mxu0 0
      %1674 = vmatpush1.bf16.msra.mxu0 0
      %1675 = vmatprep.subr.bf16.mxu0 0
      %1676 = vmatpush1.bf16.msra.mxu0 0
      %1677 = vmatprep.mubr.bf16.mxu0 0
      %1678 = vmatmul.mubr.bf16.gmra.mrb[0].mxu0 %v1573
      %v1679 = vpop.f32.mrb[0].mxu0
      %v1680 = vadd.f32 %v1595, %v1679
      %v1681 = vpop.f32.mrb[0].mxu0
      %v1682 = vpop.f32.mrb[0].mxu0
      %v1683 = vadd.f32 %v1595, %v1682
      %v1684 = vpop.f32.mrb[0].mxu0
      %1685 = vdwg.mxu0
      %v1686 = vmax.f32 %v1680, 0.0
      %v1687 = vmax.f32 %v1683, 0.0
      %v1688 = vpack.c.bf16 %v1687, %v1686
      %1689 = vst [vmem:[#allocation3] sm:$0xff] %v1688
      %vm1690 = vcmask 7168
      %1691 = vst.msk [vmem:[#allocation4] sm:$0xff] %vm1690, -1e+30
      %1692 = vst.msk [vmem:[#allocation4 + $0x8] sm:$0xff] %vm1690, -1e+30
      %1693 = vst.msk [vmem:[#allocation5] sm:$0xff] %vm1690, 0.0
      %1694 = vst.msk [vmem:[#allocation5 + $0x8] sm:$0xff] %vm1690, 0.0
    $region81: #{baseline_gru_decoder_forward.1} parent=1 // pred_fallthru
      _
    %v1695 = vld [vmem:[#allocation3] sm:$0xff]
    %v1696 = vld [vmem:[#allocation17] sm:$0xf]
    %v1697 = vld [vmem:[#allocation17 + $0x4] sm:$0xf]
    %v1698 = vld [vmem:[#allocation17 + $0x8] sm:$0xf]
    %v1699 = vld [vmem:[#allocation17 + $0xc] sm:$0xf]
    %v1700 = vld [vmem:[#allocation17 + $0x10] sm:$0xf]
    %v1701 = vld [vmem:[#allocation17 + $0x14] sm:$0xf]
    %v1702 = vld [vmem:[#allocation17 + $0x18] sm:$0xf]
    %v1703 = vld [vmem:[#allocation17 + $0x1c] sm:$0xf]
    %v1704 = vld [vmem:[#allocation17 + $0x20] sm:$0xf]
    %v1705 = vld [vmem:[#allocation17 + $0x24] sm:$0xf]
    %v1706 = vld [vmem:[#allocation17 + $0x28] sm:$0xf]
    %v1707 = vld [vmem:[#allocation17 + $0x2c] sm:$0xf]
    %v1708 = vld [vmem:[#allocation17 + $0x30] sm:$0xf]
    %v1709 = vld [vmem:[#allocation17 + $0x34] sm:$0xf]
    %v1710 = vld [vmem:[#allocation17 + $0x38] sm:$0xf]
    %v1711 = vld [vmem:[#allocation17 + $0x3c] sm:$0xf]
    %v1712 = vld [vmem:[%s14] sm:$0x1]
    %v1714 = vlaneseq
    %v1715 = vshrl.u32 %v1714, 7
    %v1716 = vsub.s32 0, %v1715
    %v1717 = vrot.slane %v1712, %v1716
    %v1735 = vunpack.c.l.b16 %v1696
    %v1736 = vunpack.c.l.b16 %v1697
    %v1737 = vunpack.c.l.b16 %v1698
    %v1738 = vunpack.c.l.b16 %v1699
    %v1739 = vunpack.c.l.b16 %v1700
    %v1740 = vunpack.c.l.b16 %v1701
    %v1741 = vunpack.c.l.b16 %v1702
    %v1742 = vunpack.c.l.b16 %v1703
    %v1743 = vunpack.c.l.b16 %v1704
    %v1744 = vunpack.c.l.b16 %v1705
    %v1745 = vunpack.c.l.b16 %v1706
    %v1746 = vunpack.c.l.b16 %v1707
    %v1747 = vunpack.c.l.b16 %v1708
    %v1748 = vunpack.c.l.b16 %v1709
    %v1749 = vunpack.c.l.b16 %v1710
    %v1750 = vunpack.c.l.b16 %v1711
    %v1751 = vpack.c.b16 %v1736, %v1735
    %v1752 = vpack.c.b16 %v1738, %v1737
    %v1753 = vpack.c.b16 %v1740, %v1739
    %v1754 = vpack.c.b16 %v1742, %v1741
    %v1755 = vpack.c.b16 %v1744, %v1743
    %v1756 = vpack.c.b16 %v1746, %v1745
    %v1757 = vpack.c.b16 %v1748, %v1747
    %v1758 = vpack.c.b16 %v1750, %v1749
    %1767 = vmatprep.subr.bf16.mxu0 0
    %1768 = vmatpush1.bf16.msra.mxu0 %v1751
    %1769 = vmatprep.subr.bf16.mxu0 0
    %1770 = vmatpush1.bf16.msra.mxu0 %v1752
    %1771 = vmatprep.subr.bf16.mxu0 0
    %1772 = vmatpush1.bf16.msra.mxu0 %v1753
    %1773 = vmatprep.subr.bf16.mxu0 0
    %1774 = vmatpush1.bf16.msra.mxu0 %v1754
    %1775 = vmatprep.subr.bf16.mxu0 0
    %1776 = vmatpush1.bf16.msra.mxu0 %v1755
    %1777 = vmatprep.subr.bf16.mxu0 0
    %1778 = vmatpush1.bf16.msra.mxu0 %v1756
    %1779 = vmatprep.subr.bf16.mxu0 0
    %1780 = vmatpush1.bf16.msra.mxu0 %v1757
    %1781 = vmatprep.subr.bf16.mxu0 0
    %1782 = vmatpush1.bf16.msra.mxu0 %v1758
    %1783 = vmatprep.subr.bf16.mxu0 0
    %1784 = vmatpush1.bf16.msra.mxu0 0
    %1785 = vmatprep.subr.bf16.mxu0 0
    %1786 = vmatpush1.bf16.msra.mxu0 0
    %1787 = vmatprep.subr.bf16.mxu0 0
    %1788 = vmatpush1.bf16.msra.mxu0 0
    %1789 = vmatprep.subr.bf16.mxu0 0
    %1790 = vmatpush1.bf16.msra.mxu0 0
    %1791 = vmatprep.subr.bf16.mxu0 0
    %1792 = vmatpush1.bf16.msra.mxu0 0
    %1793 = vmatprep.subr.bf16.mxu0 0
    %1794 = vmatpush1.bf16.msra.mxu0 0
    %1795 = vmatprep.subr.bf16.mxu0 0
    %1796 = vmatpush1.bf16.msra.mxu0 0
    %1797 = vmatprep.subr.bf16.mxu0 0
    %1798 = vmatpush1.bf16.msra.mxu0 0
    %1799 = vmatprep.mubr.bf16.mxu0 0
    %1800 = vmatmul.mubr.bf16.gmra.mrb[0].mxu0 %v1695
    %v1801 = vpop.f32.mrb[0].mxu0
    %v1802 = vadd.f32 %v1717, %v1801
    %v1803 = vpop.f32.mrb[0].mxu0
    %v1804 = vpop.f32.mrb[0].mxu0
    %v1805 = vadd.f32 %v1717, %v1804
    %v1806 = vpop.f32.mrb[0].mxu0
    %1807 = vdwg.mxu0
    %s1808 = smul.u32 0, 128
    %s1809 = sshra.s32 %s1808, 7
    %s1810 = sand.u32 %s1808, 127
    %s1811 = scalar_lea.vmem %s16, %s1809
    %1812 = vst [vmem:[%s1811] sm:$0xff] %v1802
    %1813 = vst [vmem:[%s1811 + $0x8] sm:$0xff] %v1805
    %v1814 = vlaneseq
    %v1815 = vand.u32 %v1814, 127
    %v1816 = vstv %s1808
    %v1817 = vadd.s32 %v1816, %v1815
    %vm1818 = vcmp.lt.s32.totalorder %v1817, 40
    %v1819 = vsel %vm1818, %v1802, -1e+30
    %v1820 = vsel %vm1818, %v1805, -1e+30
    %1821 = vmax.xlane.f32.xlu0 %v1819
    %v1822 = vpop.xlane.xlu0 %1821
    %1823 = vmax.xlane.f32.xlu0 %v1820
    %v1824 = vpop.xlane.xlu0 %1823
    %v1825 = vld [vmem:[#allocation4] sm:$0xff]
    %v1826 = vld [vmem:[#allocation4 + $0x8] sm:$0xff]
    %v1827 = vmax.f32 %v1825, %v1822
    %v1828 = vmax.f32 %v1826, %v1824
    %v1829 = vld [vmem:[#allocation5] sm:$0xff]
    %v1830 = vld [vmem:[#allocation5 + $0x8] sm:$0xff]
    %v1831 = vsub.f32 %v1825, %v1827
    %v1832 = vsub.f32 %v1826, %v1828
    %v1833 = vmul.f32 %v1831, 1.442695
    %v1834 = vpow.pop %v1833
    %v1835 = vmul.f32 %v1832, 1.442695
    %v1836 = vpow.pop %v1835
    %v1837 = vmul.f32 %v1829, %v1834
    %v1838 = vmul.f32 %v1830, %v1836
    %1840 = vset.pattern.permute.xlu0 0
    %1841 = vperm.xlu0 %1840, %v1827
    %v1842 = vpop.permute.xlu0 %1841
    %1845 = vset.pattern.permute.xlu0 0
    %1846 = vperm.xlu0 %1845, %v1828
    %v1847 = vpop.permute.xlu0 %1846
    %v1849 = vsub.f32 %v1819, %v1842
    %v1850 = vsub.f32 %v1820, %v1847
    %v1851 = vmul.f32 %v1849, 1.442695
    %v1852 = vpow.pop %v1851
    %v1853 = vmul.f32 %v1850, 1.442695
    %v1854 = vpow.pop %v1853
    %1855 = vadd.xlane.f32.xlu0 %v1852
    %v1856 = vpop.xlane.xlu0 %1855
    %1857 = vadd.xlane.f32.xlu0 %v1854
    %v1858 = vpop.xlane.xlu0 %1857
    %v1859 = vadd.f32 %v1837, %v1856
    %v1860 = vadd.f32 %v1838, %v1858
    %vm1861 = vcmask 7168
    %1862 = vst.msk [vmem:[#allocation5] sm:$0xff] %vm1861, %v1859
    %1863 = vst.msk [vmem:[#allocation5 + $0x8] sm:$0xff] %vm1861, %v1860
    %1864 = vst.msk [vmem:[#allocation4] sm:$0xff] %vm1861, %v1827
    %1865 = vst.msk [vmem:[#allocation4 + $0x8] sm:$0xff] %vm1861, %v1828
    // Predicated region
    $region146: #{baseline_gru_decoder_forward.1} parent=1 // pred_check
      %p1866 = pneg %p138
    $region147: #{baseline_gru_decoder_forward.1} parent=1 // pred_check_branch
      %1868 = sbr.rel (%p1866) target = $region149
    $region148: #{baseline_gru_decoder_forward.1} parent=1 // pred_region
      %v1869 = vld [vmem:[#allocation4] sm:$0xff]
      %v1870 = vld [vmem:[#allocation4 + $0x8] sm:$0xff]
      %v1871 = vld [vmem:[#allocation5] sm:$0xff]
      %v1872 = vld [vmem:[#allocation5 + $0x8] sm:$0xff]
      %v1873 = vlog2.pop %v1871
      %v1874 = vmul.f32 %v1873, 0.6931472
      %v1875 = vlog2.pop %v1872
      %v1876 = vmul.f32 %v1875, 0.6931472
      %v1877 = vadd.f32 %v1869, %v1874
      %v1878 = vadd.f32 %v1870, %v1876
      %v1879 = vld [vmem:[%s16] sm:$0xff]
      %v1880 = vld [vmem:[%s16 + $0x8] sm:$0xff]
      %1882 = vset.pattern.permute.xlu0 0
      %1883 = vperm.xlu0 %1882, %v1877
      %v1884 = vpop.permute.xlu0 %1883
      %1887 = vset.pattern.permute.xlu0 0
      %1888 = vperm.xlu0 %1887, %v1878
      %v1889 = vpop.permute.xlu0 %1888
      %v1891 = vsub.f32 %v1879, %v1884
      %v1892 = vsub.f32 %v1880, %v1889
      %1893 = vst [vmem:[%s17] sm:$0xff] %v1891
      %1894 = vst [vmem:[%s17 + $0x8] sm:$0xff] %v1892
    $region149: #{baseline_gru_decoder_forward.1} parent=1 // pred_fallthru
      _
    // Predicated region
    $region150: #{baseline_gru_decoder_forward.1} parent=1 // pred_check
      _
    $region151: #{baseline_gru_decoder_forward.1} parent=1 // pred_check_branch
      %1896 = sbr.rel (0) target = $region153
    $region152: #{baseline_gru_decoder_forward.1} parent=1 // pred_region
      _
    $region153: #{baseline_gru_decoder_forward.1} parent=1 // pred_fallthru
      _
    // Predicated region
    $region154: #{baseline_gru_decoder_forward.1} parent=1 // pred_check
      _
    $region155: #{baseline_gru_decoder_forward.1} parent=1 // pred_check_branch
      %1898 = sbr.rel (0) target = $region157
    $region156: #{baseline_gru_decoder_forward.1} parent=1 // pred_region
      _
    $region157: #{baseline_gru_decoder_forward.1} parent=1 // pred_fallthru
      _
    // Predicated region
    $region158: #{baseline_gru_decoder_forward.1} parent=1 // pred_check
      _
    $region159: #{baseline_gru_decoder_forward.1} parent=1 // pred_check_branch
      %1900 = sbr.rel (0) target = $region161
    $region160: #{baseline_gru_decoder_forward.1} parent=1 // pred_region
      _
    $region161: #{baseline_gru_decoder_forward.1} parent=1 // pred_fallthru
      _
    // Predicated region
    $region162: #{baseline_gru_decoder_forward.1} parent=1 // pred_check
      _
    $region163: #{baseline_gru_decoder_forward.1} parent=1 // pred_check_branch
      %1902 = sbr.rel (0) target = $region165
    $region164: #{baseline_gru_decoder_forward.1} parent=1 // pred_region
      _
    $region165: #{baseline_gru_decoder_forward.1} parent=1 // pred_fallthru
      _
    // Predicated region
    $region166: #{baseline_gru_decoder_forward.1} parent=1 // pred_check
      _
    $region167: #{baseline_gru_decoder_forward.1} parent=1 // pred_check_branch
      %1904 = sbr.rel (0) target = $region169
    $region168: #{baseline_gru_decoder_forward.1} parent=1 // pred_region
      _
    $region169: #{baseline_gru_decoder_forward.1} parent=1 // pred_fallthru
      _
    // Predicated region
    $region170: #{baseline_gru_decoder_forward.1} parent=1 // pred_check
      _
    $region171: #{baseline_gru_decoder_forward.1} parent=1 // pred_check_branch
      %1906 = sbr.rel (0) target = $region173
    $region172: #{baseline_gru_decoder_forward.1} parent=1 // pred_region
      _
    $region173: #{baseline_gru_decoder_forward.1} parent=1 // pred_fallthru
      _
    %1907 = vsyncpa [#allocation10], 1
    %1908 = vsyncpa [#allocation12], 1
    %1909 = vsyncpa [#allocation15], 1
    %1910 = vsyncpa [#allocation18], 1
  %1911 = vsyncmov [#allocation6]
  %s1912 = vpop.sfrf %1911
  %p1913 = scmp.eq.s32.totalorder %s1912, 0
  %p1914 = pneg %p1913
  %1916 = shalt.err (%p1914)
  %s1917 = scalar_lea.sflag [#allocation6], 1
  %1918 = vsyncmov %s1917
  %s1919 = vpop.sfrf %1918
  %p1920 = scmp.eq.s32.totalorder %s1919, 0
  %p1921 = pneg %p1920
  %1923 = shalt.err (%p1921)
  %s1924 = scalar_lea.sflag [#allocation6], 2
  %1925 = vsyncmov %s1924
  %s1926 = vpop.sfrf %1925
  %p1927 = scmp.eq.s32.totalorder %s1926, 0
  %p1928 = pneg %p1927
  %1930 = shalt.err (%p1928)
  %s1931 = scalar_lea.sflag [#allocation6], 3
  %1932 = vsyncmov %s1931
  %s1933 = vpop.sfrf %1932
  %p1934 = scmp.eq.s32.totalorder %s1933, 0
  %p1935 = pneg %p1934
  %1937 = shalt.err (%p1935)
  %s1938 = scalar_lea.sflag [#allocation6], 4
  %1939 = vsyncmov %s1938
  %s1940 = vpop.sfrf %1939
  %p1941 = scmp.eq.s32.totalorder %s1940, 0
  %p1942 = pneg %p1941
  %1944 = shalt.err (%p1942)
  %s1945 = scalar_lea.sflag [#allocation6], 5
  %1946 = vsyncmov %s1945
  %s1947 = vpop.sfrf %1946
  %p1948 = scmp.eq.s32.totalorder %s1947, 0
  %p1949 = pneg %p1948
  %1951 = shalt.err (%p1949)
  %s1952 = scalar_lea.sflag [#allocation6], 6
  %1953 = vsyncmov %s1952
  %s1954 = vpop.sfrf %1953
  %p1955 = scmp.eq.s32.totalorder %s1954, 0
  %p1956 = pneg %p1955
  %1958 = shalt.err (%p1956)
  %s1959 = scalar_lea.sflag [#allocation6], 7
  %1960 = vsyncmov %s1959
  %s1961 = vpop.sfrf %1960
  %p1962 = scmp.eq.s32.totalorder %s1961, 0
  %p1963 = pneg %p1962
  %1965 = shalt.err (%p1963)
  %s1966 = scalar_lea.sflag [#allocation6], 8
  %1967 = vsyncmov %s1966
  %s1968 = vpop.sfrf %1967
  %p1969 = scmp.eq.s32.totalorder %s1968, 0
  %p1970 = pneg %p1969
  %1972 = shalt.err (%p1970)
  %s1973 = scalar_lea.sflag [#allocation6], 9
  %1974 = vsyncmov %s1973
  %s1975 = vpop.sfrf %1974
  %p1976 = scmp.eq.s32.totalorder %s1975, 0
  %p1977 = pneg %p1976
  %1979 = shalt.err (%p1977)
  %s1980 = scalar_lea.sflag [#allocation6], 10
  %1981 = vsyncmov %s1980
  %s1982 = vpop.sfrf %1981
  %p1983 = scmp.eq.s32.totalorder %s1982, 0
  %p1984 = pneg %p1983
  %1986 = shalt.err (%p1984)
  %s1987 = scalar_lea.sflag [#allocation6], 11
  %1988 = vsyncmov %s1987
  %s1989 = vpop.sfrf %1988
  %p1990 = scmp.eq.s32.totalorder %s1989, 0
  %p1991 = pneg %p1990
  %1993 = shalt.err (%p1991)
  %s1994 = scalar_lea.sflag [#allocation6], 12
  %1995 = vsyncmov %s1994
  %s1996 = vpop.sfrf %1995
  %p1997 = scmp.eq.s32.totalorder %s1996, 0
  %p1998 = pneg %p1997
  %2000 = shalt.err (%p1998)
  %s2001 = scalar_lea.sflag [#allocation6], 13
  %2002 = vsyncmov %s2001
  %s2003 = vpop.sfrf %2002
  %p2004 = scmp.eq.s32.totalorder %s2003, 0
  %p2005 = pneg %p2004
  %2007 = shalt.err (%p2005)
  %s2008 = scalar_lea.sflag [#allocation6], 14
  %2009 = vsyncmov %s2008
  %s2010 = vpop.sfrf %2009
  %p2011 = scmp.eq.s32.totalorder %s2010, 0
  %p2012 = pneg %p2011
  %2014 = shalt.err (%p2012)
  %s2015 = scalar_lea.sflag [#allocation6], 15
  %2016 = vsyncmov %s2015
  %s2017 = vpop.sfrf %2016
  %p2018 = scmp.eq.s32.totalorder %s2017, 0
  %p2019 = pneg %p2018
  %2021 = shalt.err (%p2019)

</llo_original>
